<compile_context>
chip_gen: v7x
topology: tpu7x:2x2x1
jax: 0.10.0
libtpu: 0.0.40
codegen_flags: <defaults>
</compile_context>

<pallas_src>
import functools

import jax
import jax.numpy as jnp
from jax import lax
from jax.experimental import pallas as pl
from jax.experimental.pallas import tpu as pltpu


# ----------------------------------------------------------------------------
# Pallas kernel (fused: all layers + projection, fully unrolled over time)
# ----------------------------------------------------------------------------
def make_decoder_kernel(n_layers: int, hidden_size: int):
    """refs = (x, [w_ih_T, w_hh_T, b] * n_layers, w_out_T, b_out, out)."""
    H = hidden_size

    def kernel(*refs):
        x_ref = refs[0]                                   # (T, B, E)   bf16
        layer_refs = refs[1:1 + 3 * n_layers]             # (D,4H) bf16, (H,4H) bf16, (1,4H) f32
        wout_ref = refs[1 + 3 * n_layers]                 # (H, Vp)     bf16
        bout_ref = refs[2 + 3 * n_layers]                 # (1, Vp)     f32
        out_ref = refs[3 + 3 * n_layers]                  # (T, B, Vp)  f32

        T, B, _ = x_ref.shape
        Vp = wout_ref.shape[1]

        # Hoist all weight loads and bias broadcasts out of the unrolled recurrence
        # (JAX does not CSE broadcast_in_dim -> would be re-emitted every step).
        w_ih = [layer_refs[3 * l + 0][...] for l in range(n_layers)]
        w_hh = [layer_refs[3 * l + 1][...] for l in range(n_layers)]
        bias = [jnp.broadcast_to(layer_refs[3 * l + 2][...], (B, 4 * H))
                for l in range(n_layers)]
        w_out = wout_ref[...]
        b_out = jnp.broadcast_to(bout_ref[...], (B, Vp))

        h = [jnp.zeros((B, H), jnp.float32) for _ in range(n_layers)]
        c = [jnp.zeros((B, H), jnp.float32) for _ in range(n_layers)]

        # Fully-unrolled time loop; per step: layer 0 -> layer 1 -> ... -> projection.
        for t in range(T):
            x_in = x_ref[t]                                           # (B, E/H) bf16
            for l in range(n_layers):
                gates = (jnp.dot(x_in, w_ih[l],
                                 preferred_element_type=jnp.float32)
                         + jnp.dot(h[l].astype(jnp.bfloat16), w_hh[l],
                                   preferred_element_type=jnp.float32)
                         + bias[l])                                   # (B, 4H) f32
                # Two full-width EUP passes instead of four quarter-width ones.
                sig = jax.nn.sigmoid(gates)
                th = jnp.tanh(gates)
                i_g = sig[:, 0 * H:1 * H]
                f_g = sig[:, 1 * H:2 * H]
                g_g = th[:, 2 * H:3 * H]
                o_g = sig[:, 3 * H:4 * H]
                c[l] = f_g * c[l] + i_g * g_g
                h[l] = o_g * jnp.tanh(c[l])
                x_in = h[l].astype(jnp.bfloat16)
            # Dropout(p=0.5) is identity in eval mode.
            # Lane-dense (Vp multiple of 128) logits store for this timestep.
            out_ref[t] = (jnp.dot(x_in, w_out,
                                  preferred_element_type=jnp.float32) + b_out)

    return kernel


# ----------------------------------------------------------------------------
# Wrapper
# ----------------------------------------------------------------------------
def _round_up(x, m):
    return (x + m - 1) // m * m


def our_decoder_forward(x_ids, features, params, *, n_layers):
    """Mirrors OurDecoder.forward (eval mode).

    x_ids:    (B, S)  int32 token ids
    features: (B, E)  float32
    returns:  (B, S+1, V) float32 logits
    """
    emb_table = params["embedding"]                       # (V, E), row 0 == 0 (padding_idx)
    B, S = x_ids.shape
    E = emb_table.shape[1]
    H = params["w_hh"][0].shape[1]                        # (4H, H) -> H
    V = params["w_out"].shape[0]
    T = S + 1

    B_pad = _round_up(max(B, 8), 8)                       # sublane width
    V_pad = _round_up(V, 128)                             # lane width

    # Pad the batch with zero rows (token id 0 maps to the zero padding embedding).
    x_ids_p = jnp.zeros((B_pad, S), x_ids.dtype).at[:B].set(x_ids)
    feat_p = jnp.zeros((B_pad, E), jnp.float32).at[:B].set(features)

    emb = emb_table[x_ids_p]                              # (B_pad, S, E)  -- glue gather
    seq = jnp.concatenate([feat_p[:, None, :], emb], axis=1)       # (B_pad, T, E)
    x_tm = jnp.transpose(seq, (1, 0, 2)).astype(jnp.bfloat16)      # (T, B_pad, E) time-major

    kernel_inputs = [x_tm]
    for l in range(n_layers):
        w_ih_T = params["w_ih"][l].T.astype(jnp.bfloat16)          # (D, 4H)
        w_hh_T = params["w_hh"][l].T.astype(jnp.bfloat16)          # (H, 4H)
        b = (params["b_ih"][l] + params["b_hh"][l]).astype(jnp.float32)[None, :]
        kernel_inputs += [w_ih_T, w_hh_T, b]

    # Zero-pad the vocab dim of the output projection to a multiple of 128.
    w_out_T = jnp.zeros((H, V_pad), jnp.bfloat16).at[:, :V].set(
        params["w_out"].T.astype(jnp.bfloat16))
    b_out_p = jnp.zeros((1, V_pad), jnp.float32).at[:, :V].set(params["b_out"][None, :])
    kernel_inputs += [w_out_T, b_out_p]

    kernel = make_decoder_kernel(n_layers, H)
    n_in = len(kernel_inputs)

    logits_tm = pl.pallas_call(
        kernel,
        out_shape=jax.ShapeDtypeStruct((T, B_pad, V_pad), jnp.float32),
        in_specs=[pl.BlockSpec(memory_space=pltpu.MemorySpace.VMEM)] * n_in,
        out_specs=pl.BlockSpec(memory_space=pltpu.MemorySpace.VMEM),
    )(*kernel_inputs)

    logits = jnp.transpose(logits_tm, (1, 0, 2))          # (B_pad, T, V_pad)
    return logits[:B, :, :V]                              # strip padding


# ----------------------------------------------------------------------------
# Pure-JAX reference (for correctness check)
# ----------------------------------------------------------------------------
def ref_forward(x_ids, features, params, *, n_layers):
    emb = params["embedding"][x_ids]
    seq = jnp.concatenate([features[:, None, :], emb], axis=1)     # (B, T, E)
    H = params["w_hh"][0].shape[1]
    x = seq
    hp = jax.lax.Precision.HIGHEST
    for l in range(n_layers):
        w_ih_T = params["w_ih"][l].T
        w_hh_T = params["w_hh"][l].T
        b = params["b_ih"][l] + params["b_hh"][l]
        B = x.shape[0]

        def step(carry, x_t):
            h, c = carry
            gates = (jnp.dot(x_t, w_ih_T, precision=hp)
                     + jnp.dot(h, w_hh_T, precision=hp) + b)
            i_g = jax.nn.sigmoid(gates[:, 0 * H:1 * H])
            f_g = jax.nn.sigmoid(gates[:, 1 * H:2 * H])
            g_g = jnp.tanh(gates[:, 2 * H:3 * H])
            o_g = jax.nn.sigmoid(gates[:, 3 * H:4 * H])
            c_new = f_g * c + i_g * g_g
            h_new = o_g * jnp.tanh(c_new)
            return (h_new, c_new), h_new

        h0 = jnp.zeros((B, H), jnp.float32)
        c0 = jnp.zeros((B, H), jnp.float32)
        _, hs = lax.scan(step, (h0, c0), jnp.transpose(x, (1, 0, 2)))
        x = jnp.transpose(hs, (1, 0, 2))
    return jnp.dot(x, params["w_out"].T, precision=hp) + params["b_out"]


# ----------------------------------------------------------------------------
# Deterministic parameter init
# ----------------------------------------------------------------------------
def init_params(key, embed_size, hidden_size, vocab_size, n_layers):
    keys = jax.random.split(key, 4 + 4 * n_layers)
    k = iter(keys)
    scale = 0.1
    emb = scale * jax.random.normal(next(k), (vocab_size, embed_size), jnp.float32)
    emb = emb.at[0].set(0.0)                              # padding_idx=0
    w_ih, w_hh, b_ih, b_hh = [], [], [], []
    for l in range(n_layers):
        d_in = embed_size if l == 0 else hidden_size
        w_ih.append(scale * jax.random.normal(next(k), (4 * hidden_size, d_in), jnp.float32))
        w_hh.append(scale * jax.random.normal(next(k), (4 * hidden_size, hidden_size), jnp.float32))
        b_ih.append(scale * jax.random.normal(next(k), (4 * hidden_size,), jnp.float32))
        b_hh.append(scale * jax.random.normal(next(k), (4 * hidden_size,), jnp.float32))
    w_out = scale * jax.random.normal(next(k), (vocab_size, hidden_size), jnp.float32)
    b_out = scale * jax.random.normal(next(k), (vocab_size,), jnp.float32)
    return {"embedding": emb, "w_ih": w_ih, "w_hh": w_hh,
            "b_ih": b_ih, "b_hh": b_hh, "w_out": w_out, "b_out": b_out}


# ----------------------------------------------------------------------------
if __name__ == "__main__":
    EMBED, HIDDEN, VOCAB, N_LAYERS = 32, 32, 50, 2
    B, S = 2, 8

    root = jax.random.PRNGKey(0)
    k_par, k_ids, k_feat = jax.random.split(root, 3)

    params = init_params(k_par, EMBED, HIDDEN, VOCAB, N_LAYERS)
    x_ids = jax.random.randint(k_ids, (B, S), 0, VOCAB, dtype=jnp.int32)
    features = jax.random.normal(k_feat, (B, EMBED), jnp.float32)

    fwd = jax.jit(functools.partial(our_decoder_forward, n_layers=N_LAYERS))
    out = fwd(x_ids, features, params)
    out = jax.block_until_ready(out)

    assert out.shape == (B, S + 1, VOCAB), out.shape

    ref = ref_forward(x_ids, features, params, n_layers=N_LAYERS)
    ref = jax.block_until_ready(ref)
    assert jnp.all(jnp.isfinite(out))
    assert jnp.allclose(out, ref, rtol=2e-2, atol=2e-2), float(jnp.max(jnp.abs(out - ref)))

    print("KERNEL_OK")
</pallas_src>

<mosaic_0001>
module attributes {stable_mosaic.version = 11 : i64} {
  func.func @kernel(%arg0: memref<9x8x32xbf16, #tpu.memory_space<vmem>>, %arg1: memref<32x128xbf16, #tpu.memory_space<vmem>>, %arg2: memref<32x128xbf16, #tpu.memory_space<vmem>>, %arg3: memref<1x128xf32, #tpu.memory_space<vmem>>, %arg4: memref<32x128xbf16, #tpu.memory_space<vmem>>, %arg5: memref<32x128xbf16, #tpu.memory_space<vmem>>, %arg6: memref<1x128xf32, #tpu.memory_space<vmem>>, %arg7: memref<32x128xbf16, #tpu.memory_space<vmem>>, %arg8: memref<1x128xf32, #tpu.memory_space<vmem>>, %arg9: memref<9x8x128xf32, #tpu.memory_space<vmem>>) attributes {dimension_semantics = [], scalar_prefetch = 0 : i64, scratch_operands = 0 : i64, tpu.core_type = #tpu.core_type<tc>} {
    %c0 = arith.constant 0 : index
    %c0_0 = arith.constant 0 : index
    %0 = vector.load %arg1[%c0, %c0_0] : memref<32x128xbf16, #tpu.memory_space<vmem>>, vector<32x128xbf16>
    %c0_1 = arith.constant 0 : index
    %c0_2 = arith.constant 0 : index
    %1 = vector.load %arg4[%c0_1, %c0_2] : memref<32x128xbf16, #tpu.memory_space<vmem>>, vector<32x128xbf16>
    %c0_3 = arith.constant 0 : index
    %c0_4 = arith.constant 0 : index
    %2 = vector.load %arg2[%c0_3, %c0_4] : memref<32x128xbf16, #tpu.memory_space<vmem>>, vector<32x128xbf16>
    %c0_5 = arith.constant 0 : index
    %c0_6 = arith.constant 0 : index
    %3 = vector.load %arg5[%c0_5, %c0_6] : memref<32x128xbf16, #tpu.memory_space<vmem>>, vector<32x128xbf16>
    %c0_7 = arith.constant 0 : index
    %c0_8 = arith.constant 0 : index
    %4 = vector.load %arg3[%c0_7, %c0_8] : memref<1x128xf32, #tpu.memory_space<vmem>>, vector<1x128xf32>
    %5 = vector.shape_cast %4 : vector<1x128xf32> to vector<1x128xf32>
    %6 = vector.broadcast %5 : vector<1x128xf32> to vector<8x128xf32>
    %c0_9 = arith.constant 0 : index
    %c0_10 = arith.constant 0 : index
    %7 = vector.load %arg6[%c0_9, %c0_10] : memref<1x128xf32, #tpu.memory_space<vmem>>, vector<1x128xf32>
    %8 = vector.shape_cast %7 : vector<1x128xf32> to vector<1x128xf32>
    %9 = vector.broadcast %8 : vector<1x128xf32> to vector<8x128xf32>
    %c0_11 = arith.constant 0 : index
    %c0_12 = arith.constant 0 : index
    %10 = vector.load %arg7[%c0_11, %c0_12] : memref<32x128xbf16, #tpu.memory_space<vmem>>, vector<32x128xbf16>
    %c0_13 = arith.constant 0 : index
    %c0_14 = arith.constant 0 : index
    %11 = vector.load %arg8[%c0_13, %c0_14] : memref<1x128xf32, #tpu.memory_space<vmem>>, vector<1x128xf32>
    %12 = vector.shape_cast %11 : vector<1x128xf32> to vector<1x128xf32>
    %13 = vector.broadcast %12 : vector<1x128xf32> to vector<8x128xf32>
    %cst = arith.constant 0.000000e+00 : f32
    %14 = vector.broadcast %cst : f32 to vector<8x32xf32>
    %cst_15 = arith.constant 0.000000e+00 : f32
    %15 = vector.broadcast %cst_15 : f32 to vector<8x32xf32>
    %cst_16 = arith.constant 0.000000e+00 : f32
    %16 = vector.broadcast %cst_16 : f32 to vector<8x32xf32>
    %cst_17 = arith.constant 0.000000e+00 : f32
    %17 = vector.broadcast %cst_17 : f32 to vector<8x32xf32>
    %c0_18 = arith.constant 0 : index
    %c0_19 = arith.constant 0 : index
    %c0_20 = arith.constant 0 : index
    %18 = vector.load %arg0[%c0_18, %c0_19, %c0_20] : memref<9x8x32xbf16, #tpu.memory_space<vmem>>, vector<1x8x32xbf16>
    %19 = vector.shape_cast %18 : vector<1x8x32xbf16> to vector<8x32xbf16>
    %cst_21 = arith.constant dense<0.000000e+00> : vector<8x128xf32>
    %20 = tpu.matmul %19, %0, %cst_21 {dimension_numbers = #tpu.dot_dimension_numbers<[1], [0], [0], [1], [0, 0, 1, 1], [], []>} : vector<8x32xbf16>, vector<32x128xbf16>, vector<8x128xf32> -> vector<8x128xf32>
    %21 = arith.truncf %14 : vector<8x32xf32> to vector<8x32xbf16>
    %cst_22 = arith.constant dense<0.000000e+00> : vector<8x128xf32>
    %22 = tpu.matmul %21, %2, %cst_22 {dimension_numbers = #tpu.dot_dimension_numbers<[1], [0], [0], [1], [0, 0, 1, 1], [], []>} : vector<8x32xbf16>, vector<32x128xbf16>, vector<8x128xf32> -> vector<8x128xf32>
    %23 = arith.addf %20, %22 : vector<8x128xf32>
    %24 = arith.addf %23, %6 : vector<8x128xf32>
    %25 = arith.negf %24 : vector<8x128xf32>
    %26 = math.exp %25 : vector<8x128xf32>
    %cst_23 = arith.constant 1.000000e+00 : f32
    %27 = vector.broadcast %cst_23 : f32 to vector<8x128xf32>
    %28 = arith.addf %27, %26 : vector<8x128xf32>
    %29 = arith.divf %27, %28 : vector<8x128xf32>
    %30 = math.tanh %24 : vector<8x128xf32>
    %31 = vector.extract_strided_slice %29 {offsets = [0, 0], sizes = [8, 32], strides = [1, 1]} : vector<8x128xf32> to vector<8x32xf32>
    %32 = vector.extract_strided_slice %29 {offsets = [0, 32], sizes = [8, 32], strides = [1, 1]} : vector<8x128xf32> to vector<8x32xf32>
    %33 = vector.extract_strided_slice %30 {offsets = [0, 64], sizes = [8, 32], strides = [1, 1]} : vector<8x128xf32> to vector<8x32xf32>
    %34 = vector.extract_strided_slice %29 {offsets = [0, 96], sizes = [8, 32], strides = [1, 1]} : vector<8x128xf32> to vector<8x32xf32>
    %35 = arith.mulf %32, %16 : vector<8x32xf32>
    %36 = arith.mulf %31, %33 : vector<8x32xf32>
    %37 = arith.addf %35, %36 : vector<8x32xf32>
    %38 = math.tanh %37 : vector<8x32xf32>
    %39 = arith.mulf %34, %38 : vector<8x32xf32>
    %40 = arith.truncf %39 : vector<8x32xf32> to vector<8x32xbf16>
    %cst_24 = arith.constant dense<0.000000e+00> : vector<8x128xf32>
    %41 = tpu.matmul %40, %1, %cst_24 {dimension_numbers = #tpu.dot_dimension_numbers<[1], [0], [0], [1], [0, 0, 1, 1], [], []>} : vector<8x32xbf16>, vector<32x128xbf16>, vector<8x128xf32> -> vector<8x128xf32>
    %42 = arith.truncf %15 : vector<8x32xf32> to vector<8x32xbf16>
    %cst_25 = arith.constant dense<0.000000e+00> : vector<8x128xf32>
    %43 = tpu.matmul %42, %3, %cst_25 {dimension_numbers = #tpu.dot_dimension_numbers<[1], [0], [0], [1], [0, 0, 1, 1], [], []>} : vector<8x32xbf16>, vector<32x128xbf16>, vector<8x128xf32> -> vector<8x128xf32>
    %44 = arith.addf %41, %43 : vector<8x128xf32>
    %45 = arith.addf %44, %9 : vector<8x128xf32>
    %46 = arith.negf %45 : vector<8x128xf32>
    %47 = math.exp %46 : vector<8x128xf32>
    %cst_26 = arith.constant 1.000000e+00 : f32
    %48 = vector.broadcast %cst_26 : f32 to vector<8x128xf32>
    %49 = arith.addf %48, %47 : vector<8x128xf32>
    %50 = arith.divf %48, %49 : vector<8x128xf32>
    %51 = math.tanh %45 : vector<8x128xf32>
    %52 = vector.extract_strided_slice %50 {offsets = [0, 0], sizes = [8, 32], strides = [1, 1]} : vector<8x128xf32> to vector<8x32xf32>
    %53 = vector.extract_strided_slice %50 {offsets = [0, 32], sizes = [8, 32], strides = [1, 1]} : vector<8x128xf32> to vector<8x32xf32>
    %54 = vector.extract_strided_slice %51 {offsets = [0, 64], sizes = [8, 32], strides = [1, 1]} : vector<8x128xf32> to vector<8x32xf32>
    %55 = vector.extract_strided_slice %50 {offsets = [0, 96], sizes = [8, 32], strides = [1, 1]} : vector<8x128xf32> to vector<8x32xf32>
    %56 = arith.mulf %53, %17 : vector<8x32xf32>
    %57 = arith.mulf %52, %54 : vector<8x32xf32>
    %58 = arith.addf %56, %57 : vector<8x32xf32>
    %59 = math.tanh %58 : vector<8x32xf32>
    %60 = arith.mulf %55, %59 : vector<8x32xf32>
    %61 = arith.truncf %60 : vector<8x32xf32> to vector<8x32xbf16>
    %cst_27 = arith.constant dense<0.000000e+00> : vector<8x128xf32>
    %62 = tpu.matmul %61, %10, %cst_27 {dimension_numbers = #tpu.dot_dimension_numbers<[1], [0], [0], [1], [0, 0, 1, 1], [], []>} : vector<8x32xbf16>, vector<32x128xbf16>, vector<8x128xf32> -> vector<8x128xf32>
    %63 = arith.addf %62, %13 : vector<8x128xf32>
    %c0_28 = arith.constant 0 : index
    %c0_29 = arith.constant 0 : index
    %c0_30 = arith.constant 0 : index
    %64 = vector.load %arg9[%c0_28, %c0_29, %c0_30] : memref<9x8x128xf32, #tpu.memory_space<vmem>>, vector<1x8x128xf32>
    %65 = vector.shape_cast %64 : vector<1x8x128xf32> to vector<8x128xf32>
    %66 = vector.shape_cast %63 : vector<8x128xf32> to vector<1x8x128xf32>
    tpu.vector_store %arg9[%c0_28, %c0_29, %c0_30], %66 {strides = array<i32>} : memref<9x8x128xf32, #tpu.memory_space<vmem>>, vector<1x8x128xf32>,
    %c1 = arith.constant 1 : index
    %c0_31 = arith.constant 0 : index
    %c0_32 = arith.constant 0 : index
    %67 = vector.load %arg0[%c1, %c0_31, %c0_32] : memref<9x8x32xbf16, #tpu.memory_space<vmem>>, vector<1x8x32xbf16>
    %68 = vector.shape_cast %67 : vector<1x8x32xbf16> to vector<8x32xbf16>
    %cst_33 = arith.constant dense<0.000000e+00> : vector<8x128xf32>
    %69 = tpu.matmul %68, %0, %cst_33 {dimension_numbers = #tpu.dot_dimension_numbers<[1], [0], [0], [1], [0, 0, 1, 1], [], []>} : vector<8x32xbf16>, vector<32x128xbf16>, vector<8x128xf32> -> vector<8x128xf32>
    %70 = arith.truncf %39 : vector<8x32xf32> to vector<8x32xbf16>
    %cst_34 = arith.constant dense<0.000000e+00> : vector<8x128xf32>
    %71 = tpu.matmul %70, %2, %cst_34 {dimension_numbers = #tpu.dot_dimension_numbers<[1], [0], [0], [1], [0, 0, 1, 1], [], []>} : vector<8x32xbf16>, vector<32x128xbf16>, vector<8x128xf32> -> vector<8x128xf32>
    %72 = arith.addf %69, %71 : vector<8x128xf32>
    %73 = arith.addf %72, %6 : vector<8x128xf32>
    %74 = arith.negf %73 : vector<8x128xf32>
    %75 = math.exp %74 : vector<8x128xf32>
    %cst_35 = arith.constant 1.000000e+00 : f32
    %76 = vector.broadcast %cst_35 : f32 to vector<8x128xf32>
    %77 = arith.addf %76, %75 : vector<8x128xf32>
    %78 = arith.divf %76, %77 : vector<8x128xf32>
    %79 = math.tanh %73 : vector<8x128xf32>
    %80 = vector.extract_strided_slice %78 {offsets = [0, 0], sizes = [8, 32], strides = [1, 1]} : vector<8x128xf32> to vector<8x32xf32>
    %81 = vector.extract_strided_slice %78 {offsets = [0, 32], sizes = [8, 32], strides = [1, 1]} : vector<8x128xf32> to vector<8x32xf32>
    %82 = vector.extract_strided_slice %79 {offsets = [0, 64], sizes = [8, 32], strides = [1, 1]} : vector<8x128xf32> to vector<8x32xf32>
    %83 = vector.extract_strided_slice %78 {offsets = [0, 96], sizes = [8, 32], strides = [1, 1]} : vector<8x128xf32> to vector<8x32xf32>
    %84 = arith.mulf %81, %37 : vector<8x32xf32>
    %85 = arith.mulf %80, %82 : vector<8x32xf32>
    %86 = arith.addf %84, %85 : vector<8x32xf32>
    %87 = math.tanh %86 : vector<8x32xf32>
    %88 = arith.mulf %83, %87 : vector<8x32xf32>
    %89 = arith.truncf %88 : vector<8x32xf32> to vector<8x32xbf16>
    %cst_36 = arith.constant dense<0.000000e+00> : vector<8x128xf32>
    %90 = tpu.matmul %89, %1, %cst_36 {dimension_numbers = #tpu.dot_dimension_numbers<[1], [0], [0], [1], [0, 0, 1, 1], [], []>} : vector<8x32xbf16>, vector<32x128xbf16>, vector<8x128xf32> -> vector<8x128xf32>
    %91 = arith.truncf %60 : vector<8x32xf32> to vector<8x32xbf16>
    %cst_37 = arith.constant dense<0.000000e+00> : vector<8x128xf32>
    %92 = tpu.matmul %91, %3, %cst_37 {dimension_numbers = #tpu.dot_dimension_numbers<[1], [0], [0], [1], [0, 0, 1, 1], [], []>} : vector<8x32xbf16>, vector<32x128xbf16>, vector<8x128xf32> -> vector<8x128xf32>
    %93 = arith.addf %90, %92 : vector<8x128xf32>
    %94 = arith.addf %93, %9 : vector<8x128xf32>
    %95 = arith.negf %94 : vector<8x128xf32>
    %96 = math.exp %95 : vector<8x128xf32>
    %cst_38 = arith.constant 1.000000e+00 : f32
    %97 = vector.broadcast %cst_38 : f32 to vector<8x128xf32>
    %98 = arith.addf %97, %96 : vector<8x128xf32>
    %99 = arith.divf %97, %98 : vector<8x128xf32>
    %100 = math.tanh %94 : vector<8x128xf32>
    %101 = vector.extract_strided_slice %99 {offsets = [0, 0], sizes = [8, 32], strides = [1, 1]} : vector<8x128xf32> to vector<8x32xf32>
    %102 = vector.extract_strided_slice %99 {offsets = [0, 32], sizes = [8, 32], strides = [1, 1]} : vector<8x128xf32> to vector<8x32xf32>
    %103 = vector.extract_strided_slice %100 {offsets = [0, 64], sizes = [8, 32], strides = [1, 1]} : vector<8x128xf32> to vector<8x32xf32>
    %104 = vector.extract_strided_slice %99 {offsets = [0, 96], sizes = [8, 32], strides = [1, 1]} : vector<8x128xf32> to vector<8x32xf32>
    %105 = arith.mulf %102, %58 : vector<8x32xf32>
    %106 = arith.mulf %101, %103 : vector<8x32xf32>
    %107 = arith.addf %105, %106 : vector<8x32xf32>
    %108 = math.tanh %107 : vector<8x32xf32>
    %109 = arith.mulf %104, %108 : vector<8x32xf32>
    %110 = arith.truncf %109 : vector<8x32xf32> to vector<8x32xbf16>
    %cst_39 = arith.constant dense<0.000000e+00> : vector<8x128xf32>
    %111 = tpu.matmul %110, %10, %cst_39 {dimension_numbers = #tpu.dot_dimension_numbers<[1], [0], [0], [1], [0, 0, 1, 1], [], []>} : vector<8x32xbf16>, vector<32x128xbf16>, vector<8x128xf32> -> vector<8x128xf32>
    %112 = arith.addf %111, %13 : vector<8x128xf32>
    %c1_40 = arith.constant 1 : index
    %c0_41 = arith.constant 0 : index
    %c0_42 = arith.constant 0 : index
    %113 = vector.load %arg9[%c1_40, %c0_41, %c0_42] : memref<9x8x128xf32, #tpu.memory_space<vmem>>, vector<1x8x128xf32>
    %114 = vector.shape_cast %113 : vector<1x8x128xf32> to vector<8x128xf32>
    %115 = vector.shape_cast %112 : vector<8x128xf32> to vector<1x8x128xf32>
    tpu.vector_store %arg9[%c1_40, %c0_41, %c0_42], %115 {strides = array<i32>} : memref<9x8x128xf32, #tpu.memory_space<vmem>>, vector<1x8x128xf32>,
    %c2 = arith.constant 2 : index
    %c0_43 = arith.constant 0 : index
    %c0_44 = arith.constant 0 : index
    %116 = vector.load %arg0[%c2, %c0_43, %c0_44] : memref<9x8x32xbf16, #tpu.memory_space<vmem>>, vector<1x8x32xbf16>
    %117 = vector.shape_cast %116 : vector<1x8x32xbf16> to vector<8x32xbf16>
    %cst_45 = arith.constant dense<0.000000e+00> : vector<8x128xf32>
    %118 = tpu.matmul %117, %0, %cst_45 {dimension_numbers = #tpu.dot_dimension_numbers<[1], [0], [0], [1], [0, 0, 1, 1], [], []>} : vector<8x32xbf16>, vector<32x128xbf16>, vector<8x128xf32> -> vector<8x128xf32>
    %119 = arith.truncf %88 : vector<8x32xf32> to vector<8x32xbf16>
    %cst_46 = arith.constant dense<0.000000e+00> : vector<8x128xf32>
    %120 = tpu.matmul %119, %2, %cst_46 {dimension_numbers = #tpu.dot_dimension_numbers<[1], [0], [0], [1], [0, 0, 1, 1], [], []>} : vector<8x32xbf16>, vector<32x128xbf16>, vector<8x128xf32> -> vector<8x128xf32>
    %121 = arith.addf %118, %120 : vector<8x128xf32>
    %122 = arith.addf %121, %6 : vector<8x128xf32>
    %123 = arith.negf %122 : vector<8x128xf32>
    %124 = math.exp %123 : vector<8x128xf32>
    %cst_47 = arith.constant 1.000000e+00 : f32
    %125 = vector.broadcast %cst_47 : f32 to vector<8x128xf32>
    %126 = arith.addf %125, %124 : vector<8x128xf32>
    %127 = arith.divf %125, %126 : vector<8x128xf32>
    %128 = math.tanh %122 : vector<8x128xf32>
    %129 = vector.extract_strided_slice %127 {offsets = [0, 0], sizes = [8, 32], strides = [1, 1]} : vector<8x128xf32> to vector<8x32xf32>
    %130 = vector.extract_strided_slice %127 {offsets = [0, 32], sizes = [8, 32], strides = [1, 1]} : vector<8x128xf32> to vector<8x32xf32>
    %131 = vector.extract_strided_slice %128 {offsets = [0, 64], sizes = [8, 32], strides = [1, 1]} : vector<8x128xf32> to vector<8x32xf32>
    %132 = vector.extract_strided_slice %127 {offsets = [0, 96], sizes = [8, 32], strides = [1, 1]} : vector<8x128xf32> to vector<8x32xf32>
    %133 = arith.mulf %130, %86 : vector<8x32xf32>
    %134 = arith.mulf %129, %131 : vector<8x32xf32>
    %135 = arith.addf %133, %134 : vector<8x32xf32>
    %136 = math.tanh %135 : vector<8x32xf32>
    %137 = arith.mulf %132, %136 : vector<8x32xf32>
    %138 = arith.truncf %137 : vector<8x32xf32> to vector<8x32xbf16>
    %cst_48 = arith.constant dense<0.000000e+00> : vector<8x128xf32>
    %139 = tpu.matmul %138, %1, %cst_48 {dimension_numbers = #tpu.dot_dimension_numbers<[1], [0], [0], [1], [0, 0, 1, 1], [], []>} : vector<8x32xbf16>, vector<32x128xbf16>, vector<8x128xf32> -> vector<8x128xf32>
    %140 = arith.truncf %109 : vector<8x32xf32> to vector<8x32xbf16>
    %cst_49 = arith.constant dense<0.000000e+00> : vector<8x128xf32>
    %141 = tpu.matmul %140, %3, %cst_49 {dimension_numbers = #tpu.dot_dimension_numbers<[1], [0], [0], [1], [0, 0, 1, 1], [], []>} : vector<8x32xbf16>, vector<32x128xbf16>, vector<8x128xf32> -> vector<8x128xf32>
    %142 = arith.addf %139, %141 : vector<8x128xf32>
    %143 = arith.addf %142, %9 : vector<8x128xf32>
    %144 = arith.negf %143 : vector<8x128xf32>
    %145 = math.exp %144 : vector<8x128xf32>
    %cst_50 = arith.constant 1.000000e+00 : f32
    %146 = vector.broadcast %cst_50 : f32 to vector<8x128xf32>
    %147 = arith.addf %146, %145 : vector<8x128xf32>
    %148 = arith.divf %146, %147 : vector<8x128xf32>
    %149 = math.tanh %143 : vector<8x128xf32>
    %150 = vector.extract_strided_slice %148 {offsets = [0, 0], sizes = [8, 32], strides = [1, 1]} : vector<8x128xf32> to vector<8x32xf32>
    %151 = vector.extract_strided_slice %148 {offsets = [0, 32], sizes = [8, 32], strides = [1, 1]} : vector<8x128xf32> to vector<8x32xf32>
    %152 = vector.extract_strided_slice %149 {offsets = [0, 64], sizes = [8, 32], strides = [1, 1]} : vector<8x128xf32> to vector<8x32xf32>
    %153 = vector.extract_strided_slice %148 {offsets = [0, 96], sizes = [8, 32], strides = [1, 1]} : vector<8x128xf32> to vector<8x32xf32>
    %154 = arith.mulf %151, %107 : vector<8x32xf32>
    %155 = arith.mulf %150, %152 : vector<8x32xf32>
    %156 = arith.addf %154, %155 : vector<8x32xf32>
    %157 = math.tanh %156 : vector<8x32xf32>
    %158 = arith.mulf %153, %157 : vector<8x32xf32>
    %159 = arith.truncf %158 : vector<8x32xf32> to vector<8x32xbf16>
    %cst_51 = arith.constant dense<0.000000e+00> : vector<8x128xf32>
    %160 = tpu.matmul %159, %10, %cst_51 {dimension_numbers = #tpu.dot_dimension_numbers<[1], [0], [0], [1], [0, 0, 1, 1], [], []>} : vector<8x32xbf16>, vector<32x128xbf16>, vector<8x128xf32> -> vector<8x128xf32>
    %161 = arith.addf %160, %13 : vector<8x128xf32>
    %c2_52 = arith.constant 2 : index
    %c0_53 = arith.constant 0 : index
    %c0_54 = arith.constant 0 : index
    %162 = vector.load %arg9[%c2_52, %c0_53, %c0_54] : memref<9x8x128xf32, #tpu.memory_space<vmem>>, vector<1x8x128xf32>
    %163 = vector.shape_cast %162 : vector<1x8x128xf32> to vector<8x128xf32>
    %164 = vector.shape_cast %161 : vector<8x128xf32> to vector<1x8x128xf32>
    tpu.vector_store %arg9[%c2_52, %c0_53, %c0_54], %164 {strides = array<i32>} : memref<9x8x128xf32, #tpu.memory_space<vmem>>, vector<1x8x128xf32>,
    %c3 = arith.constant 3 : index
    %c0_55 = arith.constant 0 : index
    %c0_56 = arith.constant 0 : index
    %165 = vector.load %arg0[%c3, %c0_55, %c0_56] : memref<9x8x32xbf16, #tpu.memory_space<vmem>>, vector<1x8x32xbf16>
    %166 = vector.shape_cast %165 : vector<1x8x32xbf16> to vector<8x32xbf16>
    %cst_57 = arith.constant dense<0.000000e+00> : vector<8x128xf32>
    %167 = tpu.matmul %166, %0, %cst_57 {dimension_numbers = #tpu.dot_dimension_numbers<[1], [0], [0], [1], [0, 0, 1, 1], [], []>} : vector<8x32xbf16>, vector<32x128xbf16>, vector<8x128xf32> -> vector<8x128xf32>
    %168 = arith.truncf %137 : vector<8x32xf32> to vector<8x32xbf16>
    %cst_58 = arith.constant dense<0.000000e+00> : vector<8x128xf32>
    %169 = tpu.matmul %168, %2, %cst_58 {dimension_numbers = #tpu.dot_dimension_numbers<[1], [0], [0], [1], [0, 0, 1, 1], [], []>} : vector<8x32xbf16>, vector<32x128xbf16>, vector<8x128xf32> -> vector<8x128xf32>
    %170 = arith.addf %167, %169 : vector<8x128xf32>
    %171 = arith.addf %170, %6 : vector<8x128xf32>
    %172 = arith.negf %171 : vector<8x128xf32>
    %173 = math.exp %172 : vector<8x128xf32>
    %cst_59 = arith.constant 1.000000e+00 : f32
    %174 = vector.broadcast %cst_59 : f32 to vector<8x128xf32>
    %175 = arith.addf %174, %173 : vector<8x128xf32>
    %176 = arith.divf %174, %175 : vector<8x128xf32>
    %177 = math.tanh %171 : vector<8x128xf32>
    %178 = vector.extract_strided_slice %176 {offsets = [0, 0], sizes = [8, 32], strides = [1, 1]} : vector<8x128xf32> to vector<8x32xf32>
    %179 = vector.extract_strided_slice %176 {offsets = [0, 32], sizes = [8, 32], strides = [1, 1]} : vector<8x128xf32> to vector<8x32xf32>
    %180 = vector.extract_strided_slice %177 {offsets = [0, 64], sizes = [8, 32], strides = [1, 1]} : vector<8x128xf32> to vector<8x32xf32>
    %181 = vector.extract_strided_slice %176 {offsets = [0, 96], sizes = [8, 32], strides = [1, 1]} : vector<8x128xf32> to vector<8x32xf32>
    %182 = arith.mulf %179, %135 : vector<8x32xf32>
    %183 = arith.mulf %178, %180 : vector<8x32xf32>
    %184 = arith.addf %182, %183 : vector<8x32xf32>
    %185 = math.tanh %184 : vector<8x32xf32>
    %186 = arith.mulf %181, %185 : vector<8x32xf32>
    %187 = arith.truncf %186 : vector<8x32xf32> to vector<8x32xbf16>
    %cst_60 = arith.constant dense<0.000000e+00> : vector<8x128xf32>
    %188 = tpu.matmul %187, %1, %cst_60 {dimension_numbers = #tpu.dot_dimension_numbers<[1], [0], [0], [1], [0, 0, 1, 1], [], []>} : vector<8x32xbf16>, vector<32x128xbf16>, vector<8x128xf32> -> vector<8x128xf32>
    %189 = arith.truncf %158 : vector<8x32xf32> to vector<8x32xbf16>
    %cst_61 = arith.constant dense<0.000000e+00> : vector<8x128xf32>
    %190 = tpu.matmul %189, %3, %cst_61 {dimension_numbers = #tpu.dot_dimension_numbers<[1], [0], [0], [1], [0, 0, 1, 1], [], []>} : vector<8x32xbf16>, vector<32x128xbf16>, vector<8x128xf32> -> vector<8x128xf32>
    %191 = arith.addf %188, %190 : vector<8x128xf32>
    %192 = arith.addf %191, %9 : vector<8x128xf32>
    %193 = arith.negf %192 : vector<8x128xf32>
    %194 = math.exp %193 : vector<8x128xf32>
    %cst_62 = arith.constant 1.000000e+00 : f32
    %195 = vector.broadcast %cst_62 : f32 to vector<8x128xf32>
    %196 = arith.addf %195, %194 : vector<8x128xf32>
    %197 = arith.divf %195, %196 : vector<8x128xf32>
    %198 = math.tanh %192 : vector<8x128xf32>
    %199 = vector.extract_strided_slice %197 {offsets = [0, 0], sizes = [8, 32], strides = [1, 1]} : vector<8x128xf32> to vector<8x32xf32>
    %200 = vector.extract_strided_slice %197 {offsets = [0, 32], sizes = [8, 32], strides = [1, 1]} : vector<8x128xf32> to vector<8x32xf32>
    %201 = vector.extract_strided_slice %198 {offsets = [0, 64], sizes = [8, 32], strides = [1, 1]} : vector<8x128xf32> to vector<8x32xf32>
    %202 = vector.extract_strided_slice %197 {offsets = [0, 96], sizes = [8, 32], strides = [1, 1]} : vector<8x128xf32> to vector<8x32xf32>
    %203 = arith.mulf %200, %156 : vector<8x32xf32>
    %204 = arith.mulf %199, %201 : vector<8x32xf32>
    %205 = arith.addf %203, %204 : vector<8x32xf32>
    %206 = math.tanh %205 : vector<8x32xf32>
    %207 = arith.mulf %202, %206 : vector<8x32xf32>
    %208 = arith.truncf %207 : vector<8x32xf32> to vector<8x32xbf16>
    %cst_63 = arith.constant dense<0.000000e+00> : vector<8x128xf32>
    %209 = tpu.matmul %208, %10, %cst_63 {dimension_numbers = #tpu.dot_dimension_numbers<[1], [0], [0], [1], [0, 0, 1, 1], [], []>} : vector<8x32xbf16>, vector<32x128xbf16>, vector<8x128xf32> -> vector<8x128xf32>
    %210 = arith.addf %209, %13 : vector<8x128xf32>
    %c3_64 = arith.constant 3 : index
    %c0_65 = arith.constant 0 : index
    %c0_66 = arith.constant 0 : index
    %211 = vector.load %arg9[%c3_64, %c0_65, %c0_66] : memref<9x8x128xf32, #tpu.memory_space<vmem>>, vector<1x8x128xf32>
    %212 = vector.shape_cast %211 : vector<1x8x128xf32> to vector<8x128xf32>
    %213 = vector.shape_cast %210 : vector<8x128xf32> to vector<1x8x128xf32>
    tpu.vector_store %arg9[%c3_64, %c0_65, %c0_66], %213 {strides = array<i32>} : memref<9x8x128xf32, #tpu.memory_space<vmem>>, vector<1x8x128xf32>,
    %c4 = arith.constant 4 : index
    %c0_67 = arith.constant 0 : index
    %c0_68 = arith.constant 0 : index
    %214 = vector.load %arg0[%c4, %c0_67, %c0_68] : memref<9x8x32xbf16, #tpu.memory_space<vmem>>, vector<1x8x32xbf16>
    %215 = vector.shape_cast %214 : vector<1x8x32xbf16> to vector<8x32xbf16>
    %cst_69 = arith.constant dense<0.000000e+00> : vector<8x128xf32>
    %216 = tpu.matmul %215, %0, %cst_69 {dimension_numbers = #tpu.dot_dimension_numbers<[1], [0], [0], [1], [0, 0, 1, 1], [], []>} : vector<8x32xbf16>, vector<32x128xbf16>, vector<8x128xf32> -> vector<8x128xf32>
    %217 = arith.truncf %186 : vector<8x32xf32> to vector<8x32xbf16>
    %cst_70 = arith.constant dense<0.000000e+00> : vector<8x128xf32>
    %218 = tpu.matmul %217, %2, %cst_70 {dimension_numbers = #tpu.dot_dimension_numbers<[1], [0], [0], [1], [0, 0, 1, 1], [], []>} : vector<8x32xbf16>, vector<32x128xbf16>, vector<8x128xf32> -> vector<8x128xf32>
    %219 = arith.addf %216, %218 : vector<8x128xf32>
    %220 = arith.addf %219, %6 : vector<8x128xf32>
    %221 = arith.negf %220 : vector<8x128xf32>
    %222 = math.exp %221 : vector<8x128xf32>
    %cst_71 = arith.constant 1.000000e+00 : f32
    %223 = vector.broadcast %cst_71 : f32 to vector<8x128xf32>
    %224 = arith.addf %223, %222 : vector<8x128xf32>
    %225 = arith.divf %223, %224 : vector<8x128xf32>
    %226 = math.tanh %220 : vector<8x128xf32>
    %227 = vector.extract_strided_slice %225 {offsets = [0, 0], sizes = [8, 32], strides = [1, 1]} : vector<8x128xf32> to vector<8x32xf32>
    %228 = vector.extract_strided_slice %225 {offsets = [0, 32], sizes = [8, 32], strides = [1, 1]} : vector<8x128xf32> to vector<8x32xf32>
    %229 = vector.extract_strided_slice %226 {offsets = [0, 64], sizes = [8, 32], strides = [1, 1]} : vector<8x128xf32> to vector<8x32xf32>
    %230 = vector.extract_strided_slice %225 {offsets = [0, 96], sizes = [8, 32], strides = [1, 1]} : vector<8x128xf32> to vector<8x32xf32>
    %231 = arith.mulf %228, %184 : vector<8x32xf32>
    %232 = arith.mulf %227, %229 : vector<8x32xf32>
    %233 = arith.addf %231, %232 : vector<8x32xf32>
    %234 = math.tanh %233 : vector<8x32xf32>
    %235 = arith.mulf %230, %234 : vector<8x32xf32>
    %236 = arith.truncf %235 : vector<8x32xf32> to vector<8x32xbf16>
    %cst_72 = arith.constant dense<0.000000e+00> : vector<8x128xf32>
    %237 = tpu.matmul %236, %1, %cst_72 {dimension_numbers = #tpu.dot_dimension_numbers<[1], [0], [0], [1], [0, 0, 1, 1], [], []>} : vector<8x32xbf16>, vector<32x128xbf16>, vector<8x128xf32> -> vector<8x128xf32>
    %238 = arith.truncf %207 : vector<8x32xf32> to vector<8x32xbf16>
    %cst_73 = arith.constant dense<0.000000e+00> : vector<8x128xf32>
    %239 = tpu.matmul %238, %3, %cst_73 {dimension_numbers = #tpu.dot_dimension_numbers<[1], [0], [0], [1], [0, 0, 1, 1], [], []>} : vector<8x32xbf16>, vector<32x128xbf16>, vector<8x128xf32> -> vector<8x128xf32>
    %240 = arith.addf %237, %239 : vector<8x128xf32>
    %241 = arith.addf %240, %9 : vector<8x128xf32>
    %242 = arith.negf %241 : vector<8x128xf32>
    %243 = math.exp %242 : vector<8x128xf32>
    %cst_74 = arith.constant 1.000000e+00 : f32
    %244 = vector.broadcast %cst_74 : f32 to vector<8x128xf32>
    %245 = arith.addf %244, %243 : vector<8x128xf32>
    %246 = arith.divf %244, %245 : vector<8x128xf32>
    %247 = math.tanh %241 : vector<8x128xf32>
    %248 = vector.extract_strided_slice %246 {offsets = [0, 0], sizes = [8, 32], strides = [1, 1]} : vector<8x128xf32> to vector<8x32xf32>
    %249 = vector.extract_strided_slice %246 {offsets = [0, 32], sizes = [8, 32], strides = [1, 1]} : vector<8x128xf32> to vector<8x32xf32>
    %250 = vector.extract_strided_slice %247 {offsets = [0, 64], sizes = [8, 32], strides = [1, 1]} : vector<8x128xf32> to vector<8x32xf32>
    %251 = vector.extract_strided_slice %246 {offsets = [0, 96], sizes = [8, 32], strides = [1, 1]} : vector<8x128xf32> to vector<8x32xf32>
    %252 = arith.mulf %249, %205 : vector<8x32xf32>
    %253 = arith.mulf %248, %250 : vector<8x32xf32>
    %254 = arith.addf %252, %253 : vector<8x32xf32>
    %255 = math.tanh %254 : vector<8x32xf32>
    %256 = arith.mulf %251, %255 : vector<8x32xf32>
    %257 = arith.truncf %256 : vector<8x32xf32> to vector<8x32xbf16>
    %cst_75 = arith.constant dense<0.000000e+00> : vector<8x128xf32>
    %258 = tpu.matmul %257, %10, %cst_75 {dimension_numbers = #tpu.dot_dimension_numbers<[1], [0], [0], [1], [0, 0, 1, 1], [], []>} : vector<8x32xbf16>, vector<32x128xbf16>, vector<8x128xf32> -> vector<8x128xf32>
    %259 = arith.addf %258, %13 : vector<8x128xf32>
    %c4_76 = arith.constant 4 : index
    %c0_77 = arith.constant 0 : index
    %c0_78 = arith.constant 0 : index
    %260 = vector.load %arg9[%c4_76, %c0_77, %c0_78] : memref<9x8x128xf32, #tpu.memory_space<vmem>>, vector<1x8x128xf32>
    %261 = vector.shape_cast %260 : vector<1x8x128xf32> to vector<8x128xf32>
    %262 = vector.shape_cast %259 : vector<8x128xf32> to vector<1x8x128xf32>
    tpu.vector_store %arg9[%c4_76, %c0_77, %c0_78], %262 {strides = array<i32>} : memref<9x8x128xf32, #tpu.memory_space<vmem>>, vector<1x8x128xf32>,
    %c5 = arith.constant 5 : index
    %c0_79 = arith.constant 0 : index
    %c0_80 = arith.constant 0 : index
    %263 = vector.load %arg0[%c5, %c0_79, %c0_80] : memref<9x8x32xbf16, #tpu.memory_space<vmem>>, vector<1x8x32xbf16>
    %264 = vector.shape_cast %263 : vector<1x8x32xbf16> to vector<8x32xbf16>
    %cst_81 = arith.constant dense<0.000000e+00> : vector<8x128xf32>
    %265 = tpu.matmul %264, %0, %cst_81 {dimension_numbers = #tpu.dot_dimension_numbers<[1], [0], [0], [1], [0, 0, 1, 1], [], []>} : vector<8x32xbf16>, vector<32x128xbf16>, vector<8x128xf32> -> vector<8x128xf32>
    %266 = arith.truncf %235 : vector<8x32xf32> to vector<8x32xbf16>
    %cst_82 = arith.constant dense<0.000000e+00> : vector<8x128xf32>
    %267 = tpu.matmul %266, %2, %cst_82 {dimension_numbers = #tpu.dot_dimension_numbers<[1], [0], [0], [1], [0, 0, 1, 1], [], []>} : vector<8x32xbf16>, vector<32x128xbf16>, vector<8x128xf32> -> vector<8x128xf32>
    %268 = arith.addf %265, %267 : vector<8x128xf32>
    %269 = arith.addf %268, %6 : vector<8x128xf32>
    %270 = arith.negf %269 : vector<8x128xf32>
    %271 = math.exp %270 : vector<8x128xf32>
    %cst_83 = arith.constant 1.000000e+00 : f32
    %272 = vector.broadcast %cst_83 : f32 to vector<8x128xf32>
    %273 = arith.addf %272, %271 : vector<8x128xf32>
    %274 = arith.divf %272, %273 : vector<8x128xf32>
    %275 = math.tanh %269 : vector<8x128xf32>
    %276 = vector.extract_strided_slice %274 {offsets = [0, 0], sizes = [8, 32], strides = [1, 1]} : vector<8x128xf32> to vector<8x32xf32>
    %277 = vector.extract_strided_slice %274 {offsets = [0, 32], sizes = [8, 32], strides = [1, 1]} : vector<8x128xf32> to vector<8x32xf32>
    %278 = vector.extract_strided_slice %275 {offsets = [0, 64], sizes = [8, 32], strides = [1, 1]} : vector<8x128xf32> to vector<8x32xf32>
    %279 = vector.extract_strided_slice %274 {offsets = [0, 96], sizes = [8, 32], strides = [1, 1]} : vector<8x128xf32> to vector<8x32xf32>
    %280 = arith.mulf %277, %233 : vector<8x32xf32>
    %281 = arith.mulf %276, %278 : vector<8x32xf32>
    %282 = arith.addf %280, %281 : vector<8x32xf32>
    %283 = math.tanh %282 : vector<8x32xf32>
    %284 = arith.mulf %279, %283 : vector<8x32xf32>
    %285 = arith.truncf %284 : vector<8x32xf32> to vector<8x32xbf16>
    %cst_84 = arith.constant dense<0.000000e+00> : vector<8x128xf32>
    %286 = tpu.matmul %285, %1, %cst_84 {dimension_numbers = #tpu.dot_dimension_numbers<[1], [0], [0], [1], [0, 0, 1, 1], [], []>} : vector<8x32xbf16>, vector<32x128xbf16>, vector<8x128xf32> -> vector<8x128xf32>
    %287 = arith.truncf %256 : vector<8x32xf32> to vector<8x32xbf16>
    %cst_85 = arith.constant dense<0.000000e+00> : vector<8x128xf32>
    %288 = tpu.matmul %287, %3, %cst_85 {dimension_numbers = #tpu.dot_dimension_numbers<[1], [0], [0], [1], [0, 0, 1, 1], [], []>} : vector<8x32xbf16>, vector<32x128xbf16>, vector<8x128xf32> -> vector<8x128xf32>
    %289 = arith.addf %286, %288 : vector<8x128xf32>
    %290 = arith.addf %289, %9 : vector<8x128xf32>
    %291 = arith.negf %290 : vector<8x128xf32>
    %292 = math.exp %291 : vector<8x128xf32>
    %cst_86 = arith.constant 1.000000e+00 : f32
    %293 = vector.broadcast %cst_86 : f32 to vector<8x128xf32>
    %294 = arith.addf %293, %292 : vector<8x128xf32>
    %295 = arith.divf %293, %294 : vector<8x128xf32>
    %296 = math.tanh %290 : vector<8x128xf32>
    %297 = vector.extract_strided_slice %295 {offsets = [0, 0], sizes = [8, 32], strides = [1, 1]} : vector<8x128xf32> to vector<8x32xf32>
    %298 = vector.extract_strided_slice %295 {offsets = [0, 32], sizes = [8, 32], strides = [1, 1]} : vector<8x128xf32> to vector<8x32xf32>
    %299 = vector.extract_strided_slice %296 {offsets = [0, 64], sizes = [8, 32], strides = [1, 1]} : vector<8x128xf32> to vector<8x32xf32>
    %300 = vector.extract_strided_slice %295 {offsets = [0, 96], sizes = [8, 32], strides = [1, 1]} : vector<8x128xf32> to vector<8x32xf32>
    %301 = arith.mulf %298, %254 : vector<8x32xf32>
    %302 = arith.mulf %297, %299 : vector<8x32xf32>
    %303 = arith.addf %301, %302 : vector<8x32xf32>
    %304 = math.tanh %303 : vector<8x32xf32>
    %305 = arith.mulf %300, %304 : vector<8x32xf32>
    %306 = arith.truncf %305 : vector<8x32xf32> to vector<8x32xbf16>
    %cst_87 = arith.constant dense<0.000000e+00> : vector<8x128xf32>
    %307 = tpu.matmul %306, %10, %cst_87 {dimension_numbers = #tpu.dot_dimension_numbers<[1], [0], [0], [1], [0, 0, 1, 1], [], []>} : vector<8x32xbf16>, vector<32x128xbf16>, vector<8x128xf32> -> vector<8x128xf32>
    %308 = arith.addf %307, %13 : vector<8x128xf32>
    %c5_88 = arith.constant 5 : index
    %c0_89 = arith.constant 0 : index
    %c0_90 = arith.constant 0 : index
    %309 = vector.load %arg9[%c5_88, %c0_89, %c0_90] : memref<9x8x128xf32, #tpu.memory_space<vmem>>, vector<1x8x128xf32>
    %310 = vector.shape_cast %309 : vector<1x8x128xf32> to vector<8x128xf32>
    %311 = vector.shape_cast %308 : vector<8x128xf32> to vector<1x8x128xf32>
    tpu.vector_store %arg9[%c5_88, %c0_89, %c0_90], %311 {strides = array<i32>} : memref<9x8x128xf32, #tpu.memory_space<vmem>>, vector<1x8x128xf32>,
    %c6 = arith.constant 6 : index
    %c0_91 = arith.constant 0 : index
    %c0_92 = arith.constant 0 : index
    %312 = vector.load %arg0[%c6, %c0_91, %c0_92] : memref<9x8x32xbf16, #tpu.memory_space<vmem>>, vector<1x8x32xbf16>
    %313 = vector.shape_cast %312 : vector<1x8x32xbf16> to vector<8x32xbf16>
    %cst_93 = arith.constant dense<0.000000e+00> : vector<8x128xf32>
    %314 = tpu.matmul %313, %0, %cst_93 {dimension_numbers = #tpu.dot_dimension_numbers<[1], [0], [0], [1], [0, 0, 1, 1], [], []>} : vector<8x32xbf16>, vector<32x128xbf16>, vector<8x128xf32> -> vector<8x128xf32>
    %315 = arith.truncf %284 : vector<8x32xf32> to vector<8x32xbf16>
    %cst_94 = arith.constant dense<0.000000e+00> : vector<8x128xf32>
    %316 = tpu.matmul %315, %2, %cst_94 {dimension_numbers = #tpu.dot_dimension_numbers<[1], [0], [0], [1], [0, 0, 1, 1], [], []>} : vector<8x32xbf16>, vector<32x128xbf16>, vector<8x128xf32> -> vector<8x128xf32>
    %317 = arith.addf %314, %316 : vector<8x128xf32>
    %318 = arith.addf %317, %6 : vector<8x128xf32>
    %319 = arith.negf %318 : vector<8x128xf32>
    %320 = math.exp %319 : vector<8x128xf32>
    %cst_95 = arith.constant 1.000000e+00 : f32
    %321 = vector.broadcast %cst_95 : f32 to vector<8x128xf32>
    %322 = arith.addf %321, %320 : vector<8x128xf32>
    %323 = arith.divf %321, %322 : vector<8x128xf32>
    %324 = math.tanh %318 : vector<8x128xf32>
    %325 = vector.extract_strided_slice %323 {offsets = [0, 0], sizes = [8, 32], strides = [1, 1]} : vector<8x128xf32> to vector<8x32xf32>
    %326 = vector.extract_strided_slice %323 {offsets = [0, 32], sizes = [8, 32], strides = [1, 1]} : vector<8x128xf32> to vector<8x32xf32>
    %327 = vector.extract_strided_slice %324 {offsets = [0, 64], sizes = [8, 32], strides = [1, 1]} : vector<8x128xf32> to vector<8x32xf32>
    %328 = vector.extract_strided_slice %323 {offsets = [0, 96], sizes = [8, 32], strides = [1, 1]} : vector<8x128xf32> to vector<8x32xf32>
    %329 = arith.mulf %326, %282 : vector<8x32xf32>
    %330 = arith.mulf %325, %327 : vector<8x32xf32>
    %331 = arith.addf %329, %330 : vector<8x32xf32>
    %332 = math.tanh %331 : vector<8x32xf32>
    %333 = arith.mulf %328, %332 : vector<8x32xf32>
    %334 = arith.truncf %333 : vector<8x32xf32> to vector<8x32xbf16>
    %cst_96 = arith.constant dense<0.000000e+00> : vector<8x128xf32>
    %335 = tpu.matmul %334, %1, %cst_96 {dimension_numbers = #tpu.dot_dimension_numbers<[1], [0], [0], [1], [0, 0, 1, 1], [], []>} : vector<8x32xbf16>, vector<32x128xbf16>, vector<8x128xf32> -> vector<8x128xf32>
    %336 = arith.truncf %305 : vector<8x32xf32> to vector<8x32xbf16>
    %cst_97 = arith.constant dense<0.000000e+00> : vector<8x128xf32>
    %337 = tpu.matmul %336, %3, %cst_97 {dimension_numbers = #tpu.dot_dimension_numbers<[1], [0], [0], [1], [0, 0, 1, 1], [], []>} : vector<8x32xbf16>, vector<32x128xbf16>, vector<8x128xf32> -> vector<8x128xf32>
    %338 = arith.addf %335, %337 : vector<8x128xf32>
    %339 = arith.addf %338, %9 : vector<8x128xf32>
    %340 = arith.negf %339 : vector<8x128xf32>
    %341 = math.exp %340 : vector<8x128xf32>
    %cst_98 = arith.constant 1.000000e+00 : f32
    %342 = vector.broadcast %cst_98 : f32 to vector<8x128xf32>
    %343 = arith.addf %342, %341 : vector<8x128xf32>
    %344 = arith.divf %342, %343 : vector<8x128xf32>
    %345 = math.tanh %339 : vector<8x128xf32>
    %346 = vector.extract_strided_slice %344 {offsets = [0, 0], sizes = [8, 32], strides = [1, 1]} : vector<8x128xf32> to vector<8x32xf32>
    %347 = vector.extract_strided_slice %344 {offsets = [0, 32], sizes = [8, 32], strides = [1, 1]} : vector<8x128xf32> to vector<8x32xf32>
    %348 = vector.extract_strided_slice %345 {offsets = [0, 64], sizes = [8, 32], strides = [1, 1]} : vector<8x128xf32> to vector<8x32xf32>
    %349 = vector.extract_strided_slice %344 {offsets = [0, 96], sizes = [8, 32], strides = [1, 1]} : vector<8x128xf32> to vector<8x32xf32>
    %350 = arith.mulf %347, %303 : vector<8x32xf32>
    %351 = arith.mulf %346, %348 : vector<8x32xf32>
    %352 = arith.addf %350, %351 : vector<8x32xf32>
    %353 = math.tanh %352 : vector<8x32xf32>
    %354 = arith.mulf %349, %353 : vector<8x32xf32>
    %355 = arith.truncf %354 : vector<8x32xf32> to vector<8x32xbf16>
    %cst_99 = arith.constant dense<0.000000e+00> : vector<8x128xf32>
    %356 = tpu.matmul %355, %10, %cst_99 {dimension_numbers = #tpu.dot_dimension_numbers<[1], [0], [0], [1], [0, 0, 1, 1], [], []>} : vector<8x32xbf16>, vector<32x128xbf16>, vector<8x128xf32> -> vector<8x128xf32>
    %357 = arith.addf %356, %13 : vector<8x128xf32>
    %c6_100 = arith.constant 6 : index
    %c0_101 = arith.constant 0 : index
    %c0_102 = arith.constant 0 : index
    %358 = vector.load %arg9[%c6_100, %c0_101, %c0_102] : memref<9x8x128xf32, #tpu.memory_space<vmem>>, vector<1x8x128xf32>
    %359 = vector.shape_cast %358 : vector<1x8x128xf32> to vector<8x128xf32>
    %360 = vector.shape_cast %357 : vector<8x128xf32> to vector<1x8x128xf32>
    tpu.vector_store %arg9[%c6_100, %c0_101, %c0_102], %360 {strides = array<i32>} : memref<9x8x128xf32, #tpu.memory_space<vmem>>, vector<1x8x128xf32>,
    %c7 = arith.constant 7 : index
    %c0_103 = arith.constant 0 : index
    %c0_104 = arith.constant 0 : index
    %361 = vector.load %arg0[%c7, %c0_103, %c0_104] : memref<9x8x32xbf16, #tpu.memory_space<vmem>>, vector<1x8x32xbf16>
    %362 = vector.shape_cast %361 : vector<1x8x32xbf16> to vector<8x32xbf16>
    %cst_105 = arith.constant dense<0.000000e+00> : vector<8x128xf32>
    %363 = tpu.matmul %362, %0, %cst_105 {dimension_numbers = #tpu.dot_dimension_numbers<[1], [0], [0], [1], [0, 0, 1, 1], [], []>} : vector<8x32xbf16>, vector<32x128xbf16>, vector<8x128xf32> -> vector<8x128xf32>
    %364 = arith.truncf %333 : vector<8x32xf32> to vector<8x32xbf16>
    %cst_106 = arith.constant dense<0.000000e+00> : vector<8x128xf32>
    %365 = tpu.matmul %364, %2, %cst_106 {dimension_numbers = #tpu.dot_dimension_numbers<[1], [0], [0], [1], [0, 0, 1, 1], [], []>} : vector<8x32xbf16>, vector<32x128xbf16>, vector<8x128xf32> -> vector<8x128xf32>
    %366 = arith.addf %363, %365 : vector<8x128xf32>
    %367 = arith.addf %366, %6 : vector<8x128xf32>
    %368 = arith.negf %367 : vector<8x128xf32>
    %369 = math.exp %368 : vector<8x128xf32>
    %cst_107 = arith.constant 1.000000e+00 : f32
    %370 = vector.broadcast %cst_107 : f32 to vector<8x128xf32>
    %371 = arith.addf %370, %369 : vector<8x128xf32>
    %372 = arith.divf %370, %371 : vector<8x128xf32>
    %373 = math.tanh %367 : vector<8x128xf32>
    %374 = vector.extract_strided_slice %372 {offsets = [0, 0], sizes = [8, 32], strides = [1, 1]} : vector<8x128xf32> to vector<8x32xf32>
    %375 = vector.extract_strided_slice %372 {offsets = [0, 32], sizes = [8, 32], strides = [1, 1]} : vector<8x128xf32> to vector<8x32xf32>
    %376 = vector.extract_strided_slice %373 {offsets = [0, 64], sizes = [8, 32], strides = [1, 1]} : vector<8x128xf32> to vector<8x32xf32>
    %377 = vector.extract_strided_slice %372 {offsets = [0, 96], sizes = [8, 32], strides = [1, 1]} : vector<8x128xf32> to vector<8x32xf32>
    %378 = arith.mulf %375, %331 : vector<8x32xf32>
    %379 = arith.mulf %374, %376 : vector<8x32xf32>
    %380 = arith.addf %378, %379 : vector<8x32xf32>
    %381 = math.tanh %380 : vector<8x32xf32>
    %382 = arith.mulf %377, %381 : vector<8x32xf32>
    %383 = arith.truncf %382 : vector<8x32xf32> to vector<8x32xbf16>
    %cst_108 = arith.constant dense<0.000000e+00> : vector<8x128xf32>
    %384 = tpu.matmul %383, %1, %cst_108 {dimension_numbers = #tpu.dot_dimension_numbers<[1], [0], [0], [1], [0, 0, 1, 1], [], []>} : vector<8x32xbf16>, vector<32x128xbf16>, vector<8x128xf32> -> vector<8x128xf32>
    %385 = arith.truncf %354 : vector<8x32xf32> to vector<8x32xbf16>
    %cst_109 = arith.constant dense<0.000000e+00> : vector<8x128xf32>
    %386 = tpu.matmul %385, %3, %cst_109 {dimension_numbers = #tpu.dot_dimension_numbers<[1], [0], [0], [1], [0, 0, 1, 1], [], []>} : vector<8x32xbf16>, vector<32x128xbf16>, vector<8x128xf32> -> vector<8x128xf32>
    %387 = arith.addf %384, %386 : vector<8x128xf32>
    %388 = arith.addf %387, %9 : vector<8x128xf32>
    %389 = arith.negf %388 : vector<8x128xf32>
    %390 = math.exp %389 : vector<8x128xf32>
    %cst_110 = arith.constant 1.000000e+00 : f32
    %391 = vector.broadcast %cst_110 : f32 to vector<8x128xf32>
    %392 = arith.addf %391, %390 : vector<8x128xf32>
    %393 = arith.divf %391, %392 : vector<8x128xf32>
    %394 = math.tanh %388 : vector<8x128xf32>
    %395 = vector.extract_strided_slice %393 {offsets = [0, 0], sizes = [8, 32], strides = [1, 1]} : vector<8x128xf32> to vector<8x32xf32>
    %396 = vector.extract_strided_slice %393 {offsets = [0, 32], sizes = [8, 32], strides = [1, 1]} : vector<8x128xf32> to vector<8x32xf32>
    %397 = vector.extract_strided_slice %394 {offsets = [0, 64], sizes = [8, 32], strides = [1, 1]} : vector<8x128xf32> to vector<8x32xf32>
    %398 = vector.extract_strided_slice %393 {offsets = [0, 96], sizes = [8, 32], strides = [1, 1]} : vector<8x128xf32> to vector<8x32xf32>
    %399 = arith.mulf %396, %352 : vector<8x32xf32>
    %400 = arith.mulf %395, %397 : vector<8x32xf32>
    %401 = arith.addf %399, %400 : vector<8x32xf32>
    %402 = math.tanh %401 : vector<8x32xf32>
    %403 = arith.mulf %398, %402 : vector<8x32xf32>
    %404 = arith.truncf %403 : vector<8x32xf32> to vector<8x32xbf16>
    %cst_111 = arith.constant dense<0.000000e+00> : vector<8x128xf32>
    %405 = tpu.matmul %404, %10, %cst_111 {dimension_numbers = #tpu.dot_dimension_numbers<[1], [0], [0], [1], [0, 0, 1, 1], [], []>} : vector<8x32xbf16>, vector<32x128xbf16>, vector<8x128xf32> -> vector<8x128xf32>
    %406 = arith.addf %405, %13 : vector<8x128xf32>
    %c7_112 = arith.constant 7 : index
    %c0_113 = arith.constant 0 : index
    %c0_114 = arith.constant 0 : index
    %407 = vector.load %arg9[%c7_112, %c0_113, %c0_114] : memref<9x8x128xf32, #tpu.memory_space<vmem>>, vector<1x8x128xf32>
    %408 = vector.shape_cast %407 : vector<1x8x128xf32> to vector<8x128xf32>
    %409 = vector.shape_cast %406 : vector<8x128xf32> to vector<1x8x128xf32>
    tpu.vector_store %arg9[%c7_112, %c0_113, %c0_114], %409 {strides = array<i32>} : memref<9x8x128xf32, #tpu.memory_space<vmem>>, vector<1x8x128xf32>,
    %c8 = arith.constant 8 : index
    %c0_115 = arith.constant 0 : index
    %c0_116 = arith.constant 0 : index
    %410 = vector.load %arg0[%c8, %c0_115, %c0_116] : memref<9x8x32xbf16, #tpu.memory_space<vmem>>, vector<1x8x32xbf16>
    %411 = vector.shape_cast %410 : vector<1x8x32xbf16> to vector<8x32xbf16>
    %cst_117 = arith.constant dense<0.000000e+00> : vector<8x128xf32>
    %412 = tpu.matmul %411, %0, %cst_117 {dimension_numbers = #tpu.dot_dimension_numbers<[1], [0], [0], [1], [0, 0, 1, 1], [], []>} : vector<8x32xbf16>, vector<32x128xbf16>, vector<8x128xf32> -> vector<8x128xf32>
    %413 = arith.truncf %382 : vector<8x32xf32> to vector<8x32xbf16>
    %cst_118 = arith.constant dense<0.000000e+00> : vector<8x128xf32>
    %414 = tpu.matmul %413, %2, %cst_118 {dimension_numbers = #tpu.dot_dimension_numbers<[1], [0], [0], [1], [0, 0, 1, 1], [], []>} : vector<8x32xbf16>, vector<32x128xbf16>, vector<8x128xf32> -> vector<8x128xf32>
    %415 = arith.addf %412, %414 : vector<8x128xf32>
    %416 = arith.addf %415, %6 : vector<8x128xf32>
    %417 = arith.negf %416 : vector<8x128xf32>
    %418 = math.exp %417 : vector<8x128xf32>
    %cst_119 = arith.constant 1.000000e+00 : f32
    %419 = vector.broadcast %cst_119 : f32 to vector<8x128xf32>
    %420 = arith.addf %419, %418 : vector<8x128xf32>
    %421 = arith.divf %419, %420 : vector<8x128xf32>
    %422 = math.tanh %416 : vector<8x128xf32>
    %423 = vector.extract_strided_slice %421 {offsets = [0, 0], sizes = [8, 32], strides = [1, 1]} : vector<8x128xf32> to vector<8x32xf32>
    %424 = vector.extract_strided_slice %421 {offsets = [0, 32], sizes = [8, 32], strides = [1, 1]} : vector<8x128xf32> to vector<8x32xf32>
    %425 = vector.extract_strided_slice %422 {offsets = [0, 64], sizes = [8, 32], strides = [1, 1]} : vector<8x128xf32> to vector<8x32xf32>
    %426 = vector.extract_strided_slice %421 {offsets = [0, 96], sizes = [8, 32], strides = [1, 1]} : vector<8x128xf32> to vector<8x32xf32>
    %427 = arith.mulf %424, %380 : vector<8x32xf32>
    %428 = arith.mulf %423, %425 : vector<8x32xf32>
    %429 = arith.addf %427, %428 : vector<8x32xf32>
    %430 = math.tanh %429 : vector<8x32xf32>
    %431 = arith.mulf %426, %430 : vector<8x32xf32>
    %432 = arith.truncf %431 : vector<8x32xf32> to vector<8x32xbf16>
    %cst_120 = arith.constant dense<0.000000e+00> : vector<8x128xf32>
    %433 = tpu.matmul %432, %1, %cst_120 {dimension_numbers = #tpu.dot_dimension_numbers<[1], [0], [0], [1], [0, 0, 1, 1], [], []>} : vector<8x32xbf16>, vector<32x128xbf16>, vector<8x128xf32> -> vector<8x128xf32>
    %434 = arith.truncf %403 : vector<8x32xf32> to vector<8x32xbf16>
    %cst_121 = arith.constant dense<0.000000e+00> : vector<8x128xf32>
    %435 = tpu.matmul %434, %3, %cst_121 {dimension_numbers = #tpu.dot_dimension_numbers<[1], [0], [0], [1], [0, 0, 1, 1], [], []>} : vector<8x32xbf16>, vector<32x128xbf16>, vector<8x128xf32> -> vector<8x128xf32>
    %436 = arith.addf %433, %435 : vector<8x128xf32>
    %437 = arith.addf %436, %9 : vector<8x128xf32>
    %438 = arith.negf %437 : vector<8x128xf32>
    %439 = math.exp %438 : vector<8x128xf32>
    %cst_122 = arith.constant 1.000000e+00 : f32
    %440 = vector.broadcast %cst_122 : f32 to vector<8x128xf32>
    %441 = arith.addf %440, %439 : vector<8x128xf32>
    %442 = arith.divf %440, %441 : vector<8x128xf32>
    %443 = math.tanh %437 : vector<8x128xf32>
    %444 = vector.extract_strided_slice %442 {offsets = [0, 0], sizes = [8, 32], strides = [1, 1]} : vector<8x128xf32> to vector<8x32xf32>
    %445 = vector.extract_strided_slice %442 {offsets = [0, 32], sizes = [8, 32], strides = [1, 1]} : vector<8x128xf32> to vector<8x32xf32>
    %446 = vector.extract_strided_slice %443 {offsets = [0, 64], sizes = [8, 32], strides = [1, 1]} : vector<8x128xf32> to vector<8x32xf32>
    %447 = vector.extract_strided_slice %442 {offsets = [0, 96], sizes = [8, 32], strides = [1, 1]} : vector<8x128xf32> to vector<8x32xf32>
    %448 = arith.mulf %445, %401 : vector<8x32xf32>
    %449 = arith.mulf %444, %446 : vector<8x32xf32>
    %450 = arith.addf %448, %449 : vector<8x32xf32>
    %451 = math.tanh %450 : vector<8x32xf32>
    %452 = arith.mulf %447, %451 : vector<8x32xf32>
    %453 = arith.truncf %452 : vector<8x32xf32> to vector<8x32xbf16>
    %cst_123 = arith.constant dense<0.000000e+00> : vector<8x128xf32>
    %454 = tpu.matmul %453, %10, %cst_123 {dimension_numbers = #tpu.dot_dimension_numbers<[1], [0], [0], [1], [0, 0, 1, 1], [], []>} : vector<8x32xbf16>, vector<32x128xbf16>, vector<8x128xf32> -> vector<8x128xf32>
    %455 = arith.addf %454, %13 : vector<8x128xf32>
    %c8_124 = arith.constant 8 : index
    %c0_125 = arith.constant 0 : index
    %c0_126 = arith.constant 0 : index
    %456 = vector.load %arg9[%c8_124, %c0_125, %c0_126] : memref<9x8x128xf32, #tpu.memory_space<vmem>>, vector<1x8x128xf32>
    %457 = vector.shape_cast %456 : vector<1x8x128xf32> to vector<8x128xf32>
    %458 = vector.shape_cast %455 : vector<8x128xf32> to vector<1x8x128xf32>
    tpu.vector_store %arg9[%c8_124, %c0_125, %c0_126], %458 {strides = array<i32>} : memref<9x8x128xf32, #tpu.memory_space<vmem>>, vector<1x8x128xf32>,
    return
  }
}

</mosaic_0001>

<llo_original>
// kernel: our_decoder_forward.1
$region0: #{our_decoder_forward.1}
  #allocation0 [shape = 'u32[]', space=smem, size = 0x4, offset = 0x4, fixed_abs, tag = 'smem constant byte address 0x4 - core index']
  #allocation1 [shape = 'u32[144,128]{1,0:T(1,128)}', space=vmem, size = 0x12000, scoped, tag = 'internal scratch']
  %s0 = inlined_call_operand.vmem [shape: bf16[9,8,32], index: 0, kind: input, shape index: {}]
  %s1 = inlined_call_operand.vmem [shape: bf16[32,128], index: 1, kind: input, shape index: {}]
  %s2 = inlined_call_operand.vmem [shape: bf16[32,128], index: 2, kind: input, shape index: {}]
  %s3 = inlined_call_operand.vmem [shape: f32[1,128], index: 3, kind: input, shape index: {}]
  %s4 = inlined_call_operand.vmem [shape: bf16[32,128], index: 4, kind: input, shape index: {}]
  %s5 = inlined_call_operand.vmem [shape: bf16[32,128], index: 5, kind: input, shape index: {}]
  %s6 = inlined_call_operand.vmem [shape: f32[1,128], index: 6, kind: input, shape index: {}]
  %s7 = inlined_call_operand.vmem [shape: bf16[32,128], index: 7, kind: input, shape index: {}]
  %s8 = inlined_call_operand.vmem [shape: f32[1,128], index: 8, kind: input, shape index: {}]
  %s9 = inlined_call_operand.vmem [shape: f32[9,8,128], index: 9, kind: output, shape index: {}]
  %s10 = sld [smem:[#allocation0]]
  $region46: #{our_decoder_forward.1} parent=0
    _
  %s12 = ssub.s32 1, %s10
  %s13 = scalar_select 0, %s12, %s10
  // Predicated region
  $region2: #{our_decoder_forward.1} parent=0 // pred_check
    _
  $region3: #{our_decoder_forward.1} parent=0 // pred_check_branch
    %15 = sbr.rel (0) target = $region5
  $region4: #{our_decoder_forward.1} parent=0 // pred_region
    _
  $region5: #{our_decoder_forward.1} parent=0 // pred_fallthru
    _
  // Predicated region
  $region6: #{our_decoder_forward.1} parent=0 // pred_check
    _
  $region7: #{our_decoder_forward.1} parent=0 // pred_check_branch
    %17 = sbr.rel (0) target = $region9
  $region8: #{our_decoder_forward.1} parent=0 // pred_region
    _
  $region9: #{our_decoder_forward.1} parent=0 // pred_fallthru
    _
  // Predicated region
  $region10: #{our_decoder_forward.1} parent=0 // pred_check
    _
  $region11: #{our_decoder_forward.1} parent=0 // pred_check_branch
    %19 = sbr.rel (0) target = $region13
  $region12: #{our_decoder_forward.1} parent=0 // pred_region
    _
  $region13: #{our_decoder_forward.1} parent=0 // pred_fallthru
    _
  // Predicated region
  $region14: #{our_decoder_forward.1} parent=0 // pred_check
    _
  $region15: #{our_decoder_forward.1} parent=0 // pred_check_branch
    %21 = sbr.rel (0) target = $region17
  $region16: #{our_decoder_forward.1} parent=0 // pred_region
    _
  $region17: #{our_decoder_forward.1} parent=0 // pred_fallthru
    _
  // Predicated region
  $region18: #{our_decoder_forward.1} parent=0 // pred_check
    _
  $region19: #{our_decoder_forward.1} parent=0 // pred_check_branch
    %23 = sbr.rel (0) target = $region21
  $region20: #{our_decoder_forward.1} parent=0 // pred_region
    _
  $region21: #{our_decoder_forward.1} parent=0 // pred_fallthru
    _
  // Predicated region
  $region22: #{our_decoder_forward.1} parent=0 // pred_check
    _
  $region23: #{our_decoder_forward.1} parent=0 // pred_check_branch
    %25 = sbr.rel (0) target = $region25
  $region24: #{our_decoder_forward.1} parent=0 // pred_region
    _
  $region25: #{our_decoder_forward.1} parent=0 // pred_fallthru
    _
  // Predicated region
  $region26: #{our_decoder_forward.1} parent=0 // pred_check
    _
  $region27: #{our_decoder_forward.1} parent=0 // pred_check_branch
    %27 = sbr.rel (0) target = $region29
  $region28: #{our_decoder_forward.1} parent=0 // pred_region
    _
  $region29: #{our_decoder_forward.1} parent=0 // pred_fallthru
    _
  // Predicated region
  $region30: #{our_decoder_forward.1} parent=0 // pred_check
    _
  $region31: #{our_decoder_forward.1} parent=0 // pred_check_branch
    %29 = sbr.rel (0) target = $region33
  $region32: #{our_decoder_forward.1} parent=0 // pred_region
    _
  $region33: #{our_decoder_forward.1} parent=0 // pred_fallthru
    _
  // Predicated region
  $region34: #{our_decoder_forward.1} parent=0 // pred_check
    _
  $region35: #{our_decoder_forward.1} parent=0 // pred_check_branch
    %31 = sbr.rel (0) target = $region37
  $region36: #{our_decoder_forward.1} parent=0 // pred_region
    _
  $region37: #{our_decoder_forward.1} parent=0 // pred_fallthru
    _
  %v33 = vld [vmem:[%s1] sm:$0xf]
  %v34 = vld [vmem:[%s1 + $0x4] sm:$0xf]
  %v35 = vld [vmem:[%s1 + $0x8] sm:$0xf]
  %v36 = vld [vmem:[%s1 + $0xc] sm:$0xf]
  %v37 = vld [vmem:[%s4] sm:$0xf]
  %v38 = vld [vmem:[%s4 + $0x4] sm:$0xf]
  %v39 = vld [vmem:[%s4 + $0x8] sm:$0xf]
  %v40 = vld [vmem:[%s4 + $0xc] sm:$0xf]
  %v41 = vld [vmem:[%s2] sm:$0xf]
  %v42 = vld [vmem:[%s2 + $0x4] sm:$0xf]
  %v43 = vld [vmem:[%s2 + $0x8] sm:$0xf]
  %v44 = vld [vmem:[%s2 + $0xc] sm:$0xf]
  %v45 = vld [vmem:[%s5] sm:$0xf]
  %v46 = vld [vmem:[%s5 + $0x4] sm:$0xf]
  %v47 = vld [vmem:[%s5 + $0x8] sm:$0xf]
  %v48 = vld [vmem:[%s5 + $0xc] sm:$0xf]
  %v49 = vld [vmem:[%s3] sm:$0x1]
  %v51 = vlaneseq
  %v52 = vshrl.u32 %v51, 7
  %v53 = vsub.s32 0, %v52
  %v54 = vrot.slane %v49, %v53
  %v56 = vld [vmem:[%s6] sm:$0x1]
  %v58 = vlaneseq
  %v59 = vshrl.u32 %v58, 7
  %v60 = vsub.s32 0, %v59
  %v61 = vrot.slane %v56, %v60
  %v63 = vld [vmem:[%s7] sm:$0xf]
  %v64 = vld [vmem:[%s7 + $0x4] sm:$0xf]
  %v65 = vld [vmem:[%s7 + $0x8] sm:$0xf]
  %v66 = vld [vmem:[%s7 + $0xc] sm:$0xf]
  %v67 = vld [vmem:[%s8] sm:$0x1]
  %v69 = vlaneseq
  %v70 = vshrl.u32 %v69, 7
  %v71 = vsub.s32 0, %v70
  %v72 = vrot.slane %v67, %v71
  %v74 = vld [vmem:[%s0] sm:$0xf]
  %v79 = vunpack.c.l.b16 %v41
  %v80 = vunpack.c.l.b16 %v42
  %v81 = vunpack.c.l.b16 %v43
  %v82 = vunpack.c.l.b16 %v44
  %v83 = vpack.c.b16 %v80, %v79
  %v84 = vpack.c.b16 %v82, %v81
  %vm87 = vcmask 261120
  %v89 = vsel %vm87, 0, 0
  %91 = vmatprep.subr.bf16.mxu0 0
  %92 = vmatpush1.bf16.msra.mxu0 %v83
  %93 = vmatprep.subr.bf16.mxu0 0
  %94 = vmatpush1.bf16.msra.mxu0 %v84
  %95 = vmatprep.subr.bf16.mxu0 0
  %96 = vmatpush1.bf16.msra.mxu0 0
  %97 = vmatprep.subr.bf16.mxu0 0
  %98 = vmatpush1.bf16.msra.mxu0 0
  %99 = vmatprep.subr.bf16.mxu0 0
  %100 = vmatpush1.bf16.msra.mxu0 0
  %101 = vmatprep.subr.bf16.mxu0 0
  %102 = vmatpush1.bf16.msra.mxu0 0
  %103 = vmatprep.subr.bf16.mxu0 0
  %104 = vmatpush1.bf16.msra.mxu0 0
  %105 = vmatprep.subr.bf16.mxu0 0
  %106 = vmatpush1.bf16.msra.mxu0 0
  %107 = vmatprep.subr.bf16.mxu0 0
  %108 = vmatpush1.bf16.msra.mxu0 0
  %109 = vmatprep.subr.bf16.mxu0 0
  %110 = vmatpush1.bf16.msra.mxu0 0
  %111 = vmatprep.subr.bf16.mxu0 0
  %112 = vmatpush1.bf16.msra.mxu0 0
  %113 = vmatprep.subr.bf16.mxu0 0
  %114 = vmatpush1.bf16.msra.mxu0 0
  %115 = vmatprep.subr.bf16.mxu0 0
  %116 = vmatpush1.bf16.msra.mxu0 0
  %117 = vmatprep.subr.bf16.mxu0 0
  %118 = vmatpush1.bf16.msra.mxu0 0
  %119 = vmatprep.subr.bf16.mxu0 0
  %120 = vmatpush1.bf16.msra.mxu0 0
  %121 = vmatprep.subr.bf16.mxu0 0
  %122 = vmatpush1.bf16.msra.mxu0 0
  %123 = vmatprep.mubr.bf16.mxu0 0
  %124 = vmatmul.mubr.bf16.gmra.mrb[0].mxu0 %v89
  %v125 = vpop.f32.mrb[0].mxu0
  %v126 = vadd.f32 0.0, %v125
  %v127 = vpop.f32.mrb[0].mxu0
  %v128 = vpop.f32.mrb[0].mxu0
  %v129 = vpop.f32.mrb[0].mxu0
  %130 = vdwg.mxu0
  %v135 = vunpack.c.l.b16 %v33
  %v136 = vunpack.c.l.b16 %v34
  %v137 = vunpack.c.l.b16 %v35
  %v138 = vunpack.c.l.b16 %v36
  %v139 = vpack.c.b16 %v136, %v135
  %v140 = vpack.c.b16 %v138, %v137
  %v144 = vsel %vm87, %v74, 0
  %146 = vmatprep.subr.bf16.mxu0 0
  %147 = vmatpush1.bf16.msra.mxu0 %v139
  %148 = vmatprep.subr.bf16.mxu0 0
  %149 = vmatpush1.bf16.msra.mxu0 %v140
  %150 = vmatprep.subr.bf16.mxu0 0
  %151 = vmatpush1.bf16.msra.mxu0 0
  %152 = vmatprep.subr.bf16.mxu0 0
  %153 = vmatpush1.bf16.msra.mxu0 0
  %154 = vmatprep.subr.bf16.mxu0 0
  %155 = vmatpush1.bf16.msra.mxu0 0
  %156 = vmatprep.subr.bf16.mxu0 0
  %157 = vmatpush1.bf16.msra.mxu0 0
  %158 = vmatprep.subr.bf16.mxu0 0
  %159 = vmatpush1.bf16.msra.mxu0 0
  %160 = vmatprep.subr.bf16.mxu0 0
  %161 = vmatpush1.bf16.msra.mxu0 0
  %162 = vmatprep.subr.bf16.mxu0 0
  %163 = vmatpush1.bf16.msra.mxu0 0
  %164 = vmatprep.subr.bf16.mxu0 0
  %165 = vmatpush1.bf16.msra.mxu0 0
  %166 = vmatprep.subr.bf16.mxu0 0
  %167 = vmatpush1.bf16.msra.mxu0 0
  %168 = vmatprep.subr.bf16.mxu0 0
  %169 = vmatpush1.bf16.msra.mxu0 0
  %170 = vmatprep.subr.bf16.mxu0 0
  %171 = vmatpush1.bf16.msra.mxu0 0
  %172 = vmatprep.subr.bf16.mxu0 0
  %173 = vmatpush1.bf16.msra.mxu0 0
  %174 = vmatprep.subr.bf16.mxu0 0
  %175 = vmatpush1.bf16.msra.mxu0 0
  %176 = vmatprep.subr.bf16.mxu0 0
  %177 = vmatpush1.bf16.msra.mxu0 0
  %178 = vmatprep.mubr.bf16.mxu0 0
  %179 = vmatmul.mubr.bf16.gmra.mrb[0].mxu0 %v144
  %v180 = vpop.f32.mrb[0].mxu0
  %v181 = vadd.f32 %v126, %v180
  %v182 = vpop.f32.mrb[0].mxu0
  %v183 = vpop.f32.mrb[0].mxu0
  %v184 = vpop.f32.mrb[0].mxu0
  %185 = vdwg.mxu0
  %v186 = vadd.f32 %v181, %v54
  %v187 = vxor.u32 %v186, 2147483648
  %v188 = vmul.f32 %v187, 1.442695
  %v189 = vpow.pop %v188
  %v190 = vadd.f32 %v189, 1.0
  %v191 = vrcp.pop %v190
  %v192 = vmul.f32 1.0, %v191
  %v193 = vtanh.pop %v186
  %v194 = vmul.f32 %v192, 0.0
  %196 = vrot.lane.b32.xlu0 %v193, 64
  %v197 = vpop.permute.xlu0 %196
  %v199 = vmul.f32 %v192, %v197
  %201 = vrot.lane.b32.xlu0 %v199, 32
  %v202 = vpop.permute.xlu0 %201
  %v204 = vadd.f32 %v194, %v202
  %v205 = vtanh.pop %v204
  %207 = vrot.lane.b32.xlu0 %v205, 64
  %v208 = vpop.permute.xlu0 %207
  %v210 = vmul.f32 %v192, %v208
  %v211 = vpack.c.bf16 %v210, %v210
  %v216 = vunpack.c.l.b16 %v45
  %v217 = vunpack.c.l.b16 %v46
  %v218 = vunpack.c.l.b16 %v47
  %v219 = vunpack.c.l.b16 %v48
  %v220 = vpack.c.b16 %v217, %v216
  %v221 = vpack.c.b16 %v219, %v218
  %224 = vmatprep.subr.bf16.mxu0 0
  %225 = vmatpush1.bf16.msra.mxu0 %v220
  %226 = vmatprep.subr.bf16.mxu0 0
  %227 = vmatpush1.bf16.msra.mxu0 %v221
  %228 = vmatprep.subr.bf16.mxu0 0
  %229 = vmatpush1.bf16.msra.mxu0 0
  %230 = vmatprep.subr.bf16.mxu0 0
  %231 = vmatpush1.bf16.msra.mxu0 0
  %232 = vmatprep.subr.bf16.mxu0 0
  %233 = vmatpush1.bf16.msra.mxu0 0
  %234 = vmatprep.subr.bf16.mxu0 0
  %235 = vmatpush1.bf16.msra.mxu0 0
  %236 = vmatprep.subr.bf16.mxu0 0
  %237 = vmatpush1.bf16.msra.mxu0 0
  %238 = vmatprep.subr.bf16.mxu0 0
  %239 = vmatpush1.bf16.msra.mxu0 0
  %240 = vmatprep.subr.bf16.mxu0 0
  %241 = vmatpush1.bf16.msra.mxu0 0
  %242 = vmatprep.subr.bf16.mxu0 0
  %243 = vmatpush1.bf16.msra.mxu0 0
  %244 = vmatprep.subr.bf16.mxu0 0
  %245 = vmatpush1.bf16.msra.mxu0 0
  %246 = vmatprep.subr.bf16.mxu0 0
  %247 = vmatpush1.bf16.msra.mxu0 0
  %248 = vmatprep.subr.bf16.mxu0 0
  %249 = vmatpush1.bf16.msra.mxu0 0
  %250 = vmatprep.subr.bf16.mxu0 0
  %251 = vmatpush1.bf16.msra.mxu0 0
  %252 = vmatprep.subr.bf16.mxu0 0
  %253 = vmatpush1.bf16.msra.mxu0 0
  %254 = vmatprep.subr.bf16.mxu0 0
  %255 = vmatpush1.bf16.msra.mxu0 0
  %256 = vmatprep.mubr.bf16.mxu0 0
  %257 = vmatmul.mubr.bf16.gmra.mrb[0].mxu0 %v89
  %v258 = vpop.f32.mrb[0].mxu0
  %v259 = vadd.f32 0.0, %v258
  %v260 = vpop.f32.mrb[0].mxu0
  %v261 = vpop.f32.mrb[0].mxu0
  %v262 = vpop.f32.mrb[0].mxu0
  %263 = vdwg.mxu0
  %265 = vrot.lane.b32.xlu0 %v211, 32
  %v266 = vpop.permute.xlu0 %265
  %v271 = vunpack.c.l.b16 %v37
  %v272 = vunpack.c.l.b16 %v38
  %v273 = vunpack.c.l.b16 %v39
  %v274 = vunpack.c.l.b16 %v40
  %v275 = vpack.c.b16 %v272, %v271
  %v276 = vpack.c.b16 %v274, %v273
  %v280 = vsel %vm87, %v266, 0
  %282 = vmatprep.subr.bf16.mxu0 0
  %283 = vmatpush1.bf16.msra.mxu0 %v275
  %284 = vmatprep.subr.bf16.mxu0 0
  %285 = vmatpush1.bf16.msra.mxu0 %v276
  %286 = vmatprep.subr.bf16.mxu0 0
  %287 = vmatpush1.bf16.msra.mxu0 0
  %288 = vmatprep.subr.bf16.mxu0 0
  %289 = vmatpush1.bf16.msra.mxu0 0
  %290 = vmatprep.subr.bf16.mxu0 0
  %291 = vmatpush1.bf16.msra.mxu0 0
  %292 = vmatprep.subr.bf16.mxu0 0
  %293 = vmatpush1.bf16.msra.mxu0 0
  %294 = vmatprep.subr.bf16.mxu0 0
  %295 = vmatpush1.bf16.msra.mxu0 0
  %296 = vmatprep.subr.bf16.mxu0 0
  %297 = vmatpush1.bf16.msra.mxu0 0
  %298 = vmatprep.subr.bf16.mxu0 0
  %299 = vmatpush1.bf16.msra.mxu0 0
  %300 = vmatprep.subr.bf16.mxu0 0
  %301 = vmatpush1.bf16.msra.mxu0 0
  %302 = vmatprep.subr.bf16.mxu0 0
  %303 = vmatpush1.bf16.msra.mxu0 0
  %304 = vmatprep.subr.bf16.mxu0 0
  %305 = vmatpush1.bf16.msra.mxu0 0
  %306 = vmatprep.subr.bf16.mxu0 0
  %307 = vmatpush1.bf16.msra.mxu0 0
  %308 = vmatprep.subr.bf16.mxu0 0
  %309 = vmatpush1.bf16.msra.mxu0 0
  %310 = vmatprep.subr.bf16.mxu0 0
  %311 = vmatpush1.bf16.msra.mxu0 0
  %312 = vmatprep.subr.bf16.mxu0 0
  %313 = vmatpush1.bf16.msra.mxu0 0
  %314 = vmatprep.mubr.bf16.mxu0 0
  %315 = vmatmul.mubr.bf16.gmra.mrb[0].mxu0 %v280
  %v316 = vpop.f32.mrb[0].mxu0
  %v317 = vadd.f32 %v259, %v316
  %v318 = vpop.f32.mrb[0].mxu0
  %v319 = vpop.f32.mrb[0].mxu0
  %v320 = vpop.f32.mrb[0].mxu0
  %321 = vdwg.mxu0
  %v322 = vadd.f32 %v317, %v61
  %v323 = vxor.u32 %v322, 2147483648
  %v324 = vmul.f32 %v323, 1.442695
  %v325 = vpow.pop %v324
  %v326 = vadd.f32 %v325, 1.0
  %v327 = vrcp.pop %v326
  %v328 = vmul.f32 1.0, %v327
  %v329 = vtanh.pop %v322
  %v330 = vmul.f32 %v328, 0.0
  %332 = vrot.lane.b32.xlu0 %v329, 64
  %v333 = vpop.permute.xlu0 %332
  %v335 = vmul.f32 %v328, %v333
  %337 = vrot.lane.b32.xlu0 %v335, 32
  %v338 = vpop.permute.xlu0 %337
  %v340 = vadd.f32 %v330, %v338
  %v341 = vtanh.pop %v340
  %343 = vrot.lane.b32.xlu0 %v341, 64
  %v344 = vpop.permute.xlu0 %343
  %v346 = vmul.f32 %v328, %v344
  %v347 = vpack.c.bf16 %v346, %v346
  %349 = vrot.lane.b32.xlu0 %v347, 32
  %v350 = vpop.permute.xlu0 %349
  %v355 = vunpack.c.l.b16 %v63
  %v356 = vunpack.c.l.b16 %v64
  %v357 = vunpack.c.l.b16 %v65
  %v358 = vunpack.c.l.b16 %v66
  %v359 = vpack.c.b16 %v356, %v355
  %v360 = vpack.c.b16 %v358, %v357
  %v364 = vsel %vm87, %v350, 0
  %366 = vmatprep.subr.bf16.mxu0 0
  %367 = vmatpush1.bf16.msra.mxu0 %v359
  %368 = vmatprep.subr.bf16.mxu0 0
  %369 = vmatpush1.bf16.msra.mxu0 %v360
  %370 = vmatprep.subr.bf16.mxu0 0
  %371 = vmatpush1.bf16.msra.mxu0 0
  %372 = vmatprep.subr.bf16.mxu0 0
  %373 = vmatpush1.bf16.msra.mxu0 0
  %374 = vmatprep.subr.bf16.mxu0 0
  %375 = vmatpush1.bf16.msra.mxu0 0
  %376 = vmatprep.subr.bf16.mxu0 0
  %377 = vmatpush1.bf16.msra.mxu0 0
  %378 = vmatprep.subr.bf16.mxu0 0
  %379 = vmatpush1.bf16.msra.mxu0 0
  %380 = vmatprep.subr.bf16.mxu0 0
  %381 = vmatpush1.bf16.msra.mxu0 0
  %382 = vmatprep.subr.bf16.mxu0 0
  %383 = vmatpush1.bf16.msra.mxu0 0
  %384 = vmatprep.subr.bf16.mxu0 0
  %385 = vmatpush1.bf16.msra.mxu0 0
  %386 = vmatprep.subr.bf16.mxu0 0
  %387 = vmatpush1.bf16.msra.mxu0 0
  %388 = vmatprep.subr.bf16.mxu0 0
  %389 = vmatpush1.bf16.msra.mxu0 0
  %390 = vmatprep.subr.bf16.mxu0 0
  %391 = vmatpush1.bf16.msra.mxu0 0
  %392 = vmatprep.subr.bf16.mxu0 0
  %393 = vmatpush1.bf16.msra.mxu0 0
  %394 = vmatprep.subr.bf16.mxu0 0
  %395 = vmatpush1.bf16.msra.mxu0 0
  %396 = vmatprep.subr.bf16.mxu0 0
  %397 = vmatpush1.bf16.msra.mxu0 0
  %398 = vmatprep.mubr.bf16.mxu0 0
  %399 = vmatmul.mubr.bf16.gmra.mrb[0].mxu0 %v364
  %v400 = vpop.f32.mrb[0].mxu0
  %v401 = vadd.f32 %v72, %v400
  %v402 = vpop.f32.mrb[0].mxu0
  %v403 = vpop.f32.mrb[0].mxu0
  %v404 = vpop.f32.mrb[0].mxu0
  %405 = vdwg.mxu0
  %406 = vst [vmem:[%s9] sm:$0xff] %v401
  %s407 = scalar_lea.vmem %s0, 4
  %v408 = vld [vmem:[%s407] sm:$0xf]
  %409 = vmatprep.subr.bf16.mxu0 0
  %410 = vmatpush1.bf16.msra.mxu0 %v83
  %411 = vmatprep.subr.bf16.mxu0 0
  %412 = vmatpush1.bf16.msra.mxu0 %v84
  %413 = vmatprep.subr.bf16.mxu0 0
  %414 = vmatpush1.bf16.msra.mxu0 0
  %415 = vmatprep.subr.bf16.mxu0 0
  %416 = vmatpush1.bf16.msra.mxu0 0
  %417 = vmatprep.subr.bf16.mxu0 0
  %418 = vmatpush1.bf16.msra.mxu0 0
  %419 = vmatprep.subr.bf16.mxu0 0
  %420 = vmatpush1.bf16.msra.mxu0 0
  %421 = vmatprep.subr.bf16.mxu0 0
  %422 = vmatpush1.bf16.msra.mxu0 0
  %423 = vmatprep.subr.bf16.mxu0 0
  %424 = vmatpush1.bf16.msra.mxu0 0
  %425 = vmatprep.subr.bf16.mxu0 0
  %426 = vmatpush1.bf16.msra.mxu0 0
  %427 = vmatprep.subr.bf16.mxu0 0
  %428 = vmatpush1.bf16.msra.mxu0 0
  %429 = vmatprep.subr.bf16.mxu0 0
  %430 = vmatpush1.bf16.msra.mxu0 0
  %431 = vmatprep.subr.bf16.mxu0 0
  %432 = vmatpush1.bf16.msra.mxu0 0
  %433 = vmatprep.subr.bf16.mxu0 0
  %434 = vmatpush1.bf16.msra.mxu0 0
  %435 = vmatprep.subr.bf16.mxu0 0
  %436 = vmatpush1.bf16.msra.mxu0 0
  %437 = vmatprep.subr.bf16.mxu0 0
  %438 = vmatpush1.bf16.msra.mxu0 0
  %439 = vmatprep.subr.bf16.mxu0 0
  %440 = vmatpush1.bf16.msra.mxu0 0
  %441 = vmatprep.mubr.bf16.mxu0 0
  %442 = vmatmul.mubr.bf16.gmra.mrb[0].mxu0 %v280
  %v443 = vpop.f32.mrb[0].mxu0
  %v444 = vadd.f32 0.0, %v443
  %v445 = vpop.f32.mrb[0].mxu0
  %v446 = vpop.f32.mrb[0].mxu0
  %v447 = vpop.f32.mrb[0].mxu0
  %448 = vdwg.mxu0
  %v450 = vsel %vm87, %v408, 0
  %452 = vmatprep.subr.bf16.mxu0 0
  %453 = vmatpush1.bf16.msra.mxu0 %v139
  %454 = vmatprep.subr.bf16.mxu0 0
  %455 = vmatpush1.bf16.msra.mxu0 %v140
  %456 = vmatprep.subr.bf16.mxu0 0
  %457 = vmatpush1.bf16.msra.mxu0 0
  %458 = vmatprep.subr.bf16.mxu0 0
  %459 = vmatpush1.bf16.msra.mxu0 0
  %460 = vmatprep.subr.bf16.mxu0 0
  %461 = vmatpush1.bf16.msra.mxu0 0
  %462 = vmatprep.subr.bf16.mxu0 0
  %463 = vmatpush1.bf16.msra.mxu0 0
  %464 = vmatprep.subr.bf16.mxu0 0
  %465 = vmatpush1.bf16.msra.mxu0 0
  %466 = vmatprep.subr.bf16.mxu0 0
  %467 = vmatpush1.bf16.msra.mxu0 0
  %468 = vmatprep.subr.bf16.mxu0 0
  %469 = vmatpush1.bf16.msra.mxu0 0
  %470 = vmatprep.subr.bf16.mxu0 0
  %471 = vmatpush1.bf16.msra.mxu0 0
  %472 = vmatprep.subr.bf16.mxu0 0
  %473 = vmatpush1.bf16.msra.mxu0 0
  %474 = vmatprep.subr.bf16.mxu0 0
  %475 = vmatpush1.bf16.msra.mxu0 0
  %476 = vmatprep.subr.bf16.mxu0 0
  %477 = vmatpush1.bf16.msra.mxu0 0
  %478 = vmatprep.subr.bf16.mxu0 0
  %479 = vmatpush1.bf16.msra.mxu0 0
  %480 = vmatprep.subr.bf16.mxu0 0
  %481 = vmatpush1.bf16.msra.mxu0 0
  %482 = vmatprep.subr.bf16.mxu0 0
  %483 = vmatpush1.bf16.msra.mxu0 0
  %484 = vmatprep.mubr.bf16.mxu0 0
  %485 = vmatmul.mubr.bf16.gmra.mrb[0].mxu0 %v450
  %v486 = vpop.f32.mrb[0].mxu0
  %v487 = vadd.f32 %v444, %v486
  %v488 = vpop.f32.mrb[0].mxu0
  %v489 = vpop.f32.mrb[0].mxu0
  %v490 = vpop.f32.mrb[0].mxu0
  %491 = vdwg.mxu0
  %v492 = vadd.f32 %v487, %v54
  %v493 = vxor.u32 %v492, 2147483648
  %v494 = vmul.f32 %v493, 1.442695
  %v495 = vpow.pop %v494
  %v496 = vadd.f32 %v495, 1.0
  %v497 = vrcp.pop %v496
  %v498 = vmul.f32 1.0, %v497
  %v499 = vtanh.pop %v492
  %v500 = vmul.f32 %v498, %v204
  %502 = vrot.lane.b32.xlu0 %v499, 64
  %v503 = vpop.permute.xlu0 %502
  %v505 = vmul.f32 %v498, %v503
  %507 = vrot.lane.b32.xlu0 %v505, 32
  %v508 = vpop.permute.xlu0 %507
  %v510 = vadd.f32 %v500, %v508
  %v511 = vtanh.pop %v510
  %513 = vrot.lane.b32.xlu0 %v511, 64
  %v514 = vpop.permute.xlu0 %513
  %v516 = vmul.f32 %v498, %v514
  %v517 = vpack.c.bf16 %v516, %v516
  %518 = vmatprep.subr.bf16.mxu0 0
  %519 = vmatpush1.bf16.msra.mxu0 %v220
  %520 = vmatprep.subr.bf16.mxu0 0
  %521 = vmatpush1.bf16.msra.mxu0 %v221
  %522 = vmatprep.subr.bf16.mxu0 0
  %523 = vmatpush1.bf16.msra.mxu0 0
  %524 = vmatprep.subr.bf16.mxu0 0
  %525 = vmatpush1.bf16.msra.mxu0 0
  %526 = vmatprep.subr.bf16.mxu0 0
  %527 = vmatpush1.bf16.msra.mxu0 0
  %528 = vmatprep.subr.bf16.mxu0 0
  %529 = vmatpush1.bf16.msra.mxu0 0
  %530 = vmatprep.subr.bf16.mxu0 0
  %531 = vmatpush1.bf16.msra.mxu0 0
  %532 = vmatprep.subr.bf16.mxu0 0
  %533 = vmatpush1.bf16.msra.mxu0 0
  %534 = vmatprep.subr.bf16.mxu0 0
  %535 = vmatpush1.bf16.msra.mxu0 0
  %536 = vmatprep.subr.bf16.mxu0 0
  %537 = vmatpush1.bf16.msra.mxu0 0
  %538 = vmatprep.subr.bf16.mxu0 0
  %539 = vmatpush1.bf16.msra.mxu0 0
  %540 = vmatprep.subr.bf16.mxu0 0
  %541 = vmatpush1.bf16.msra.mxu0 0
  %542 = vmatprep.subr.bf16.mxu0 0
  %543 = vmatpush1.bf16.msra.mxu0 0
  %544 = vmatprep.subr.bf16.mxu0 0
  %545 = vmatpush1.bf16.msra.mxu0 0
  %546 = vmatprep.subr.bf16.mxu0 0
  %547 = vmatpush1.bf16.msra.mxu0 0
  %548 = vmatprep.subr.bf16.mxu0 0
  %549 = vmatpush1.bf16.msra.mxu0 0
  %550 = vmatprep.mubr.bf16.mxu0 0
  %551 = vmatmul.mubr.bf16.gmra.mrb[0].mxu0 %v364
  %v552 = vpop.f32.mrb[0].mxu0
  %v553 = vadd.f32 0.0, %v552
  %v554 = vpop.f32.mrb[0].mxu0
  %v555 = vpop.f32.mrb[0].mxu0
  %v556 = vpop.f32.mrb[0].mxu0
  %557 = vdwg.mxu0
  %559 = vrot.lane.b32.xlu0 %v517, 32
  %v560 = vpop.permute.xlu0 %559
  %v562 = vsel %vm87, %v560, 0
  %564 = vmatprep.subr.bf16.mxu0 0
  %565 = vmatpush1.bf16.msra.mxu0 %v275
  %566 = vmatprep.subr.bf16.mxu0 0
  %567 = vmatpush1.bf16.msra.mxu0 %v276
  %568 = vmatprep.subr.bf16.mxu0 0
  %569 = vmatpush1.bf16.msra.mxu0 0
  %570 = vmatprep.subr.bf16.mxu0 0
  %571 = vmatpush1.bf16.msra.mxu0 0
  %572 = vmatprep.subr.bf16.mxu0 0
  %573 = vmatpush1.bf16.msra.mxu0 0
  %574 = vmatprep.subr.bf16.mxu0 0
  %575 = vmatpush1.bf16.msra.mxu0 0
  %576 = vmatprep.subr.bf16.mxu0 0
  %577 = vmatpush1.bf16.msra.mxu0 0
  %578 = vmatprep.subr.bf16.mxu0 0
  %579 = vmatpush1.bf16.msra.mxu0 0
  %580 = vmatprep.subr.bf16.mxu0 0
  %581 = vmatpush1.bf16.msra.mxu0 0
  %582 = vmatprep.subr.bf16.mxu0 0
  %583 = vmatpush1.bf16.msra.mxu0 0
  %584 = vmatprep.subr.bf16.mxu0 0
  %585 = vmatpush1.bf16.msra.mxu0 0
  %586 = vmatprep.subr.bf16.mxu0 0
  %587 = vmatpush1.bf16.msra.mxu0 0
  %588 = vmatprep.subr.bf16.mxu0 0
  %589 = vmatpush1.bf16.msra.mxu0 0
  %590 = vmatprep.subr.bf16.mxu0 0
  %591 = vmatpush1.bf16.msra.mxu0 0
  %592 = vmatprep.subr.bf16.mxu0 0
  %593 = vmatpush1.bf16.msra.mxu0 0
  %594 = vmatprep.subr.bf16.mxu0 0
  %595 = vmatpush1.bf16.msra.mxu0 0
  %596 = vmatprep.mubr.bf16.mxu0 0
  %597 = vmatmul.mubr.bf16.gmra.mrb[0].mxu0 %v562
  %v598 = vpop.f32.mrb[0].mxu0
  %v599 = vadd.f32 %v553, %v598
  %v600 = vpop.f32.mrb[0].mxu0
  %v601 = vpop.f32.mrb[0].mxu0
  %v602 = vpop.f32.mrb[0].mxu0
  %603 = vdwg.mxu0
  %v604 = vadd.f32 %v599, %v61
  %v605 = vxor.u32 %v604, 2147483648
  %v606 = vmul.f32 %v605, 1.442695
  %v607 = vpow.pop %v606
  %v608 = vadd.f32 %v607, 1.0
  %v609 = vrcp.pop %v608
  %v610 = vmul.f32 1.0, %v609
  %v611 = vtanh.pop %v604
  %v612 = vmul.f32 %v610, %v340
  %614 = vrot.lane.b32.xlu0 %v611, 64
  %v615 = vpop.permute.xlu0 %614
  %v617 = vmul.f32 %v610, %v615
  %619 = vrot.lane.b32.xlu0 %v617, 32
  %v620 = vpop.permute.xlu0 %619
  %v622 = vadd.f32 %v612, %v620
  %v623 = vtanh.pop %v622
  %625 = vrot.lane.b32.xlu0 %v623, 64
  %v626 = vpop.permute.xlu0 %625
  %v628 = vmul.f32 %v610, %v626
  %v629 = vpack.c.bf16 %v628, %v628
  %631 = vrot.lane.b32.xlu0 %v629, 32
  %v632 = vpop.permute.xlu0 %631
  %v634 = vsel %vm87, %v632, 0
  %636 = vmatprep.subr.bf16.mxu0 0
  %637 = vmatpush1.bf16.msra.mxu0 %v359
  %638 = vmatprep.subr.bf16.mxu0 0
  %639 = vmatpush1.bf16.msra.mxu0 %v360
  %640 = vmatprep.subr.bf16.mxu0 0
  %641 = vmatpush1.bf16.msra.mxu0 0
  %642 = vmatprep.subr.bf16.mxu0 0
  %643 = vmatpush1.bf16.msra.mxu0 0
  %644 = vmatprep.subr.bf16.mxu0 0
  %645 = vmatpush1.bf16.msra.mxu0 0
  %646 = vmatprep.subr.bf16.mxu0 0
  %647 = vmatpush1.bf16.msra.mxu0 0
  %648 = vmatprep.subr.bf16.mxu0 0
  %649 = vmatpush1.bf16.msra.mxu0 0
  %650 = vmatprep.subr.bf16.mxu0 0
  %651 = vmatpush1.bf16.msra.mxu0 0
  %652 = vmatprep.subr.bf16.mxu0 0
  %653 = vmatpush1.bf16.msra.mxu0 0
  %654 = vmatprep.subr.bf16.mxu0 0
  %655 = vmatpush1.bf16.msra.mxu0 0
  %656 = vmatprep.subr.bf16.mxu0 0
  %657 = vmatpush1.bf16.msra.mxu0 0
  %658 = vmatprep.subr.bf16.mxu0 0
  %659 = vmatpush1.bf16.msra.mxu0 0
  %660 = vmatprep.subr.bf16.mxu0 0
  %661 = vmatpush1.bf16.msra.mxu0 0
  %662 = vmatprep.subr.bf16.mxu0 0
  %663 = vmatpush1.bf16.msra.mxu0 0
  %664 = vmatprep.subr.bf16.mxu0 0
  %665 = vmatpush1.bf16.msra.mxu0 0
  %666 = vmatprep.subr.bf16.mxu0 0
  %667 = vmatpush1.bf16.msra.mxu0 0
  %668 = vmatprep.mubr.bf16.mxu0 0
  %669 = vmatmul.mubr.bf16.gmra.mrb[0].mxu0 %v634
  %v670 = vpop.f32.mrb[0].mxu0
  %v671 = vadd.f32 %v72, %v670
  %v672 = vpop.f32.mrb[0].mxu0
  %v673 = vpop.f32.mrb[0].mxu0
  %v674 = vpop.f32.mrb[0].mxu0
  %675 = vdwg.mxu0
  %s676 = scalar_lea.vmem %s9, 8
  %677 = vst [vmem:[%s676] sm:$0xff] %v671
  %s678 = scalar_lea.vmem %s0, 8
  %v679 = vld [vmem:[%s678] sm:$0xf]
  %680 = vmatprep.subr.bf16.mxu0 0
  %681 = vmatpush1.bf16.msra.mxu0 %v83
  %682 = vmatprep.subr.bf16.mxu0 0
  %683 = vmatpush1.bf16.msra.mxu0 %v84
  %684 = vmatprep.subr.bf16.mxu0 0
  %685 = vmatpush1.bf16.msra.mxu0 0
  %686 = vmatprep.subr.bf16.mxu0 0
  %687 = vmatpush1.bf16.msra.mxu0 0
  %688 = vmatprep.subr.bf16.mxu0 0
  %689 = vmatpush1.bf16.msra.mxu0 0
  %690 = vmatprep.subr.bf16.mxu0 0
  %691 = vmatpush1.bf16.msra.mxu0 0
  %692 = vmatprep.subr.bf16.mxu0 0
  %693 = vmatpush1.bf16.msra.mxu0 0
  %694 = vmatprep.subr.bf16.mxu0 0
  %695 = vmatpush1.bf16.msra.mxu0 0
  %696 = vmatprep.subr.bf16.mxu0 0
  %697 = vmatpush1.bf16.msra.mxu0 0
  %698 = vmatprep.subr.bf16.mxu0 0
  %699 = vmatpush1.bf16.msra.mxu0 0
  %700 = vmatprep.subr.bf16.mxu0 0
  %701 = vmatpush1.bf16.msra.mxu0 0
  %702 = vmatprep.subr.bf16.mxu0 0
  %703 = vmatpush1.bf16.msra.mxu0 0
  %704 = vmatprep.subr.bf16.mxu0 0
  %705 = vmatpush1.bf16.msra.mxu0 0
  %706 = vmatprep.subr.bf16.mxu0 0
  %707 = vmatpush1.bf16.msra.mxu0 0
  %708 = vmatprep.subr.bf16.mxu0 0
  %709 = vmatpush1.bf16.msra.mxu0 0
  %710 = vmatprep.subr.bf16.mxu0 0
  %711 = vmatpush1.bf16.msra.mxu0 0
  %712 = vmatprep.mubr.bf16.mxu0 0
  %713 = vmatmul.mubr.bf16.gmra.mrb[0].mxu0 %v562
  %v714 = vpop.f32.mrb[0].mxu0
  %v715 = vadd.f32 0.0, %v714
  %v716 = vpop.f32.mrb[0].mxu0
  %v717 = vpop.f32.mrb[0].mxu0
  %v718 = vpop.f32.mrb[0].mxu0
  %719 = vdwg.mxu0
  %v721 = vsel %vm87, %v679, 0
  %723 = vmatprep.subr.bf16.mxu0 0
  %724 = vmatpush1.bf16.msra.mxu0 %v139
  %725 = vmatprep.subr.bf16.mxu0 0
  %726 = vmatpush1.bf16.msra.mxu0 %v140
  %727 = vmatprep.subr.bf16.mxu0 0
  %728 = vmatpush1.bf16.msra.mxu0 0
  %729 = vmatprep.subr.bf16.mxu0 0
  %730 = vmatpush1.bf16.msra.mxu0 0
  %731 = vmatprep.subr.bf16.mxu0 0
  %732 = vmatpush1.bf16.msra.mxu0 0
  %733 = vmatprep.subr.bf16.mxu0 0
  %734 = vmatpush1.bf16.msra.mxu0 0
  %735 = vmatprep.subr.bf16.mxu0 0
  %736 = vmatpush1.bf16.msra.mxu0 0
  %737 = vmatprep.subr.bf16.mxu0 0
  %738 = vmatpush1.bf16.msra.mxu0 0
  %739 = vmatprep.subr.bf16.mxu0 0
  %740 = vmatpush1.bf16.msra.mxu0 0
  %741 = vmatprep.subr.bf16.mxu0 0
  %742 = vmatpush1.bf16.msra.mxu0 0
  %743 = vmatprep.subr.bf16.mxu0 0
  %744 = vmatpush1.bf16.msra.mxu0 0
  %745 = vmatprep.subr.bf16.mxu0 0
  %746 = vmatpush1.bf16.msra.mxu0 0
  %747 = vmatprep.subr.bf16.mxu0 0
  %748 = vmatpush1.bf16.msra.mxu0 0
  %749 = vmatprep.subr.bf16.mxu0 0
  %750 = vmatpush1.bf16.msra.mxu0 0
  %751 = vmatprep.subr.bf16.mxu0 0
  %752 = vmatpush1.bf16.msra.mxu0 0
  %753 = vmatprep.subr.bf16.mxu0 0
  %754 = vmatpush1.bf16.msra.mxu0 0
  %755 = vmatprep.mubr.bf16.mxu0 0
  %756 = vmatmul.mubr.bf16.gmra.mrb[0].mxu0 %v721
  %v757 = vpop.f32.mrb[0].mxu0
  %v758 = vadd.f32 %v715, %v757
  %v759 = vpop.f32.mrb[0].mxu0
  %v760 = vpop.f32.mrb[0].mxu0
  %v761 = vpop.f32.mrb[0].mxu0
  %762 = vdwg.mxu0
  %v763 = vadd.f32 %v758, %v54
  %v764 = vxor.u32 %v763, 2147483648
  %v765 = vmul.f32 %v764, 1.442695
  %v766 = vpow.pop %v765
  %v767 = vadd.f32 %v766, 1.0
  %v768 = vrcp.pop %v767
  %v769 = vmul.f32 1.0, %v768
  %v770 = vtanh.pop %v763
  %v771 = vmul.f32 %v769, %v510
  %773 = vrot.lane.b32.xlu0 %v770, 64
  %v774 = vpop.permute.xlu0 %773
  %v776 = vmul.f32 %v769, %v774
  %778 = vrot.lane.b32.xlu0 %v776, 32
  %v779 = vpop.permute.xlu0 %778
  %v781 = vadd.f32 %v771, %v779
  %v782 = vtanh.pop %v781
  %784 = vrot.lane.b32.xlu0 %v782, 64
  %v785 = vpop.permute.xlu0 %784
  %v787 = vmul.f32 %v769, %v785
  %v788 = vpack.c.bf16 %v787, %v787
  %789 = vmatprep.subr.bf16.mxu0 0
  %790 = vmatpush1.bf16.msra.mxu0 %v220
  %791 = vmatprep.subr.bf16.mxu0 0
  %792 = vmatpush1.bf16.msra.mxu0 %v221
  %793 = vmatprep.subr.bf16.mxu0 0
  %794 = vmatpush1.bf16.msra.mxu0 0
  %795 = vmatprep.subr.bf16.mxu0 0
  %796 = vmatpush1.bf16.msra.mxu0 0
  %797 = vmatprep.subr.bf16.mxu0 0
  %798 = vmatpush1.bf16.msra.mxu0 0
  %799 = vmatprep.subr.bf16.mxu0 0
  %800 = vmatpush1.bf16.msra.mxu0 0
  %801 = vmatprep.subr.bf16.mxu0 0
  %802 = vmatpush1.bf16.msra.mxu0 0
  %803 = vmatprep.subr.bf16.mxu0 0
  %804 = vmatpush1.bf16.msra.mxu0 0
  %805 = vmatprep.subr.bf16.mxu0 0
  %806 = vmatpush1.bf16.msra.mxu0 0
  %807 = vmatprep.subr.bf16.mxu0 0
  %808 = vmatpush1.bf16.msra.mxu0 0
  %809 = vmatprep.subr.bf16.mxu0 0
  %810 = vmatpush1.bf16.msra.mxu0 0
  %811 = vmatprep.subr.bf16.mxu0 0
  %812 = vmatpush1.bf16.msra.mxu0 0
  %813 = vmatprep.subr.bf16.mxu0 0
  %814 = vmatpush1.bf16.msra.mxu0 0
  %815 = vmatprep.subr.bf16.mxu0 0
  %816 = vmatpush1.bf16.msra.mxu0 0
  %817 = vmatprep.subr.bf16.mxu0 0
  %818 = vmatpush1.bf16.msra.mxu0 0
  %819 = vmatprep.subr.bf16.mxu0 0
  %820 = vmatpush1.bf16.msra.mxu0 0
  %821 = vmatprep.mubr.bf16.mxu0 0
  %822 = vmatmul.mubr.bf16.gmra.mrb[0].mxu0 %v634
  %v823 = vpop.f32.mrb[0].mxu0
  %v824 = vadd.f32 0.0, %v823
  %v825 = vpop.f32.mrb[0].mxu0
  %v826 = vpop.f32.mrb[0].mxu0
  %v827 = vpop.f32.mrb[0].mxu0
  %828 = vdwg.mxu0
  %830 = vrot.lane.b32.xlu0 %v788, 32
  %v831 = vpop.permute.xlu0 %830
  %v833 = vsel %vm87, %v831, 0
  %835 = vmatprep.subr.bf16.mxu0 0
  %836 = vmatpush1.bf16.msra.mxu0 %v275
  %837 = vmatprep.subr.bf16.mxu0 0
  %838 = vmatpush1.bf16.msra.mxu0 %v276
  %839 = vmatprep.subr.bf16.mxu0 0
  %840 = vmatpush1.bf16.msra.mxu0 0
  %841 = vmatprep.subr.bf16.mxu0 0
  %842 = vmatpush1.bf16.msra.mxu0 0
  %843 = vmatprep.subr.bf16.mxu0 0
  %844 = vmatpush1.bf16.msra.mxu0 0
  %845 = vmatprep.subr.bf16.mxu0 0
  %846 = vmatpush1.bf16.msra.mxu0 0
  %847 = vmatprep.subr.bf16.mxu0 0
  %848 = vmatpush1.bf16.msra.mxu0 0
  %849 = vmatprep.subr.bf16.mxu0 0
  %850 = vmatpush1.bf16.msra.mxu0 0
  %851 = vmatprep.subr.bf16.mxu0 0
  %852 = vmatpush1.bf16.msra.mxu0 0
  %853 = vmatprep.subr.bf16.mxu0 0
  %854 = vmatpush1.bf16.msra.mxu0 0
  %855 = vmatprep.subr.bf16.mxu0 0
  %856 = vmatpush1.bf16.msra.mxu0 0
  %857 = vmatprep.subr.bf16.mxu0 0
  %858 = vmatpush1.bf16.msra.mxu0 0
  %859 = vmatprep.subr.bf16.mxu0 0
  %860 = vmatpush1.bf16.msra.mxu0 0
  %861 = vmatprep.subr.bf16.mxu0 0
  %862 = vmatpush1.bf16.msra.mxu0 0
  %863 = vmatprep.subr.bf16.mxu0 0
  %864 = vmatpush1.bf16.msra.mxu0 0
  %865 = vmatprep.subr.bf16.mxu0 0
  %866 = vmatpush1.bf16.msra.mxu0 0
  %867 = vmatprep.mubr.bf16.mxu0 0
  %868 = vmatmul.mubr.bf16.gmra.mrb[0].mxu0 %v833
  %v869 = vpop.f32.mrb[0].mxu0
  %v870 = vadd.f32 %v824, %v869
  %v871 = vpop.f32.mrb[0].mxu0
  %v872 = vpop.f32.mrb[0].mxu0
  %v873 = vpop.f32.mrb[0].mxu0
  %874 = vdwg.mxu0
  %v875 = vadd.f32 %v870, %v61
  %v876 = vxor.u32 %v875, 2147483648
  %v877 = vmul.f32 %v876, 1.442695
  %v878 = vpow.pop %v877
  %v879 = vadd.f32 %v878, 1.0
  %v880 = vrcp.pop %v879
  %v881 = vmul.f32 1.0, %v880
  %v882 = vtanh.pop %v875
  %v883 = vmul.f32 %v881, %v622
  %885 = vrot.lane.b32.xlu0 %v882, 64
  %v886 = vpop.permute.xlu0 %885
  %v888 = vmul.f32 %v881, %v886
  %890 = vrot.lane.b32.xlu0 %v888, 32
  %v891 = vpop.permute.xlu0 %890
  %v893 = vadd.f32 %v883, %v891
  %v894 = vtanh.pop %v893
  %896 = vrot.lane.b32.xlu0 %v894, 64
  %v897 = vpop.permute.xlu0 %896
  %v899 = vmul.f32 %v881, %v897
  %v900 = vpack.c.bf16 %v899, %v899
  %902 = vrot.lane.b32.xlu0 %v900, 32
  %v903 = vpop.permute.xlu0 %902
  %v905 = vsel %vm87, %v903, 0
  %907 = vmatprep.subr.bf16.mxu0 0
  %908 = vmatpush1.bf16.msra.mxu0 %v359
  %909 = vmatprep.subr.bf16.mxu0 0
  %910 = vmatpush1.bf16.msra.mxu0 %v360
  %911 = vmatprep.subr.bf16.mxu0 0
  %912 = vmatpush1.bf16.msra.mxu0 0
  %913 = vmatprep.subr.bf16.mxu0 0
  %914 = vmatpush1.bf16.msra.mxu0 0
  %915 = vmatprep.subr.bf16.mxu0 0
  %916 = vmatpush1.bf16.msra.mxu0 0
  %917 = vmatprep.subr.bf16.mxu0 0
  %918 = vmatpush1.bf16.msra.mxu0 0
  %919 = vmatprep.subr.bf16.mxu0 0
  %920 = vmatpush1.bf16.msra.mxu0 0
  %921 = vmatprep.subr.bf16.mxu0 0
  %922 = vmatpush1.bf16.msra.mxu0 0
  %923 = vmatprep.subr.bf16.mxu0 0
  %924 = vmatpush1.bf16.msra.mxu0 0
  %925 = vmatprep.subr.bf16.mxu0 0
  %926 = vmatpush1.bf16.msra.mxu0 0
  %927 = vmatprep.subr.bf16.mxu0 0
  %928 = vmatpush1.bf16.msra.mxu0 0
  %929 = vmatprep.subr.bf16.mxu0 0
  %930 = vmatpush1.bf16.msra.mxu0 0
  %931 = vmatprep.subr.bf16.mxu0 0
  %932 = vmatpush1.bf16.msra.mxu0 0
  %933 = vmatprep.subr.bf16.mxu0 0
  %934 = vmatpush1.bf16.msra.mxu0 0
  %935 = vmatprep.subr.bf16.mxu0 0
  %936 = vmatpush1.bf16.msra.mxu0 0
  %937 = vmatprep.subr.bf16.mxu0 0
  %938 = vmatpush1.bf16.msra.mxu0 0
  %939 = vmatprep.mubr.bf16.mxu0 0
  %940 = vmatmul.mubr.bf16.gmra.mrb[0].mxu0 %v905
  %v941 = vpop.f32.mrb[0].mxu0
  %v942 = vadd.f32 %v72, %v941
  %v943 = vpop.f32.mrb[0].mxu0
  %v944 = vpop.f32.mrb[0].mxu0
  %v945 = vpop.f32.mrb[0].mxu0
  %946 = vdwg.mxu0
  %s947 = scalar_lea.vmem %s9, 16
  %948 = vst [vmem:[%s947] sm:$0xff] %v942
  %s949 = scalar_lea.vmem %s0, 12
  %v950 = vld [vmem:[%s949] sm:$0xf]
  %951 = vmatprep.subr.bf16.mxu0 0
  %952 = vmatpush1.bf16.msra.mxu0 %v83
  %953 = vmatprep.subr.bf16.mxu0 0
  %954 = vmatpush1.bf16.msra.mxu0 %v84
  %955 = vmatprep.subr.bf16.mxu0 0
  %956 = vmatpush1.bf16.msra.mxu0 0
  %957 = vmatprep.subr.bf16.mxu0 0
  %958 = vmatpush1.bf16.msra.mxu0 0
  %959 = vmatprep.subr.bf16.mxu0 0
  %960 = vmatpush1.bf16.msra.mxu0 0
  %961 = vmatprep.subr.bf16.mxu0 0
  %962 = vmatpush1.bf16.msra.mxu0 0
  %963 = vmatprep.subr.bf16.mxu0 0
  %964 = vmatpush1.bf16.msra.mxu0 0
  %965 = vmatprep.subr.bf16.mxu0 0
  %966 = vmatpush1.bf16.msra.mxu0 0
  %967 = vmatprep.subr.bf16.mxu0 0
  %968 = vmatpush1.bf16.msra.mxu0 0
  %969 = vmatprep.subr.bf16.mxu0 0
  %970 = vmatpush1.bf16.msra.mxu0 0
  %971 = vmatprep.subr.bf16.mxu0 0
  %972 = vmatpush1.bf16.msra.mxu0 0
  %973 = vmatprep.subr.bf16.mxu0 0
  %974 = vmatpush1.bf16.msra.mxu0 0
  %975 = vmatprep.subr.bf16.mxu0 0
  %976 = vmatpush1.bf16.msra.mxu0 0
  %977 = vmatprep.subr.bf16.mxu0 0
  %978 = vmatpush1.bf16.msra.mxu0 0
  %979 = vmatprep.subr.bf16.mxu0 0
  %980 = vmatpush1.bf16.msra.mxu0 0
  %981 = vmatprep.subr.bf16.mxu0 0
  %982 = vmatpush1.bf16.msra.mxu0 0
  %983 = vmatprep.mubr.bf16.mxu0 0
  %984 = vmatmul.mubr.bf16.gmra.mrb[0].mxu0 %v833
  %v985 = vpop.f32.mrb[0].mxu0
  %v986 = vadd.f32 0.0, %v985
  %v987 = vpop.f32.mrb[0].mxu0
  %v988 = vpop.f32.mrb[0].mxu0
  %v989 = vpop.f32.mrb[0].mxu0
  %990 = vdwg.mxu0
  %v992 = vsel %vm87, %v950, 0
  %994 = vmatprep.subr.bf16.mxu0 0
  %995 = vmatpush1.bf16.msra.mxu0 %v139
  %996 = vmatprep.subr.bf16.mxu0 0
  %997 = vmatpush1.bf16.msra.mxu0 %v140
  %998 = vmatprep.subr.bf16.mxu0 0
  %999 = vmatpush1.bf16.msra.mxu0 0
  %1000 = vmatprep.subr.bf16.mxu0 0
  %1001 = vmatpush1.bf16.msra.mxu0 0
  %1002 = vmatprep.subr.bf16.mxu0 0
  %1003 = vmatpush1.bf16.msra.mxu0 0
  %1004 = vmatprep.subr.bf16.mxu0 0
  %1005 = vmatpush1.bf16.msra.mxu0 0
  %1006 = vmatprep.subr.bf16.mxu0 0
  %1007 = vmatpush1.bf16.msra.mxu0 0
  %1008 = vmatprep.subr.bf16.mxu0 0
  %1009 = vmatpush1.bf16.msra.mxu0 0
  %1010 = vmatprep.subr.bf16.mxu0 0
  %1011 = vmatpush1.bf16.msra.mxu0 0
  %1012 = vmatprep.subr.bf16.mxu0 0
  %1013 = vmatpush1.bf16.msra.mxu0 0
  %1014 = vmatprep.subr.bf16.mxu0 0
  %1015 = vmatpush1.bf16.msra.mxu0 0
  %1016 = vmatprep.subr.bf16.mxu0 0
  %1017 = vmatpush1.bf16.msra.mxu0 0
  %1018 = vmatprep.subr.bf16.mxu0 0
  %1019 = vmatpush1.bf16.msra.mxu0 0
  %1020 = vmatprep.subr.bf16.mxu0 0
  %1021 = vmatpush1.bf16.msra.mxu0 0
  %1022 = vmatprep.subr.bf16.mxu0 0
  %1023 = vmatpush1.bf16.msra.mxu0 0
  %1024 = vmatprep.subr.bf16.mxu0 0
  %1025 = vmatpush1.bf16.msra.mxu0 0
  %1026 = vmatprep.mubr.bf16.mxu0 0
  %1027 = vmatmul.mubr.bf16.gmra.mrb[0].mxu0 %v992
  %v1028 = vpop.f32.mrb[0].mxu0
  %v1029 = vadd.f32 %v986, %v1028
  %v1030 = vpop.f32.mrb[0].mxu0
  %v1031 = vpop.f32.mrb[0].mxu0
  %v1032 = vpop.f32.mrb[0].mxu0
  %1033 = vdwg.mxu0
  %v1034 = vadd.f32 %v1029, %v54
  %v1035 = vxor.u32 %v1034, 2147483648
  %v1036 = vmul.f32 %v1035, 1.442695
  %v1037 = vpow.pop %v1036
  %v1038 = vadd.f32 %v1037, 1.0
  %v1039 = vrcp.pop %v1038
  %v1040 = vmul.f32 1.0, %v1039
  %v1041 = vtanh.pop %v1034
  %v1042 = vmul.f32 %v1040, %v781
  %1044 = vrot.lane.b32.xlu0 %v1041, 64
  %v1045 = vpop.permute.xlu0 %1044
  %v1047 = vmul.f32 %v1040, %v1045
  %1049 = vrot.lane.b32.xlu0 %v1047, 32
  %v1050 = vpop.permute.xlu0 %1049
  %v1052 = vadd.f32 %v1042, %v1050
  %v1053 = vtanh.pop %v1052
  %1055 = vrot.lane.b32.xlu0 %v1053, 64
  %v1056 = vpop.permute.xlu0 %1055
  %v1058 = vmul.f32 %v1040, %v1056
  %v1059 = vpack.c.bf16 %v1058, %v1058
  %1060 = vmatprep.subr.bf16.mxu0 0
  %1061 = vmatpush1.bf16.msra.mxu0 %v220
  %1062 = vmatprep.subr.bf16.mxu0 0
  %1063 = vmatpush1.bf16.msra.mxu0 %v221
  %1064 = vmatprep.subr.bf16.mxu0 0
  %1065 = vmatpush1.bf16.msra.mxu0 0
  %1066 = vmatprep.subr.bf16.mxu0 0
  %1067 = vmatpush1.bf16.msra.mxu0 0
  %1068 = vmatprep.subr.bf16.mxu0 0
  %1069 = vmatpush1.bf16.msra.mxu0 0
  %1070 = vmatprep.subr.bf16.mxu0 0
  %1071 = vmatpush1.bf16.msra.mxu0 0
  %1072 = vmatprep.subr.bf16.mxu0 0
  %1073 = vmatpush1.bf16.msra.mxu0 0
  %1074 = vmatprep.subr.bf16.mxu0 0
  %1075 = vmatpush1.bf16.msra.mxu0 0
  %1076 = vmatprep.subr.bf16.mxu0 0
  %1077 = vmatpush1.bf16.msra.mxu0 0
  %1078 = vmatprep.subr.bf16.mxu0 0
  %1079 = vmatpush1.bf16.msra.mxu0 0
  %1080 = vmatprep.subr.bf16.mxu0 0
  %1081 = vmatpush1.bf16.msra.mxu0 0
  %1082 = vmatprep.subr.bf16.mxu0 0
  %1083 = vmatpush1.bf16.msra.mxu0 0
  %1084 = vmatprep.subr.bf16.mxu0 0
  %1085 = vmatpush1.bf16.msra.mxu0 0
  %1086 = vmatprep.subr.bf16.mxu0 0
  %1087 = vmatpush1.bf16.msra.mxu0 0
  %1088 = vmatprep.subr.bf16.mxu0 0
  %1089 = vmatpush1.bf16.msra.mxu0 0
  %1090 = vmatprep.subr.bf16.mxu0 0
  %1091 = vmatpush1.bf16.msra.mxu0 0
  %1092 = vmatprep.mubr.bf16.mxu0 0
  %1093 = vmatmul.mubr.bf16.gmra.mrb[0].mxu0 %v905
  %v1094 = vpop.f32.mrb[0].mxu0
  %v1095 = vadd.f32 0.0, %v1094
  %v1096 = vpop.f32.mrb[0].mxu0
  %v1097 = vpop.f32.mrb[0].mxu0
  %v1098 = vpop.f32.mrb[0].mxu0
  %1099 = vdwg.mxu0
  %1101 = vrot.lane.b32.xlu0 %v1059, 32
  %v1102 = vpop.permute.xlu0 %1101
  %v1104 = vsel %vm87, %v1102, 0
  %1106 = vmatprep.subr.bf16.mxu0 0
  %1107 = vmatpush1.bf16.msra.mxu0 %v275
  %1108 = vmatprep.subr.bf16.mxu0 0
  %1109 = vmatpush1.bf16.msra.mxu0 %v276
  %1110 = vmatprep.subr.bf16.mxu0 0
  %1111 = vmatpush1.bf16.msra.mxu0 0
  %1112 = vmatprep.subr.bf16.mxu0 0
  %1113 = vmatpush1.bf16.msra.mxu0 0
  %1114 = vmatprep.subr.bf16.mxu0 0
  %1115 = vmatpush1.bf16.msra.mxu0 0
  %1116 = vmatprep.subr.bf16.mxu0 0
  %1117 = vmatpush1.bf16.msra.mxu0 0
  %1118 = vmatprep.subr.bf16.mxu0 0
  %1119 = vmatpush1.bf16.msra.mxu0 0
  %1120 = vmatprep.subr.bf16.mxu0 0
  %1121 = vmatpush1.bf16.msra.mxu0 0
  %1122 = vmatprep.subr.bf16.mxu0 0
  %1123 = vmatpush1.bf16.msra.mxu0 0
  %1124 = vmatprep.subr.bf16.mxu0 0
  %1125 = vmatpush1.bf16.msra.mxu0 0
  %1126 = vmatprep.subr.bf16.mxu0 0
  %1127 = vmatpush1.bf16.msra.mxu0 0
  %1128 = vmatprep.subr.bf16.mxu0 0
  %1129 = vmatpush1.bf16.msra.mxu0 0
  %1130 = vmatprep.subr.bf16.mxu0 0
  %1131 = vmatpush1.bf16.msra.mxu0 0
  %1132 = vmatprep.subr.bf16.mxu0 0
  %1133 = vmatpush1.bf16.msra.mxu0 0
  %1134 = vmatprep.subr.bf16.mxu0 0
  %1135 = vmatpush1.bf16.msra.mxu0 0
  %1136 = vmatprep.subr.bf16.mxu0 0
  %1137 = vmatpush1.bf16.msra.mxu0 0
  %1138 = vmatprep.mubr.bf16.mxu0 0
  %1139 = vmatmul.mubr.bf16.gmra.mrb[0].mxu0 %v1104
  %v1140 = vpop.f32.mrb[0].mxu0
  %v1141 = vadd.f32 %v1095, %v1140
  %v1142 = vpop.f32.mrb[0].mxu0
  %v1143 = vpop.f32.mrb[0].mxu0
  %v1144 = vpop.f32.mrb[0].mxu0
  %1145 = vdwg.mxu0
  %v1146 = vadd.f32 %v1141, %v61
  %v1147 = vxor.u32 %v1146, 2147483648
  %v1148 = vmul.f32 %v1147, 1.442695
  %v1149 = vpow.pop %v1148
  %v1150 = vadd.f32 %v1149, 1.0
  %v1151 = vrcp.pop %v1150
  %v1152 = vmul.f32 1.0, %v1151
  %v1153 = vtanh.pop %v1146
  %v1154 = vmul.f32 %v1152, %v893
  %1156 = vrot.lane.b32.xlu0 %v1153, 64
  %v1157 = vpop.permute.xlu0 %1156
  %v1159 = vmul.f32 %v1152, %v1157
  %1161 = vrot.lane.b32.xlu0 %v1159, 32
  %v1162 = vpop.permute.xlu0 %1161
  %v1164 = vadd.f32 %v1154, %v1162
  %v1165 = vtanh.pop %v1164
  %1167 = vrot.lane.b32.xlu0 %v1165, 64
  %v1168 = vpop.permute.xlu0 %1167
  %v1170 = vmul.f32 %v1152, %v1168
  %v1171 = vpack.c.bf16 %v1170, %v1170
  %1173 = vrot.lane.b32.xlu0 %v1171, 32
  %v1174 = vpop.permute.xlu0 %1173
  %v1176 = vsel %vm87, %v1174, 0
  %1178 = vmatprep.subr.bf16.mxu0 0
  %1179 = vmatpush1.bf16.msra.mxu0 %v359
  %1180 = vmatprep.subr.bf16.mxu0 0
  %1181 = vmatpush1.bf16.msra.mxu0 %v360
  %1182 = vmatprep.subr.bf16.mxu0 0
  %1183 = vmatpush1.bf16.msra.mxu0 0
  %1184 = vmatprep.subr.bf16.mxu0 0
  %1185 = vmatpush1.bf16.msra.mxu0 0
  %1186 = vmatprep.subr.bf16.mxu0 0
  %1187 = vmatpush1.bf16.msra.mxu0 0
  %1188 = vmatprep.subr.bf16.mxu0 0
  %1189 = vmatpush1.bf16.msra.mxu0 0
  %1190 = vmatprep.subr.bf16.mxu0 0
  %1191 = vmatpush1.bf16.msra.mxu0 0
  %1192 = vmatprep.subr.bf16.mxu0 0
  %1193 = vmatpush1.bf16.msra.mxu0 0
  %1194 = vmatprep.subr.bf16.mxu0 0
  %1195 = vmatpush1.bf16.msra.mxu0 0
  %1196 = vmatprep.subr.bf16.mxu0 0
  %1197 = vmatpush1.bf16.msra.mxu0 0
  %1198 = vmatprep.subr.bf16.mxu0 0
  %1199 = vmatpush1.bf16.msra.mxu0 0
  %1200 = vmatprep.subr.bf16.mxu0 0
  %1201 = vmatpush1.bf16.msra.mxu0 0
  %1202 = vmatprep.subr.bf16.mxu0 0
  %1203 = vmatpush1.bf16.msra.mxu0 0
  %1204 = vmatprep.subr.bf16.mxu0 0
  %1205 = vmatpush1.bf16.msra.mxu0 0
  %1206 = vmatprep.subr.bf16.mxu0 0
  %1207 = vmatpush1.bf16.msra.mxu0 0
  %1208 = vmatprep.subr.bf16.mxu0 0
  %1209 = vmatpush1.bf16.msra.mxu0 0
  %1210 = vmatprep.mubr.bf16.mxu0 0
  %1211 = vmatmul.mubr.bf16.gmra.mrb[0].mxu0 %v1176
  %v1212 = vpop.f32.mrb[0].mxu0
  %v1213 = vadd.f32 %v72, %v1212
  %v1214 = vpop.f32.mrb[0].mxu0
  %v1215 = vpop.f32.mrb[0].mxu0
  %v1216 = vpop.f32.mrb[0].mxu0
  %1217 = vdwg.mxu0
  %s1218 = scalar_lea.vmem %s9, 24
  %1219 = vst [vmem:[%s1218] sm:$0xff] %v1213
  %s1220 = scalar_lea.vmem %s0, 16
  %v1221 = vld [vmem:[%s1220] sm:$0xf]
  %1222 = vmatprep.subr.bf16.mxu0 0
  %1223 = vmatpush1.bf16.msra.mxu0 %v83
  %1224 = vmatprep.subr.bf16.mxu0 0
  %1225 = vmatpush1.bf16.msra.mxu0 %v84
  %1226 = vmatprep.subr.bf16.mxu0 0
  %1227 = vmatpush1.bf16.msra.mxu0 0
  %1228 = vmatprep.subr.bf16.mxu0 0
  %1229 = vmatpush1.bf16.msra.mxu0 0
  %1230 = vmatprep.subr.bf16.mxu0 0
  %1231 = vmatpush1.bf16.msra.mxu0 0
  %1232 = vmatprep.subr.bf16.mxu0 0
  %1233 = vmatpush1.bf16.msra.mxu0 0
  %1234 = vmatprep.subr.bf16.mxu0 0
  %1235 = vmatpush1.bf16.msra.mxu0 0
  %1236 = vmatprep.subr.bf16.mxu0 0
  %1237 = vmatpush1.bf16.msra.mxu0 0
  %1238 = vmatprep.subr.bf16.mxu0 0
  %1239 = vmatpush1.bf16.msra.mxu0 0
  %1240 = vmatprep.subr.bf16.mxu0 0
  %1241 = vmatpush1.bf16.msra.mxu0 0
  %1242 = vmatprep.subr.bf16.mxu0 0
  %1243 = vmatpush1.bf16.msra.mxu0 0
  %1244 = vmatprep.subr.bf16.mxu0 0
  %1245 = vmatpush1.bf16.msra.mxu0 0
  %1246 = vmatprep.subr.bf16.mxu0 0
  %1247 = vmatpush1.bf16.msra.mxu0 0
  %1248 = vmatprep.subr.bf16.mxu0 0
  %1249 = vmatpush1.bf16.msra.mxu0 0
  %1250 = vmatprep.subr.bf16.mxu0 0
  %1251 = vmatpush1.bf16.msra.mxu0 0
  %1252 = vmatprep.subr.bf16.mxu0 0
  %1253 = vmatpush1.bf16.msra.mxu0 0
  %1254 = vmatprep.mubr.bf16.mxu0 0
  %1255 = vmatmul.mubr.bf16.gmra.mrb[0].mxu0 %v1104
  %v1256 = vpop.f32.mrb[0].mxu0
  %v1257 = vadd.f32 0.0, %v1256
  %v1258 = vpop.f32.mrb[0].mxu0
  %v1259 = vpop.f32.mrb[0].mxu0
  %v1260 = vpop.f32.mrb[0].mxu0
  %1261 = vdwg.mxu0
  %v1263 = vsel %vm87, %v1221, 0
  %1265 = vmatprep.subr.bf16.mxu0 0
  %1266 = vmatpush1.bf16.msra.mxu0 %v139
  %1267 = vmatprep.subr.bf16.mxu0 0
  %1268 = vmatpush1.bf16.msra.mxu0 %v140
  %1269 = vmatprep.subr.bf16.mxu0 0
  %1270 = vmatpush1.bf16.msra.mxu0 0
  %1271 = vmatprep.subr.bf16.mxu0 0
  %1272 = vmatpush1.bf16.msra.mxu0 0
  %1273 = vmatprep.subr.bf16.mxu0 0
  %1274 = vmatpush1.bf16.msra.mxu0 0
  %1275 = vmatprep.subr.bf16.mxu0 0
  %1276 = vmatpush1.bf16.msra.mxu0 0
  %1277 = vmatprep.subr.bf16.mxu0 0
  %1278 = vmatpush1.bf16.msra.mxu0 0
  %1279 = vmatprep.subr.bf16.mxu0 0
  %1280 = vmatpush1.bf16.msra.mxu0 0
  %1281 = vmatprep.subr.bf16.mxu0 0
  %1282 = vmatpush1.bf16.msra.mxu0 0
  %1283 = vmatprep.subr.bf16.mxu0 0
  %1284 = vmatpush1.bf16.msra.mxu0 0
  %1285 = vmatprep.subr.bf16.mxu0 0
  %1286 = vmatpush1.bf16.msra.mxu0 0
  %1287 = vmatprep.subr.bf16.mxu0 0
  %1288 = vmatpush1.bf16.msra.mxu0 0
  %1289 = vmatprep.subr.bf16.mxu0 0
  %1290 = vmatpush1.bf16.msra.mxu0 0
  %1291 = vmatprep.subr.bf16.mxu0 0
  %1292 = vmatpush1.bf16.msra.mxu0 0
  %1293 = vmatprep.subr.bf16.mxu0 0
  %1294 = vmatpush1.bf16.msra.mxu0 0
  %1295 = vmatprep.subr.bf16.mxu0 0
  %1296 = vmatpush1.bf16.msra.mxu0 0
  %1297 = vmatprep.mubr.bf16.mxu0 0
  %1298 = vmatmul.mubr.bf16.gmra.mrb[0].mxu0 %v1263
  %v1299 = vpop.f32.mrb[0].mxu0
  %v1300 = vadd.f32 %v1257, %v1299
  %v1301 = vpop.f32.mrb[0].mxu0
  %v1302 = vpop.f32.mrb[0].mxu0
  %v1303 = vpop.f32.mrb[0].mxu0
  %1304 = vdwg.mxu0
  %v1305 = vadd.f32 %v1300, %v54
  %v1306 = vxor.u32 %v1305, 2147483648
  %v1307 = vmul.f32 %v1306, 1.442695
  %v1308 = vpow.pop %v1307
  %v1309 = vadd.f32 %v1308, 1.0
  %v1310 = vrcp.pop %v1309
  %v1311 = vmul.f32 1.0, %v1310
  %v1312 = vtanh.pop %v1305
  %v1313 = vmul.f32 %v1311, %v1052
  %1315 = vrot.lane.b32.xlu0 %v1312, 64
  %v1316 = vpop.permute.xlu0 %1315
  %v1318 = vmul.f32 %v1311, %v1316
  %1320 = vrot.lane.b32.xlu0 %v1318, 32
  %v1321 = vpop.permute.xlu0 %1320
  %v1323 = vadd.f32 %v1313, %v1321
  %v1324 = vtanh.pop %v1323
  %1326 = vrot.lane.b32.xlu0 %v1324, 64
  %v1327 = vpop.permute.xlu0 %1326
  %v1329 = vmul.f32 %v1311, %v1327
  %v1330 = vpack.c.bf16 %v1329, %v1329
  %1331 = vmatprep.subr.bf16.mxu0 0
  %1332 = vmatpush1.bf16.msra.mxu0 %v220
  %1333 = vmatprep.subr.bf16.mxu0 0
  %1334 = vmatpush1.bf16.msra.mxu0 %v221
  %1335 = vmatprep.subr.bf16.mxu0 0
  %1336 = vmatpush1.bf16.msra.mxu0 0
  %1337 = vmatprep.subr.bf16.mxu0 0
  %1338 = vmatpush1.bf16.msra.mxu0 0
  %1339 = vmatprep.subr.bf16.mxu0 0
  %1340 = vmatpush1.bf16.msra.mxu0 0
  %1341 = vmatprep.subr.bf16.mxu0 0
  %1342 = vmatpush1.bf16.msra.mxu0 0
  %1343 = vmatprep.subr.bf16.mxu0 0
  %1344 = vmatpush1.bf16.msra.mxu0 0
  %1345 = vmatprep.subr.bf16.mxu0 0
  %1346 = vmatpush1.bf16.msra.mxu0 0
  %1347 = vmatprep.subr.bf16.mxu0 0
  %1348 = vmatpush1.bf16.msra.mxu0 0
  %1349 = vmatprep.subr.bf16.mxu0 0
  %1350 = vmatpush1.bf16.msra.mxu0 0
  %1351 = vmatprep.subr.bf16.mxu0 0
  %1352 = vmatpush1.bf16.msra.mxu0 0
  %1353 = vmatprep.subr.bf16.mxu0 0
  %1354 = vmatpush1.bf16.msra.mxu0 0
  %1355 = vmatprep.subr.bf16.mxu0 0
  %1356 = vmatpush1.bf16.msra.mxu0 0
  %1357 = vmatprep.subr.bf16.mxu0 0
  %1358 = vmatpush1.bf16.msra.mxu0 0
  %1359 = vmatprep.subr.bf16.mxu0 0
  %1360 = vmatpush1.bf16.msra.mxu0 0
  %1361 = vmatprep.subr.bf16.mxu0 0
  %1362 = vmatpush1.bf16.msra.mxu0 0
  %1363 = vmatprep.mubr.bf16.mxu0 0
  %1364 = vmatmul.mubr.bf16.gmra.mrb[0].mxu0 %v1176
  %v1365 = vpop.f32.mrb[0].mxu0
  %v1366 = vadd.f32 0.0, %v1365
  %v1367 = vpop.f32.mrb[0].mxu0
  %v1368 = vpop.f32.mrb[0].mxu0
  %v1369 = vpop.f32.mrb[0].mxu0
  %1370 = vdwg.mxu0
  %1372 = vrot.lane.b32.xlu0 %v1330, 32
  %v1373 = vpop.permute.xlu0 %1372
  %v1375 = vsel %vm87, %v1373, 0
  %1377 = vmatprep.subr.bf16.mxu0 0
  %1378 = vmatpush1.bf16.msra.mxu0 %v275
  %1379 = vmatprep.subr.bf16.mxu0 0
  %1380 = vmatpush1.bf16.msra.mxu0 %v276
  %1381 = vmatprep.subr.bf16.mxu0 0
  %1382 = vmatpush1.bf16.msra.mxu0 0
  %1383 = vmatprep.subr.bf16.mxu0 0
  %1384 = vmatpush1.bf16.msra.mxu0 0
  %1385 = vmatprep.subr.bf16.mxu0 0
  %1386 = vmatpush1.bf16.msra.mxu0 0
  %1387 = vmatprep.subr.bf16.mxu0 0
  %1388 = vmatpush1.bf16.msra.mxu0 0
  %1389 = vmatprep.subr.bf16.mxu0 0
  %1390 = vmatpush1.bf16.msra.mxu0 0
  %1391 = vmatprep.subr.bf16.mxu0 0
  %1392 = vmatpush1.bf16.msra.mxu0 0
  %1393 = vmatprep.subr.bf16.mxu0 0
  %1394 = vmatpush1.bf16.msra.mxu0 0
  %1395 = vmatprep.subr.bf16.mxu0 0
  %1396 = vmatpush1.bf16.msra.mxu0 0
  %1397 = vmatprep.subr.bf16.mxu0 0
  %1398 = vmatpush1.bf16.msra.mxu0 0
  %1399 = vmatprep.subr.bf16.mxu0 0
  %1400 = vmatpush1.bf16.msra.mxu0 0
  %1401 = vmatprep.subr.bf16.mxu0 0
  %1402 = vmatpush1.bf16.msra.mxu0 0
  %1403 = vmatprep.subr.bf16.mxu0 0
  %1404 = vmatpush1.bf16.msra.mxu0 0
  %1405 = vmatprep.subr.bf16.mxu0 0
  %1406 = vmatpush1.bf16.msra.mxu0 0
  %1407 = vmatprep.subr.bf16.mxu0 0
  %1408 = vmatpush1.bf16.msra.mxu0 0
  %1409 = vmatprep.mubr.bf16.mxu0 0
  %1410 = vmatmul.mubr.bf16.gmra.mrb[0].mxu0 %v1375
  %v1411 = vpop.f32.mrb[0].mxu0
  %v1412 = vadd.f32 %v1366, %v1411
  %v1413 = vpop.f32.mrb[0].mxu0
  %v1414 = vpop.f32.mrb[0].mxu0
  %v1415 = vpop.f32.mrb[0].mxu0
  %1416 = vdwg.mxu0
  %v1417 = vadd.f32 %v1412, %v61
  %v1418 = vxor.u32 %v1417, 2147483648
  %v1419 = vmul.f32 %v1418, 1.442695
  %v1420 = vpow.pop %v1419
  %v1421 = vadd.f32 %v1420, 1.0
  %v1422 = vrcp.pop %v1421
  %v1423 = vmul.f32 1.0, %v1422
  %v1424 = vtanh.pop %v1417
  %v1425 = vmul.f32 %v1423, %v1164
  %1427 = vrot.lane.b32.xlu0 %v1424, 64
  %v1428 = vpop.permute.xlu0 %1427
  %v1430 = vmul.f32 %v1423, %v1428
  %1432 = vrot.lane.b32.xlu0 %v1430, 32
  %v1433 = vpop.permute.xlu0 %1432
  %v1435 = vadd.f32 %v1425, %v1433
  %v1436 = vtanh.pop %v1435
  %1438 = vrot.lane.b32.xlu0 %v1436, 64
  %v1439 = vpop.permute.xlu0 %1438
  %v1441 = vmul.f32 %v1423, %v1439
  %v1442 = vpack.c.bf16 %v1441, %v1441
  %1444 = vrot.lane.b32.xlu0 %v1442, 32
  %v1445 = vpop.permute.xlu0 %1444
  %v1447 = vsel %vm87, %v1445, 0
  %1449 = vmatprep.subr.bf16.mxu0 0
  %1450 = vmatpush1.bf16.msra.mxu0 %v359
  %1451 = vmatprep.subr.bf16.mxu0 0
  %1452 = vmatpush1.bf16.msra.mxu0 %v360
  %1453 = vmatprep.subr.bf16.mxu0 0
  %1454 = vmatpush1.bf16.msra.mxu0 0
  %1455 = vmatprep.subr.bf16.mxu0 0
  %1456 = vmatpush1.bf16.msra.mxu0 0
  %1457 = vmatprep.subr.bf16.mxu0 0
  %1458 = vmatpush1.bf16.msra.mxu0 0
  %1459 = vmatprep.subr.bf16.mxu0 0
  %1460 = vmatpush1.bf16.msra.mxu0 0
  %1461 = vmatprep.subr.bf16.mxu0 0
  %1462 = vmatpush1.bf16.msra.mxu0 0
  %1463 = vmatprep.subr.bf16.mxu0 0
  %1464 = vmatpush1.bf16.msra.mxu0 0
  %1465 = vmatprep.subr.bf16.mxu0 0
  %1466 = vmatpush1.bf16.msra.mxu0 0
  %1467 = vmatprep.subr.bf16.mxu0 0
  %1468 = vmatpush1.bf16.msra.mxu0 0
  %1469 = vmatprep.subr.bf16.mxu0 0
  %1470 = vmatpush1.bf16.msra.mxu0 0
  %1471 = vmatprep.subr.bf16.mxu0 0
  %1472 = vmatpush1.bf16.msra.mxu0 0
  %1473 = vmatprep.subr.bf16.mxu0 0
  %1474 = vmatpush1.bf16.msra.mxu0 0
  %1475 = vmatprep.subr.bf16.mxu0 0
  %1476 = vmatpush1.bf16.msra.mxu0 0
  %1477 = vmatprep.subr.bf16.mxu0 0
  %1478 = vmatpush1.bf16.msra.mxu0 0
  %1479 = vmatprep.subr.bf16.mxu0 0
  %1480 = vmatpush1.bf16.msra.mxu0 0
  %1481 = vmatprep.mubr.bf16.mxu0 0
  %1482 = vmatmul.mubr.bf16.gmra.mrb[0].mxu0 %v1447
  %v1483 = vpop.f32.mrb[0].mxu0
  %v1484 = vadd.f32 %v72, %v1483
  %v1485 = vpop.f32.mrb[0].mxu0
  %v1486 = vpop.f32.mrb[0].mxu0
  %v1487 = vpop.f32.mrb[0].mxu0
  %1488 = vdwg.mxu0
  %s1489 = scalar_lea.vmem %s9, 32
  %1490 = vst [vmem:[%s1489] sm:$0xff] %v1484
  %s1491 = scalar_lea.vmem %s0, 20
  %v1492 = vld [vmem:[%s1491] sm:$0xf]
  %1493 = vmatprep.subr.bf16.mxu0 0
  %1494 = vmatpush1.bf16.msra.mxu0 %v83
  %1495 = vmatprep.subr.bf16.mxu0 0
  %1496 = vmatpush1.bf16.msra.mxu0 %v84
  %1497 = vmatprep.subr.bf16.mxu0 0
  %1498 = vmatpush1.bf16.msra.mxu0 0
  %1499 = vmatprep.subr.bf16.mxu0 0
  %1500 = vmatpush1.bf16.msra.mxu0 0
  %1501 = vmatprep.subr.bf16.mxu0 0
  %1502 = vmatpush1.bf16.msra.mxu0 0
  %1503 = vmatprep.subr.bf16.mxu0 0
  %1504 = vmatpush1.bf16.msra.mxu0 0
  %1505 = vmatprep.subr.bf16.mxu0 0
  %1506 = vmatpush1.bf16.msra.mxu0 0
  %1507 = vmatprep.subr.bf16.mxu0 0
  %1508 = vmatpush1.bf16.msra.mxu0 0
  %1509 = vmatprep.subr.bf16.mxu0 0
  %1510 = vmatpush1.bf16.msra.mxu0 0
  %1511 = vmatprep.subr.bf16.mxu0 0
  %1512 = vmatpush1.bf16.msra.mxu0 0
  %1513 = vmatprep.subr.bf16.mxu0 0
  %1514 = vmatpush1.bf16.msra.mxu0 0
  %1515 = vmatprep.subr.bf16.mxu0 0
  %1516 = vmatpush1.bf16.msra.mxu0 0
  %1517 = vmatprep.subr.bf16.mxu0 0
  %1518 = vmatpush1.bf16.msra.mxu0 0
  %1519 = vmatprep.subr.bf16.mxu0 0
  %1520 = vmatpush1.bf16.msra.mxu0 0
  %1521 = vmatprep.subr.bf16.mxu0 0
  %1522 = vmatpush1.bf16.msra.mxu0 0
  %1523 = vmatprep.subr.bf16.mxu0 0
  %1524 = vmatpush1.bf16.msra.mxu0 0
  %1525 = vmatprep.mubr.bf16.mxu0 0
  %1526 = vmatmul.mubr.bf16.gmra.mrb[0].mxu0 %v1375
  %v1527 = vpop.f32.mrb[0].mxu0
  %v1528 = vadd.f32 0.0, %v1527
  %v1529 = vpop.f32.mrb[0].mxu0
  %v1530 = vpop.f32.mrb[0].mxu0
  %v1531 = vpop.f32.mrb[0].mxu0
  %1532 = vdwg.mxu0
  %v1534 = vsel %vm87, %v1492, 0
  %1536 = vmatprep.subr.bf16.mxu0 0
  %1537 = vmatpush1.bf16.msra.mxu0 %v139
  %1538 = vmatprep.subr.bf16.mxu0 0
  %1539 = vmatpush1.bf16.msra.mxu0 %v140
  %1540 = vmatprep.subr.bf16.mxu0 0
  %1541 = vmatpush1.bf16.msra.mxu0 0
  %1542 = vmatprep.subr.bf16.mxu0 0
  %1543 = vmatpush1.bf16.msra.mxu0 0
  %1544 = vmatprep.subr.bf16.mxu0 0
  %1545 = vmatpush1.bf16.msra.mxu0 0
  %1546 = vmatprep.subr.bf16.mxu0 0
  %1547 = vmatpush1.bf16.msra.mxu0 0
  %1548 = vmatprep.subr.bf16.mxu0 0
  %1549 = vmatpush1.bf16.msra.mxu0 0
  %1550 = vmatprep.subr.bf16.mxu0 0
  %1551 = vmatpush1.bf16.msra.mxu0 0
  %1552 = vmatprep.subr.bf16.mxu0 0
  %1553 = vmatpush1.bf16.msra.mxu0 0
  %1554 = vmatprep.subr.bf16.mxu0 0
  %1555 = vmatpush1.bf16.msra.mxu0 0
  %1556 = vmatprep.subr.bf16.mxu0 0
  %1557 = vmatpush1.bf16.msra.mxu0 0
  %1558 = vmatprep.subr.bf16.mxu0 0
  %1559 = vmatpush1.bf16.msra.mxu0 0
  %1560 = vmatprep.subr.bf16.mxu0 0
  %1561 = vmatpush1.bf16.msra.mxu0 0
  %1562 = vmatprep.subr.bf16.mxu0 0
  %1563 = vmatpush1.bf16.msra.mxu0 0
  %1564 = vmatprep.subr.bf16.mxu0 0
  %1565 = vmatpush1.bf16.msra.mxu0 0
  %1566 = vmatprep.subr.bf16.mxu0 0
  %1567 = vmatpush1.bf16.msra.mxu0 0
  %1568 = vmatprep.mubr.bf16.mxu0 0
  %1569 = vmatmul.mubr.bf16.gmra.mrb[0].mxu0 %v1534
  %v1570 = vpop.f32.mrb[0].mxu0
  %v1571 = vadd.f32 %v1528, %v1570
  %v1572 = vpop.f32.mrb[0].mxu0
  %v1573 = vpop.f32.mrb[0].mxu0
  %v1574 = vpop.f32.mrb[0].mxu0
  %1575 = vdwg.mxu0
  %v1576 = vadd.f32 %v1571, %v54
  %v1577 = vxor.u32 %v1576, 2147483648
  %v1578 = vmul.f32 %v1577, 1.442695
  %v1579 = vpow.pop %v1578
  %v1580 = vadd.f32 %v1579, 1.0
  %v1581 = vrcp.pop %v1580
  %v1582 = vmul.f32 1.0, %v1581
  %v1583 = vtanh.pop %v1576
  %v1584 = vmul.f32 %v1582, %v1323
  %1586 = vrot.lane.b32.xlu0 %v1583, 64
  %v1587 = vpop.permute.xlu0 %1586
  %v1589 = vmul.f32 %v1582, %v1587
  %1591 = vrot.lane.b32.xlu0 %v1589, 32
  %v1592 = vpop.permute.xlu0 %1591
  %v1594 = vadd.f32 %v1584, %v1592
  %v1595 = vtanh.pop %v1594
  %1597 = vrot.lane.b32.xlu0 %v1595, 64
  %v1598 = vpop.permute.xlu0 %1597
  %v1600 = vmul.f32 %v1582, %v1598
  %v1601 = vpack.c.bf16 %v1600, %v1600
  %1602 = vmatprep.subr.bf16.mxu0 0
  %1603 = vmatpush1.bf16.msra.mxu0 %v220
  %1604 = vmatprep.subr.bf16.mxu0 0
  %1605 = vmatpush1.bf16.msra.mxu0 %v221
  %1606 = vmatprep.subr.bf16.mxu0 0
  %1607 = vmatpush1.bf16.msra.mxu0 0
  %1608 = vmatprep.subr.bf16.mxu0 0
  %1609 = vmatpush1.bf16.msra.mxu0 0
  %1610 = vmatprep.subr.bf16.mxu0 0
  %1611 = vmatpush1.bf16.msra.mxu0 0
  %1612 = vmatprep.subr.bf16.mxu0 0
  %1613 = vmatpush1.bf16.msra.mxu0 0
  %1614 = vmatprep.subr.bf16.mxu0 0
  %1615 = vmatpush1.bf16.msra.mxu0 0
  %1616 = vmatprep.subr.bf16.mxu0 0
  %1617 = vmatpush1.bf16.msra.mxu0 0
  %1618 = vmatprep.subr.bf16.mxu0 0
  %1619 = vmatpush1.bf16.msra.mxu0 0
  %1620 = vmatprep.subr.bf16.mxu0 0
  %1621 = vmatpush1.bf16.msra.mxu0 0
  %1622 = vmatprep.subr.bf16.mxu0 0
  %1623 = vmatpush1.bf16.msra.mxu0 0
  %1624 = vmatprep.subr.bf16.mxu0 0
  %1625 = vmatpush1.bf16.msra.mxu0 0
  %1626 = vmatprep.subr.bf16.mxu0 0
  %1627 = vmatpush1.bf16.msra.mxu0 0
  %1628 = vmatprep.subr.bf16.mxu0 0
  %1629 = vmatpush1.bf16.msra.mxu0 0
  %1630 = vmatprep.subr.bf16.mxu0 0
  %1631 = vmatpush1.bf16.msra.mxu0 0
  %1632 = vmatprep.subr.bf16.mxu0 0
  %1633 = vmatpush1.bf16.msra.mxu0 0
  %1634 = vmatprep.mubr.bf16.mxu0 0
  %1635 = vmatmul.mubr.bf16.gmra.mrb[0].mxu0 %v1447
  %v1636 = vpop.f32.mrb[0].mxu0
  %v1637 = vadd.f32 0.0, %v1636
  %v1638 = vpop.f32.mrb[0].mxu0
  %v1639 = vpop.f32.mrb[0].mxu0
  %v1640 = vpop.f32.mrb[0].mxu0
  %1641 = vdwg.mxu0
  %1643 = vrot.lane.b32.xlu0 %v1601, 32
  %v1644 = vpop.permute.xlu0 %1643
  %v1646 = vsel %vm87, %v1644, 0
  %1648 = vmatprep.subr.bf16.mxu0 0
  %1649 = vmatpush1.bf16.msra.mxu0 %v275
  %1650 = vmatprep.subr.bf16.mxu0 0
  %1651 = vmatpush1.bf16.msra.mxu0 %v276
  %1652 = vmatprep.subr.bf16.mxu0 0
  %1653 = vmatpush1.bf16.msra.mxu0 0
  %1654 = vmatprep.subr.bf16.mxu0 0
  %1655 = vmatpush1.bf16.msra.mxu0 0
  %1656 = vmatprep.subr.bf16.mxu0 0
  %1657 = vmatpush1.bf16.msra.mxu0 0
  %1658 = vmatprep.subr.bf16.mxu0 0
  %1659 = vmatpush1.bf16.msra.mxu0 0
  %1660 = vmatprep.subr.bf16.mxu0 0
  %1661 = vmatpush1.bf16.msra.mxu0 0
  %1662 = vmatprep.subr.bf16.mxu0 0
  %1663 = vmatpush1.bf16.msra.mxu0 0
  %1664 = vmatprep.subr.bf16.mxu0 0
  %1665 = vmatpush1.bf16.msra.mxu0 0
  %1666 = vmatprep.subr.bf16.mxu0 0
  %1667 = vmatpush1.bf16.msra.mxu0 0
  %1668 = vmatprep.subr.bf16.mxu0 0
  %1669 = vmatpush1.bf16.msra.mxu0 0
  %1670 = vmatprep.subr.bf16.mxu0 0
  %1671 = vmatpush1.bf16.msra.mxu0 0
  %1672 = vmatprep.subr.bf16.mxu0 0
  %1673 = vmatpush1.bf16.msra.mxu0 0
  %1674 = vmatprep.subr.bf16.mxu0 0
  %1675 = vmatpush1.bf16.msra.mxu0 0
  %1676 = vmatprep.subr.bf16.mxu0 0
  %1677 = vmatpush1.bf16.msra.mxu0 0
  %1678 = vmatprep.subr.bf16.mxu0 0
  %1679 = vmatpush1.bf16.msra.mxu0 0
  %1680 = vmatprep.mubr.bf16.mxu0 0
  %1681 = vmatmul.mubr.bf16.gmra.mrb[0].mxu0 %v1646
  %v1682 = vpop.f32.mrb[0].mxu0
  %v1683 = vadd.f32 %v1637, %v1682
  %v1684 = vpop.f32.mrb[0].mxu0
  %v1685 = vpop.f32.mrb[0].mxu0
  %v1686 = vpop.f32.mrb[0].mxu0
  %1687 = vdwg.mxu0
  %v1688 = vadd.f32 %v1683, %v61
  %v1689 = vxor.u32 %v1688, 2147483648
  %v1690 = vmul.f32 %v1689, 1.442695
  %v1691 = vpow.pop %v1690
  %v1692 = vadd.f32 %v1691, 1.0
  %v1693 = vrcp.pop %v1692
  %v1694 = vmul.f32 1.0, %v1693
  %v1695 = vtanh.pop %v1688
  %v1696 = vmul.f32 %v1694, %v1435
  %1698 = vrot.lane.b32.xlu0 %v1695, 64
  %v1699 = vpop.permute.xlu0 %1698
  %v1701 = vmul.f32 %v1694, %v1699
  %1703 = vrot.lane.b32.xlu0 %v1701, 32
  %v1704 = vpop.permute.xlu0 %1703
  %v1706 = vadd.f32 %v1696, %v1704
  %v1707 = vtanh.pop %v1706
  %1709 = vrot.lane.b32.xlu0 %v1707, 64
  %v1710 = vpop.permute.xlu0 %1709
  %v1712 = vmul.f32 %v1694, %v1710
  %v1713 = vpack.c.bf16 %v1712, %v1712
  %1715 = vrot.lane.b32.xlu0 %v1713, 32
  %v1716 = vpop.permute.xlu0 %1715
  %v1718 = vsel %vm87, %v1716, 0
  %1720 = vmatprep.subr.bf16.mxu0 0
  %1721 = vmatpush1.bf16.msra.mxu0 %v359
  %1722 = vmatprep.subr.bf16.mxu0 0
  %1723 = vmatpush1.bf16.msra.mxu0 %v360
  %1724 = vmatprep.subr.bf16.mxu0 0
  %1725 = vmatpush1.bf16.msra.mxu0 0
  %1726 = vmatprep.subr.bf16.mxu0 0
  %1727 = vmatpush1.bf16.msra.mxu0 0
  %1728 = vmatprep.subr.bf16.mxu0 0
  %1729 = vmatpush1.bf16.msra.mxu0 0
  %1730 = vmatprep.subr.bf16.mxu0 0
  %1731 = vmatpush1.bf16.msra.mxu0 0
  %1732 = vmatprep.subr.bf16.mxu0 0
  %1733 = vmatpush1.bf16.msra.mxu0 0
  %1734 = vmatprep.subr.bf16.mxu0 0
  %1735 = vmatpush1.bf16.msra.mxu0 0
  %1736 = vmatprep.subr.bf16.mxu0 0
  %1737 = vmatpush1.bf16.msra.mxu0 0
  %1738 = vmatprep.subr.bf16.mxu0 0
  %1739 = vmatpush1.bf16.msra.mxu0 0
  %1740 = vmatprep.subr.bf16.mxu0 0
  %1741 = vmatpush1.bf16.msra.mxu0 0
  %1742 = vmatprep.subr.bf16.mxu0 0
  %1743 = vmatpush1.bf16.msra.mxu0 0
  %1744 = vmatprep.subr.bf16.mxu0 0
  %1745 = vmatpush1.bf16.msra.mxu0 0
  %1746 = vmatprep.subr.bf16.mxu0 0
  %1747 = vmatpush1.bf16.msra.mxu0 0
  %1748 = vmatprep.subr.bf16.mxu0 0
  %1749 = vmatpush1.bf16.msra.mxu0 0
  %1750 = vmatprep.subr.bf16.mxu0 0
  %1751 = vmatpush1.bf16.msra.mxu0 0
  %1752 = vmatprep.mubr.bf16.mxu0 0
  %1753 = vmatmul.mubr.bf16.gmra.mrb[0].mxu0 %v1718
  %v1754 = vpop.f32.mrb[0].mxu0
  %v1755 = vadd.f32 %v72, %v1754
  %v1756 = vpop.f32.mrb[0].mxu0
  %v1757 = vpop.f32.mrb[0].mxu0
  %v1758 = vpop.f32.mrb[0].mxu0
  %1759 = vdwg.mxu0
  %s1760 = scalar_lea.vmem %s9, 40
  %1761 = vst [vmem:[%s1760] sm:$0xff] %v1755
  %s1762 = scalar_lea.vmem %s0, 24
  %v1763 = vld [vmem:[%s1762] sm:$0xf]
  %1764 = vmatprep.subr.bf16.mxu0 0
  %1765 = vmatpush1.bf16.msra.mxu0 %v83
  %1766 = vmatprep.subr.bf16.mxu0 0
  %1767 = vmatpush1.bf16.msra.mxu0 %v84
  %1768 = vmatprep.subr.bf16.mxu0 0
  %1769 = vmatpush1.bf16.msra.mxu0 0
  %1770 = vmatprep.subr.bf16.mxu0 0
  %1771 = vmatpush1.bf16.msra.mxu0 0
  %1772 = vmatprep.subr.bf16.mxu0 0
  %1773 = vmatpush1.bf16.msra.mxu0 0
  %1774 = vmatprep.subr.bf16.mxu0 0
  %1775 = vmatpush1.bf16.msra.mxu0 0
  %1776 = vmatprep.subr.bf16.mxu0 0
  %1777 = vmatpush1.bf16.msra.mxu0 0
  %1778 = vmatprep.subr.bf16.mxu0 0
  %1779 = vmatpush1.bf16.msra.mxu0 0
  %1780 = vmatprep.subr.bf16.mxu0 0
  %1781 = vmatpush1.bf16.msra.mxu0 0
  %1782 = vmatprep.subr.bf16.mxu0 0
  %1783 = vmatpush1.bf16.msra.mxu0 0
  %1784 = vmatprep.subr.bf16.mxu0 0
  %1785 = vmatpush1.bf16.msra.mxu0 0
  %1786 = vmatprep.subr.bf16.mxu0 0
  %1787 = vmatpush1.bf16.msra.mxu0 0
  %1788 = vmatprep.subr.bf16.mxu0 0
  %1789 = vmatpush1.bf16.msra.mxu0 0
  %1790 = vmatprep.subr.bf16.mxu0 0
  %1791 = vmatpush1.bf16.msra.mxu0 0
  %1792 = vmatprep.subr.bf16.mxu0 0
  %1793 = vmatpush1.bf16.msra.mxu0 0
  %1794 = vmatprep.subr.bf16.mxu0 0
  %1795 = vmatpush1.bf16.msra.mxu0 0
  %1796 = vmatprep.mubr.bf16.mxu0 0
  %1797 = vmatmul.mubr.bf16.gmra.mrb[0].mxu0 %v1646
  %v1798 = vpop.f32.mrb[0].mxu0
  %v1799 = vadd.f32 0.0, %v1798
  %v1800 = vpop.f32.mrb[0].mxu0
  %v1801 = vpop.f32.mrb[0].mxu0
  %v1802 = vpop.f32.mrb[0].mxu0
  %1803 = vdwg.mxu0
  %v1805 = vsel %vm87, %v1763, 0
  %1807 = vmatprep.subr.bf16.mxu0 0
  %1808 = vmatpush1.bf16.msra.mxu0 %v139
  %1809 = vmatprep.subr.bf16.mxu0 0
  %1810 = vmatpush1.bf16.msra.mxu0 %v140
  %1811 = vmatprep.subr.bf16.mxu0 0
  %1812 = vmatpush1.bf16.msra.mxu0 0
  %1813 = vmatprep.subr.bf16.mxu0 0
  %1814 = vmatpush1.bf16.msra.mxu0 0
  %1815 = vmatprep.subr.bf16.mxu0 0
  %1816 = vmatpush1.bf16.msra.mxu0 0
  %1817 = vmatprep.subr.bf16.mxu0 0
  %1818 = vmatpush1.bf16.msra.mxu0 0
  %1819 = vmatprep.subr.bf16.mxu0 0
  %1820 = vmatpush1.bf16.msra.mxu0 0
  %1821 = vmatprep.subr.bf16.mxu0 0
  %1822 = vmatpush1.bf16.msra.mxu0 0
  %1823 = vmatprep.subr.bf16.mxu0 0
  %1824 = vmatpush1.bf16.msra.mxu0 0
  %1825 = vmatprep.subr.bf16.mxu0 0
  %1826 = vmatpush1.bf16.msra.mxu0 0
  %1827 = vmatprep.subr.bf16.mxu0 0
  %1828 = vmatpush1.bf16.msra.mxu0 0
  %1829 = vmatprep.subr.bf16.mxu0 0
  %1830 = vmatpush1.bf16.msra.mxu0 0
  %1831 = vmatprep.subr.bf16.mxu0 0
  %1832 = vmatpush1.bf16.msra.mxu0 0
  %1833 = vmatprep.subr.bf16.mxu0 0
  %1834 = vmatpush1.bf16.msra.mxu0 0
  %1835 = vmatprep.subr.bf16.mxu0 0
  %1836 = vmatpush1.bf16.msra.mxu0 0
  %1837 = vmatprep.subr.bf16.mxu0 0
  %1838 = vmatpush1.bf16.msra.mxu0 0
  %1839 = vmatprep.mubr.bf16.mxu0 0
  %1840 = vmatmul.mubr.bf16.gmra.mrb[0].mxu0 %v1805
  %v1841 = vpop.f32.mrb[0].mxu0
  %v1842 = vadd.f32 %v1799, %v1841
  %v1843 = vpop.f32.mrb[0].mxu0
  %v1844 = vpop.f32.mrb[0].mxu0
  %v1845 = vpop.f32.mrb[0].mxu0
  %1846 = vdwg.mxu0
  %v1847 = vadd.f32 %v1842, %v54
  %v1848 = vxor.u32 %v1847, 2147483648
  %v1849 = vmul.f32 %v1848, 1.442695
  %v1850 = vpow.pop %v1849
  %v1851 = vadd.f32 %v1850, 1.0
  %v1852 = vrcp.pop %v1851
  %v1853 = vmul.f32 1.0, %v1852
  %v1854 = vtanh.pop %v1847
  %v1855 = vmul.f32 %v1853, %v1594
  %1857 = vrot.lane.b32.xlu0 %v1854, 64
  %v1858 = vpop.permute.xlu0 %1857
  %v1860 = vmul.f32 %v1853, %v1858
  %1862 = vrot.lane.b32.xlu0 %v1860, 32
  %v1863 = vpop.permute.xlu0 %1862
  %v1865 = vadd.f32 %v1855, %v1863
  %v1866 = vtanh.pop %v1865
  %1868 = vrot.lane.b32.xlu0 %v1866, 64
  %v1869 = vpop.permute.xlu0 %1868
  %v1871 = vmul.f32 %v1853, %v1869
  %v1872 = vpack.c.bf16 %v1871, %v1871
  %1873 = vmatprep.subr.bf16.mxu0 0
  %1874 = vmatpush1.bf16.msra.mxu0 %v220
  %1875 = vmatprep.subr.bf16.mxu0 0
  %1876 = vmatpush1.bf16.msra.mxu0 %v221
  %1877 = vmatprep.subr.bf16.mxu0 0
  %1878 = vmatpush1.bf16.msra.mxu0 0
  %1879 = vmatprep.subr.bf16.mxu0 0
  %1880 = vmatpush1.bf16.msra.mxu0 0
  %1881 = vmatprep.subr.bf16.mxu0 0
  %1882 = vmatpush1.bf16.msra.mxu0 0
  %1883 = vmatprep.subr.bf16.mxu0 0
  %1884 = vmatpush1.bf16.msra.mxu0 0
  %1885 = vmatprep.subr.bf16.mxu0 0
  %1886 = vmatpush1.bf16.msra.mxu0 0
  %1887 = vmatprep.subr.bf16.mxu0 0
  %1888 = vmatpush1.bf16.msra.mxu0 0
  %1889 = vmatprep.subr.bf16.mxu0 0
  %1890 = vmatpush1.bf16.msra.mxu0 0
  %1891 = vmatprep.subr.bf16.mxu0 0
  %1892 = vmatpush1.bf16.msra.mxu0 0
  %1893 = vmatprep.subr.bf16.mxu0 0
  %1894 = vmatpush1.bf16.msra.mxu0 0
  %1895 = vmatprep.subr.bf16.mxu0 0
  %1896 = vmatpush1.bf16.msra.mxu0 0
  %1897 = vmatprep.subr.bf16.mxu0 0
  %1898 = vmatpush1.bf16.msra.mxu0 0
  %1899 = vmatprep.subr.bf16.mxu0 0
  %1900 = vmatpush1.bf16.msra.mxu0 0
  %1901 = vmatprep.subr.bf16.mxu0 0
  %1902 = vmatpush1.bf16.msra.mxu0 0
  %1903 = vmatprep.subr.bf16.mxu0 0
  %1904 = vmatpush1.bf16.msra.mxu0 0
  %1905 = vmatprep.mubr.bf16.mxu0 0
  %1906 = vmatmul.mubr.bf16.gmra.mrb[0].mxu0 %v1718
  %v1907 = vpop.f32.mrb[0].mxu0
  %v1908 = vadd.f32 0.0, %v1907
  %v1909 = vpop.f32.mrb[0].mxu0
  %v1910 = vpop.f32.mrb[0].mxu0
  %v1911 = vpop.f32.mrb[0].mxu0
  %1912 = vdwg.mxu0
  %1914 = vrot.lane.b32.xlu0 %v1872, 32
  %v1915 = vpop.permute.xlu0 %1914
  %v1917 = vsel %vm87, %v1915, 0
  %1919 = vmatprep.subr.bf16.mxu0 0
  %1920 = vmatpush1.bf16.msra.mxu0 %v275
  %1921 = vmatprep.subr.bf16.mxu0 0
  %1922 = vmatpush1.bf16.msra.mxu0 %v276
  %1923 = vmatprep.subr.bf16.mxu0 0
  %1924 = vmatpush1.bf16.msra.mxu0 0
  %1925 = vmatprep.subr.bf16.mxu0 0
  %1926 = vmatpush1.bf16.msra.mxu0 0
  %1927 = vmatprep.subr.bf16.mxu0 0
  %1928 = vmatpush1.bf16.msra.mxu0 0
  %1929 = vmatprep.subr.bf16.mxu0 0
  %1930 = vmatpush1.bf16.msra.mxu0 0
  %1931 = vmatprep.subr.bf16.mxu0 0
  %1932 = vmatpush1.bf16.msra.mxu0 0
  %1933 = vmatprep.subr.bf16.mxu0 0
  %1934 = vmatpush1.bf16.msra.mxu0 0
  %1935 = vmatprep.subr.bf16.mxu0 0
  %1936 = vmatpush1.bf16.msra.mxu0 0
  %1937 = vmatprep.subr.bf16.mxu0 0
  %1938 = vmatpush1.bf16.msra.mxu0 0
  %1939 = vmatprep.subr.bf16.mxu0 0
  %1940 = vmatpush1.bf16.msra.mxu0 0
  %1941 = vmatprep.subr.bf16.mxu0 0
  %1942 = vmatpush1.bf16.msra.mxu0 0
  %1943 = vmatprep.subr.bf16.mxu0 0
  %1944 = vmatpush1.bf16.msra.mxu0 0
  %1945 = vmatprep.subr.bf16.mxu0 0
  %1946 = vmatpush1.bf16.msra.mxu0 0
  %1947 = vmatprep.subr.bf16.mxu0 0
  %1948 = vmatpush1.bf16.msra.mxu0 0
  %1949 = vmatprep.subr.bf16.mxu0 0
  %1950 = vmatpush1.bf16.msra.mxu0 0
  %1951 = vmatprep.mubr.bf16.mxu0 0
  %1952 = vmatmul.mubr.bf16.gmra.mrb[0].mxu0 %v1917
  %v1953 = vpop.f32.mrb[0].mxu0
  %v1954 = vadd.f32 %v1908, %v1953
  %v1955 = vpop.f32.mrb[0].mxu0
  %v1956 = vpop.f32.mrb[0].mxu0
  %v1957 = vpop.f32.mrb[0].mxu0
  %1958 = vdwg.mxu0
  %v1959 = vadd.f32 %v1954, %v61
  %v1960 = vxor.u32 %v1959, 2147483648
  %v1961 = vmul.f32 %v1960, 1.442695
  %v1962 = vpow.pop %v1961
  %v1963 = vadd.f32 %v1962, 1.0
  %v1964 = vrcp.pop %v1963
  %v1965 = vmul.f32 1.0, %v1964
  %v1966 = vtanh.pop %v1959
  %v1967 = vmul.f32 %v1965, %v1706
  %1969 = vrot.lane.b32.xlu0 %v1966, 64
  %v1970 = vpop.permute.xlu0 %1969
  %v1972 = vmul.f32 %v1965, %v1970
  %1974 = vrot.lane.b32.xlu0 %v1972, 32
  %v1975 = vpop.permute.xlu0 %1974
  %v1977 = vadd.f32 %v1967, %v1975
  %v1978 = vtanh.pop %v1977
  %1980 = vrot.lane.b32.xlu0 %v1978, 64
  %v1981 = vpop.permute.xlu0 %1980
  %v1983 = vmul.f32 %v1965, %v1981
  %v1984 = vpack.c.bf16 %v1983, %v1983
  %1986 = vrot.lane.b32.xlu0 %v1984, 32
  %v1987 = vpop.permute.xlu0 %1986
  %v1989 = vsel %vm87, %v1987, 0
  %1991 = vmatprep.subr.bf16.mxu0 0
  %1992 = vmatpush1.bf16.msra.mxu0 %v359
  %1993 = vmatprep.subr.bf16.mxu0 0
  %1994 = vmatpush1.bf16.msra.mxu0 %v360
  %1995 = vmatprep.subr.bf16.mxu0 0
  %1996 = vmatpush1.bf16.msra.mxu0 0
  %1997 = vmatprep.subr.bf16.mxu0 0
  %1998 = vmatpush1.bf16.msra.mxu0 0
  %1999 = vmatprep.subr.bf16.mxu0 0
  %2000 = vmatpush1.bf16.msra.mxu0 0
  %2001 = vmatprep.subr.bf16.mxu0 0
  %2002 = vmatpush1.bf16.msra.mxu0 0
  %2003 = vmatprep.subr.bf16.mxu0 0
  %2004 = vmatpush1.bf16.msra.mxu0 0
  %2005 = vmatprep.subr.bf16.mxu0 0
  %2006 = vmatpush1.bf16.msra.mxu0 0
  %2007 = vmatprep.subr.bf16.mxu0 0
  %2008 = vmatpush1.bf16.msra.mxu0 0
  %2009 = vmatprep.subr.bf16.mxu0 0
  %2010 = vmatpush1.bf16.msra.mxu0 0
  %2011 = vmatprep.subr.bf16.mxu0 0
  %2012 = vmatpush1.bf16.msra.mxu0 0
  %2013 = vmatprep.subr.bf16.mxu0 0
  %2014 = vmatpush1.bf16.msra.mxu0 0
  %2015 = vmatprep.subr.bf16.mxu0 0
  %2016 = vmatpush1.bf16.msra.mxu0 0
  %2017 = vmatprep.subr.bf16.mxu0 0
  %2018 = vmatpush1.bf16.msra.mxu0 0
  %2019 = vmatprep.subr.bf16.mxu0 0
  %2020 = vmatpush1.bf16.msra.mxu0 0
  %2021 = vmatprep.subr.bf16.mxu0 0
  %2022 = vmatpush1.bf16.msra.mxu0 0
  %2023 = vmatprep.mubr.bf16.mxu0 0
  %2024 = vmatmul.mubr.bf16.gmra.mrb[0].mxu0 %v1989
  %v2025 = vpop.f32.mrb[0].mxu0
  %v2026 = vadd.f32 %v72, %v2025
  %v2027 = vpop.f32.mrb[0].mxu0
  %v2028 = vpop.f32.mrb[0].mxu0
  %v2029 = vpop.f32.mrb[0].mxu0
  %2030 = vdwg.mxu0
  %s2031 = scalar_lea.vmem %s9, 48
  %2032 = vst [vmem:[%s2031] sm:$0xff] %v2026
  %s2033 = scalar_lea.vmem %s0, 28
  %v2034 = vld [vmem:[%s2033] sm:$0xf]
  %2035 = vmatprep.subr.bf16.mxu0 0
  %2036 = vmatpush1.bf16.msra.mxu0 %v83
  %2037 = vmatprep.subr.bf16.mxu0 0
  %2038 = vmatpush1.bf16.msra.mxu0 %v84
  %2039 = vmatprep.subr.bf16.mxu0 0
  %2040 = vmatpush1.bf16.msra.mxu0 0
  %2041 = vmatprep.subr.bf16.mxu0 0
  %2042 = vmatpush1.bf16.msra.mxu0 0
  %2043 = vmatprep.subr.bf16.mxu0 0
  %2044 = vmatpush1.bf16.msra.mxu0 0
  %2045 = vmatprep.subr.bf16.mxu0 0
  %2046 = vmatpush1.bf16.msra.mxu0 0
  %2047 = vmatprep.subr.bf16.mxu0 0
  %2048 = vmatpush1.bf16.msra.mxu0 0
  %2049 = vmatprep.subr.bf16.mxu0 0
  %2050 = vmatpush1.bf16.msra.mxu0 0
  %2051 = vmatprep.subr.bf16.mxu0 0
  %2052 = vmatpush1.bf16.msra.mxu0 0
  %2053 = vmatprep.subr.bf16.mxu0 0
  %2054 = vmatpush1.bf16.msra.mxu0 0
  %2055 = vmatprep.subr.bf16.mxu0 0
  %2056 = vmatpush1.bf16.msra.mxu0 0
  %2057 = vmatprep.subr.bf16.mxu0 0
  %2058 = vmatpush1.bf16.msra.mxu0 0
  %2059 = vmatprep.subr.bf16.mxu0 0
  %2060 = vmatpush1.bf16.msra.mxu0 0
  %2061 = vmatprep.subr.bf16.mxu0 0
  %2062 = vmatpush1.bf16.msra.mxu0 0
  %2063 = vmatprep.subr.bf16.mxu0 0
  %2064 = vmatpush1.bf16.msra.mxu0 0
  %2065 = vmatprep.subr.bf16.mxu0 0
  %2066 = vmatpush1.bf16.msra.mxu0 0
  %2067 = vmatprep.mubr.bf16.mxu0 0
  %2068 = vmatmul.mubr.bf16.gmra.mrb[0].mxu0 %v1917
  %v2069 = vpop.f32.mrb[0].mxu0
  %v2070 = vadd.f32 0.0, %v2069
  %v2071 = vpop.f32.mrb[0].mxu0
  %v2072 = vpop.f32.mrb[0].mxu0
  %v2073 = vpop.f32.mrb[0].mxu0
  %2074 = vdwg.mxu0
  %v2076 = vsel %vm87, %v2034, 0
  %2078 = vmatprep.subr.bf16.mxu0 0
  %2079 = vmatpush1.bf16.msra.mxu0 %v139
  %2080 = vmatprep.subr.bf16.mxu0 0
  %2081 = vmatpush1.bf16.msra.mxu0 %v140
  %2082 = vmatprep.subr.bf16.mxu0 0
  %2083 = vmatpush1.bf16.msra.mxu0 0
  %2084 = vmatprep.subr.bf16.mxu0 0
  %2085 = vmatpush1.bf16.msra.mxu0 0
  %2086 = vmatprep.subr.bf16.mxu0 0
  %2087 = vmatpush1.bf16.msra.mxu0 0
  %2088 = vmatprep.subr.bf16.mxu0 0
  %2089 = vmatpush1.bf16.msra.mxu0 0
  %2090 = vmatprep.subr.bf16.mxu0 0
  %2091 = vmatpush1.bf16.msra.mxu0 0
  %2092 = vmatprep.subr.bf16.mxu0 0
  %2093 = vmatpush1.bf16.msra.mxu0 0
  %2094 = vmatprep.subr.bf16.mxu0 0
  %2095 = vmatpush1.bf16.msra.mxu0 0
  %2096 = vmatprep.subr.bf16.mxu0 0
  %2097 = vmatpush1.bf16.msra.mxu0 0
  %2098 = vmatprep.subr.bf16.mxu0 0
  %2099 = vmatpush1.bf16.msra.mxu0 0
  %2100 = vmatprep.subr.bf16.mxu0 0
  %2101 = vmatpush1.bf16.msra.mxu0 0
  %2102 = vmatprep.subr.bf16.mxu0 0
  %2103 = vmatpush1.bf16.msra.mxu0 0
  %2104 = vmatprep.subr.bf16.mxu0 0
  %2105 = vmatpush1.bf16.msra.mxu0 0
  %2106 = vmatprep.subr.bf16.mxu0 0
  %2107 = vmatpush1.bf16.msra.mxu0 0
  %2108 = vmatprep.subr.bf16.mxu0 0
  %2109 = vmatpush1.bf16.msra.mxu0 0
  %2110 = vmatprep.mubr.bf16.mxu0 0
  %2111 = vmatmul.mubr.bf16.gmra.mrb[0].mxu0 %v2076
  %v2112 = vpop.f32.mrb[0].mxu0
  %v2113 = vadd.f32 %v2070, %v2112
  %v2114 = vpop.f32.mrb[0].mxu0
  %v2115 = vpop.f32.mrb[0].mxu0
  %v2116 = vpop.f32.mrb[0].mxu0
  %2117 = vdwg.mxu0
  %v2118 = vadd.f32 %v2113, %v54
  %v2119 = vxor.u32 %v2118, 2147483648
  %v2120 = vmul.f32 %v2119, 1.442695
  %v2121 = vpow.pop %v2120
  %v2122 = vadd.f32 %v2121, 1.0
  %v2123 = vrcp.pop %v2122
  %v2124 = vmul.f32 1.0, %v2123
  %v2125 = vtanh.pop %v2118
  %v2126 = vmul.f32 %v2124, %v1865
  %2128 = vrot.lane.b32.xlu0 %v2125, 64
  %v2129 = vpop.permute.xlu0 %2128
  %v2131 = vmul.f32 %v2124, %v2129
  %2133 = vrot.lane.b32.xlu0 %v2131, 32
  %v2134 = vpop.permute.xlu0 %2133
  %v2136 = vadd.f32 %v2126, %v2134
  %v2137 = vtanh.pop %v2136
  %2139 = vrot.lane.b32.xlu0 %v2137, 64
  %v2140 = vpop.permute.xlu0 %2139
  %v2142 = vmul.f32 %v2124, %v2140
  %v2143 = vpack.c.bf16 %v2142, %v2142
  %2144 = vmatprep.subr.bf16.mxu0 0
  %2145 = vmatpush1.bf16.msra.mxu0 %v220
  %2146 = vmatprep.subr.bf16.mxu0 0
  %2147 = vmatpush1.bf16.msra.mxu0 %v221
  %2148 = vmatprep.subr.bf16.mxu0 0
  %2149 = vmatpush1.bf16.msra.mxu0 0
  %2150 = vmatprep.subr.bf16.mxu0 0
  %2151 = vmatpush1.bf16.msra.mxu0 0
  %2152 = vmatprep.subr.bf16.mxu0 0
  %2153 = vmatpush1.bf16.msra.mxu0 0
  %2154 = vmatprep.subr.bf16.mxu0 0
  %2155 = vmatpush1.bf16.msra.mxu0 0
  %2156 = vmatprep.subr.bf16.mxu0 0
  %2157 = vmatpush1.bf16.msra.mxu0 0
  %2158 = vmatprep.subr.bf16.mxu0 0
  %2159 = vmatpush1.bf16.msra.mxu0 0
  %2160 = vmatprep.subr.bf16.mxu0 0
  %2161 = vmatpush1.bf16.msra.mxu0 0
  %2162 = vmatprep.subr.bf16.mxu0 0
  %2163 = vmatpush1.bf16.msra.mxu0 0
  %2164 = vmatprep.subr.bf16.mxu0 0
  %2165 = vmatpush1.bf16.msra.mxu0 0
  %2166 = vmatprep.subr.bf16.mxu0 0
  %2167 = vmatpush1.bf16.msra.mxu0 0
  %2168 = vmatprep.subr.bf16.mxu0 0
  %2169 = vmatpush1.bf16.msra.mxu0 0
  %2170 = vmatprep.subr.bf16.mxu0 0
  %2171 = vmatpush1.bf16.msra.mxu0 0
  %2172 = vmatprep.subr.bf16.mxu0 0
  %2173 = vmatpush1.bf16.msra.mxu0 0
  %2174 = vmatprep.subr.bf16.mxu0 0
  %2175 = vmatpush1.bf16.msra.mxu0 0
  %2176 = vmatprep.mubr.bf16.mxu0 0
  %2177 = vmatmul.mubr.bf16.gmra.mrb[0].mxu0 %v1989
  %v2178 = vpop.f32.mrb[0].mxu0
  %v2179 = vadd.f32 0.0, %v2178
  %v2180 = vpop.f32.mrb[0].mxu0
  %v2181 = vpop.f32.mrb[0].mxu0
  %v2182 = vpop.f32.mrb[0].mxu0
  %2183 = vdwg.mxu0
  %2185 = vrot.lane.b32.xlu0 %v2143, 32
  %v2186 = vpop.permute.xlu0 %2185
  %v2188 = vsel %vm87, %v2186, 0
  %2190 = vmatprep.subr.bf16.mxu0 0
  %2191 = vmatpush1.bf16.msra.mxu0 %v275
  %2192 = vmatprep.subr.bf16.mxu0 0
  %2193 = vmatpush1.bf16.msra.mxu0 %v276
  %2194 = vmatprep.subr.bf16.mxu0 0
  %2195 = vmatpush1.bf16.msra.mxu0 0
  %2196 = vmatprep.subr.bf16.mxu0 0
  %2197 = vmatpush1.bf16.msra.mxu0 0
  %2198 = vmatprep.subr.bf16.mxu0 0
  %2199 = vmatpush1.bf16.msra.mxu0 0
  %2200 = vmatprep.subr.bf16.mxu0 0
  %2201 = vmatpush1.bf16.msra.mxu0 0
  %2202 = vmatprep.subr.bf16.mxu0 0
  %2203 = vmatpush1.bf16.msra.mxu0 0
  %2204 = vmatprep.subr.bf16.mxu0 0
  %2205 = vmatpush1.bf16.msra.mxu0 0
  %2206 = vmatprep.subr.bf16.mxu0 0
  %2207 = vmatpush1.bf16.msra.mxu0 0
  %2208 = vmatprep.subr.bf16.mxu0 0
  %2209 = vmatpush1.bf16.msra.mxu0 0
  %2210 = vmatprep.subr.bf16.mxu0 0
  %2211 = vmatpush1.bf16.msra.mxu0 0
  %2212 = vmatprep.subr.bf16.mxu0 0
  %2213 = vmatpush1.bf16.msra.mxu0 0
  %2214 = vmatprep.subr.bf16.mxu0 0
  %2215 = vmatpush1.bf16.msra.mxu0 0
  %2216 = vmatprep.subr.bf16.mxu0 0
  %2217 = vmatpush1.bf16.msra.mxu0 0
  %2218 = vmatprep.subr.bf16.mxu0 0
  %2219 = vmatpush1.bf16.msra.mxu0 0
  %2220 = vmatprep.subr.bf16.mxu0 0
  %2221 = vmatpush1.bf16.msra.mxu0 0
  %2222 = vmatprep.mubr.bf16.mxu0 0
  %2223 = vmatmul.mubr.bf16.gmra.mrb[0].mxu0 %v2188
  %v2224 = vpop.f32.mrb[0].mxu0
  %v2225 = vadd.f32 %v2179, %v2224
  %v2226 = vpop.f32.mrb[0].mxu0
  %v2227 = vpop.f32.mrb[0].mxu0
  %v2228 = vpop.f32.mrb[0].mxu0
  %2229 = vdwg.mxu0
  %v2230 = vadd.f32 %v2225, %v61
  %v2231 = vxor.u32 %v2230, 2147483648
  %v2232 = vmul.f32 %v2231, 1.442695
  %v2233 = vpow.pop %v2232
  %v2234 = vadd.f32 %v2233, 1.0
  %v2235 = vrcp.pop %v2234
  %v2236 = vmul.f32 1.0, %v2235
  %v2237 = vtanh.pop %v2230
  %v2238 = vmul.f32 %v2236, %v1977
  %2240 = vrot.lane.b32.xlu0 %v2237, 64
  %v2241 = vpop.permute.xlu0 %2240
  %v2243 = vmul.f32 %v2236, %v2241
  %2245 = vrot.lane.b32.xlu0 %v2243, 32
  %v2246 = vpop.permute.xlu0 %2245
  %v2248 = vadd.f32 %v2238, %v2246
  %v2249 = vtanh.pop %v2248
  %2251 = vrot.lane.b32.xlu0 %v2249, 64
  %v2252 = vpop.permute.xlu0 %2251
  %v2254 = vmul.f32 %v2236, %v2252
  %v2255 = vpack.c.bf16 %v2254, %v2254
  %2257 = vrot.lane.b32.xlu0 %v2255, 32
  %v2258 = vpop.permute.xlu0 %2257
  %v2260 = vsel %vm87, %v2258, 0
  %2262 = vmatprep.subr.bf16.mxu0 0
  %2263 = vmatpush1.bf16.msra.mxu0 %v359
  %2264 = vmatprep.subr.bf16.mxu0 0
  %2265 = vmatpush1.bf16.msra.mxu0 %v360
  %2266 = vmatprep.subr.bf16.mxu0 0
  %2267 = vmatpush1.bf16.msra.mxu0 0
  %2268 = vmatprep.subr.bf16.mxu0 0
  %2269 = vmatpush1.bf16.msra.mxu0 0
  %2270 = vmatprep.subr.bf16.mxu0 0
  %2271 = vmatpush1.bf16.msra.mxu0 0
  %2272 = vmatprep.subr.bf16.mxu0 0
  %2273 = vmatpush1.bf16.msra.mxu0 0
  %2274 = vmatprep.subr.bf16.mxu0 0
  %2275 = vmatpush1.bf16.msra.mxu0 0
  %2276 = vmatprep.subr.bf16.mxu0 0
  %2277 = vmatpush1.bf16.msra.mxu0 0
  %2278 = vmatprep.subr.bf16.mxu0 0
  %2279 = vmatpush1.bf16.msra.mxu0 0
  %2280 = vmatprep.subr.bf16.mxu0 0
  %2281 = vmatpush1.bf16.msra.mxu0 0
  %2282 = vmatprep.subr.bf16.mxu0 0
  %2283 = vmatpush1.bf16.msra.mxu0 0
  %2284 = vmatprep.subr.bf16.mxu0 0
  %2285 = vmatpush1.bf16.msra.mxu0 0
  %2286 = vmatprep.subr.bf16.mxu0 0
  %2287 = vmatpush1.bf16.msra.mxu0 0
  %2288 = vmatprep.subr.bf16.mxu0 0
  %2289 = vmatpush1.bf16.msra.mxu0 0
  %2290 = vmatprep.subr.bf16.mxu0 0
  %2291 = vmatpush1.bf16.msra.mxu0 0
  %2292 = vmatprep.subr.bf16.mxu0 0
  %2293 = vmatpush1.bf16.msra.mxu0 0
  %2294 = vmatprep.mubr.bf16.mxu0 0
  %2295 = vmatmul.mubr.bf16.gmra.mrb[0].mxu0 %v2260
  %v2296 = vpop.f32.mrb[0].mxu0
  %v2297 = vadd.f32 %v72, %v2296
  %v2298 = vpop.f32.mrb[0].mxu0
  %v2299 = vpop.f32.mrb[0].mxu0
  %v2300 = vpop.f32.mrb[0].mxu0
  %2301 = vdwg.mxu0
  %s2302 = scalar_lea.vmem %s9, 56
  %2303 = vst [vmem:[%s2302] sm:$0xff] %v2297
  %s2304 = scalar_lea.vmem %s0, 32
  %v2305 = vld [vmem:[%s2304] sm:$0xf]
  %2306 = vmatprep.subr.bf16.mxu0 0
  %2307 = vmatpush1.bf16.msra.mxu0 %v83
  %2308 = vmatprep.subr.bf16.mxu0 0
  %2309 = vmatpush1.bf16.msra.mxu0 %v84
  %2310 = vmatprep.subr.bf16.mxu0 0
  %2311 = vmatpush1.bf16.msra.mxu0 0
  %2312 = vmatprep.subr.bf16.mxu0 0
  %2313 = vmatpush1.bf16.msra.mxu0 0
  %2314 = vmatprep.subr.bf16.mxu0 0
  %2315 = vmatpush1.bf16.msra.mxu0 0
  %2316 = vmatprep.subr.bf16.mxu0 0
  %2317 = vmatpush1.bf16.msra.mxu0 0
  %2318 = vmatprep.subr.bf16.mxu0 0
  %2319 = vmatpush1.bf16.msra.mxu0 0
  %2320 = vmatprep.subr.bf16.mxu0 0
  %2321 = vmatpush1.bf16.msra.mxu0 0
  %2322 = vmatprep.subr.bf16.mxu0 0
  %2323 = vmatpush1.bf16.msra.mxu0 0
  %2324 = vmatprep.subr.bf16.mxu0 0
  %2325 = vmatpush1.bf16.msra.mxu0 0
  %2326 = vmatprep.subr.bf16.mxu0 0
  %2327 = vmatpush1.bf16.msra.mxu0 0
  %2328 = vmatprep.subr.bf16.mxu0 0
  %2329 = vmatpush1.bf16.msra.mxu0 0
  %2330 = vmatprep.subr.bf16.mxu0 0
  %2331 = vmatpush1.bf16.msra.mxu0 0
  %2332 = vmatprep.subr.bf16.mxu0 0
  %2333 = vmatpush1.bf16.msra.mxu0 0
  %2334 = vmatprep.subr.bf16.mxu0 0
  %2335 = vmatpush1.bf16.msra.mxu0 0
  %2336 = vmatprep.subr.bf16.mxu0 0
  %2337 = vmatpush1.bf16.msra.mxu0 0
  %2338 = vmatprep.mubr.bf16.mxu0 0
  %2339 = vmatmul.mubr.bf16.gmra.mrb[0].mxu0 %v2188
  %v2340 = vpop.f32.mrb[0].mxu0
  %v2341 = vadd.f32 0.0, %v2340
  %v2342 = vpop.f32.mrb[0].mxu0
  %v2343 = vpop.f32.mrb[0].mxu0
  %v2344 = vpop.f32.mrb[0].mxu0
  %2345 = vdwg.mxu0
  %v2347 = vsel %vm87, %v2305, 0
  %2349 = vmatprep.subr.bf16.mxu0 0
  %2350 = vmatpush1.bf16.msra.mxu0 %v139
  %2351 = vmatprep.subr.bf16.mxu0 0
  %2352 = vmatpush1.bf16.msra.mxu0 %v140
  %2353 = vmatprep.subr.bf16.mxu0 0
  %2354 = vmatpush1.bf16.msra.mxu0 0
  %2355 = vmatprep.subr.bf16.mxu0 0
  %2356 = vmatpush1.bf16.msra.mxu0 0
  %2357 = vmatprep.subr.bf16.mxu0 0
  %2358 = vmatpush1.bf16.msra.mxu0 0
  %2359 = vmatprep.subr.bf16.mxu0 0
  %2360 = vmatpush1.bf16.msra.mxu0 0
  %2361 = vmatprep.subr.bf16.mxu0 0
  %2362 = vmatpush1.bf16.msra.mxu0 0
  %2363 = vmatprep.subr.bf16.mxu0 0
  %2364 = vmatpush1.bf16.msra.mxu0 0
  %2365 = vmatprep.subr.bf16.mxu0 0
  %2366 = vmatpush1.bf16.msra.mxu0 0
  %2367 = vmatprep.subr.bf16.mxu0 0
  %2368 = vmatpush1.bf16.msra.mxu0 0
  %2369 = vmatprep.subr.bf16.mxu0 0
  %2370 = vmatpush1.bf16.msra.mxu0 0
  %2371 = vmatprep.subr.bf16.mxu0 0
  %2372 = vmatpush1.bf16.msra.mxu0 0
  %2373 = vmatprep.subr.bf16.mxu0 0
  %2374 = vmatpush1.bf16.msra.mxu0 0
  %2375 = vmatprep.subr.bf16.mxu0 0
  %2376 = vmatpush1.bf16.msra.mxu0 0
  %2377 = vmatprep.subr.bf16.mxu0 0
  %2378 = vmatpush1.bf16.msra.mxu0 0
  %2379 = vmatprep.subr.bf16.mxu0 0
  %2380 = vmatpush1.bf16.msra.mxu0 0
  %2381 = vmatprep.mubr.bf16.mxu0 0
  %2382 = vmatmul.mubr.bf16.gmra.mrb[0].mxu0 %v2347
  %v2383 = vpop.f32.mrb[0].mxu0
  %v2384 = vadd.f32 %v2341, %v2383
  %v2385 = vpop.f32.mrb[0].mxu0
  %v2386 = vpop.f32.mrb[0].mxu0
  %v2387 = vpop.f32.mrb[0].mxu0
  %2388 = vdwg.mxu0
  %v2389 = vadd.f32 %v2384, %v54
  %v2390 = vxor.u32 %v2389, 2147483648
  %v2391 = vmul.f32 %v2390, 1.442695
  %v2392 = vpow.pop %v2391
  %v2393 = vadd.f32 %v2392, 1.0
  %v2394 = vrcp.pop %v2393
  %v2395 = vmul.f32 1.0, %v2394
  %v2396 = vtanh.pop %v2389
  %v2397 = vmul.f32 %v2395, %v2136
  %2399 = vrot.lane.b32.xlu0 %v2396, 64
  %v2400 = vpop.permute.xlu0 %2399
  %v2402 = vmul.f32 %v2395, %v2400
  %2404 = vrot.lane.b32.xlu0 %v2402, 32
  %v2405 = vpop.permute.xlu0 %2404
  %v2407 = vadd.f32 %v2397, %v2405
  %v2408 = vtanh.pop %v2407
  %2410 = vrot.lane.b32.xlu0 %v2408, 64
  %v2411 = vpop.permute.xlu0 %2410
  %v2413 = vmul.f32 %v2395, %v2411
  %v2414 = vpack.c.bf16 %v2413, %v2413
  %2415 = vmatprep.subr.bf16.mxu0 0
  %2416 = vmatpush1.bf16.msra.mxu0 %v220
  %2417 = vmatprep.subr.bf16.mxu0 0
  %2418 = vmatpush1.bf16.msra.mxu0 %v221
  %2419 = vmatprep.subr.bf16.mxu0 0
  %2420 = vmatpush1.bf16.msra.mxu0 0
  %2421 = vmatprep.subr.bf16.mxu0 0
  %2422 = vmatpush1.bf16.msra.mxu0 0
  %2423 = vmatprep.subr.bf16.mxu0 0
  %2424 = vmatpush1.bf16.msra.mxu0 0
  %2425 = vmatprep.subr.bf16.mxu0 0
  %2426 = vmatpush1.bf16.msra.mxu0 0
  %2427 = vmatprep.subr.bf16.mxu0 0
  %2428 = vmatpush1.bf16.msra.mxu0 0
  %2429 = vmatprep.subr.bf16.mxu0 0
  %2430 = vmatpush1.bf16.msra.mxu0 0
  %2431 = vmatprep.subr.bf16.mxu0 0
  %2432 = vmatpush1.bf16.msra.mxu0 0
  %2433 = vmatprep.subr.bf16.mxu0 0
  %2434 = vmatpush1.bf16.msra.mxu0 0
  %2435 = vmatprep.subr.bf16.mxu0 0
  %2436 = vmatpush1.bf16.msra.mxu0 0
  %2437 = vmatprep.subr.bf16.mxu0 0
  %2438 = vmatpush1.bf16.msra.mxu0 0
  %2439 = vmatprep.subr.bf16.mxu0 0
  %2440 = vmatpush1.bf16.msra.mxu0 0
  %2441 = vmatprep.subr.bf16.mxu0 0
  %2442 = vmatpush1.bf16.msra.mxu0 0
  %2443 = vmatprep.subr.bf16.mxu0 0
  %2444 = vmatpush1.bf16.msra.mxu0 0
  %2445 = vmatprep.subr.bf16.mxu0 0
  %2446 = vmatpush1.bf16.msra.mxu0 0
  %2447 = vmatprep.mubr.bf16.mxu0 0
  %2448 = vmatmul.mubr.bf16.gmra.mrb[0].mxu0 %v2260
  %v2449 = vpop.f32.mrb[0].mxu0
  %v2450 = vadd.f32 0.0, %v2449
  %v2451 = vpop.f32.mrb[0].mxu0
  %v2452 = vpop.f32.mrb[0].mxu0
  %v2453 = vpop.f32.mrb[0].mxu0
  %2454 = vdwg.mxu0
  %2456 = vrot.lane.b32.xlu0 %v2414, 32
  %v2457 = vpop.permute.xlu0 %2456
  %v2459 = vsel %vm87, %v2457, 0
  %2461 = vmatprep.subr.bf16.mxu0 0
  %2462 = vmatpush1.bf16.msra.mxu0 %v275
  %2463 = vmatprep.subr.bf16.mxu0 0
  %2464 = vmatpush1.bf16.msra.mxu0 %v276
  %2465 = vmatprep.subr.bf16.mxu0 0
  %2466 = vmatpush1.bf16.msra.mxu0 0
  %2467 = vmatprep.subr.bf16.mxu0 0
  %2468 = vmatpush1.bf16.msra.mxu0 0
  %2469 = vmatprep.subr.bf16.mxu0 0
  %2470 = vmatpush1.bf16.msra.mxu0 0
  %2471 = vmatprep.subr.bf16.mxu0 0
  %2472 = vmatpush1.bf16.msra.mxu0 0
  %2473 = vmatprep.subr.bf16.mxu0 0
  %2474 = vmatpush1.bf16.msra.mxu0 0
  %2475 = vmatprep.subr.bf16.mxu0 0
  %2476 = vmatpush1.bf16.msra.mxu0 0
  %2477 = vmatprep.subr.bf16.mxu0 0
  %2478 = vmatpush1.bf16.msra.mxu0 0
  %2479 = vmatprep.subr.bf16.mxu0 0
  %2480 = vmatpush1.bf16.msra.mxu0 0
  %2481 = vmatprep.subr.bf16.mxu0 0
  %2482 = vmatpush1.bf16.msra.mxu0 0
  %2483 = vmatprep.subr.bf16.mxu0 0
  %2484 = vmatpush1.bf16.msra.mxu0 0
  %2485 = vmatprep.subr.bf16.mxu0 0
  %2486 = vmatpush1.bf16.msra.mxu0 0
  %2487 = vmatprep.subr.bf16.mxu0 0
  %2488 = vmatpush1.bf16.msra.mxu0 0
  %2489 = vmatprep.subr.bf16.mxu0 0
  %2490 = vmatpush1.bf16.msra.mxu0 0
  %2491 = vmatprep.subr.bf16.mxu0 0
  %2492 = vmatpush1.bf16.msra.mxu0 0
  %2493 = vmatprep.mubr.bf16.mxu0 0
  %2494 = vmatmul.mubr.bf16.gmra.mrb[0].mxu0 %v2459
  %v2495 = vpop.f32.mrb[0].mxu0
  %v2496 = vadd.f32 %v2450, %v2495
  %v2497 = vpop.f32.mrb[0].mxu0
  %v2498 = vpop.f32.mrb[0].mxu0
  %v2499 = vpop.f32.mrb[0].mxu0
  %2500 = vdwg.mxu0
  %v2501 = vadd.f32 %v2496, %v61
  %v2502 = vxor.u32 %v2501, 2147483648
  %v2503 = vmul.f32 %v2502, 1.442695
  %v2504 = vpow.pop %v2503
  %v2505 = vadd.f32 %v2504, 1.0
  %v2506 = vrcp.pop %v2505
  %v2507 = vmul.f32 1.0, %v2506
  %v2508 = vtanh.pop %v2501
  %v2509 = vmul.f32 %v2507, %v2248
  %2511 = vrot.lane.b32.xlu0 %v2508, 64
  %v2512 = vpop.permute.xlu0 %2511
  %v2514 = vmul.f32 %v2507, %v2512
  %2516 = vrot.lane.b32.xlu0 %v2514, 32
  %v2517 = vpop.permute.xlu0 %2516
  %v2519 = vadd.f32 %v2509, %v2517
  %v2520 = vtanh.pop %v2519
  %2522 = vrot.lane.b32.xlu0 %v2520, 64
  %v2523 = vpop.permute.xlu0 %2522
  %v2525 = vmul.f32 %v2507, %v2523
  %v2526 = vpack.c.bf16 %v2525, %v2525
  %2528 = vrot.lane.b32.xlu0 %v2526, 32
  %v2529 = vpop.permute.xlu0 %2528
  %v2531 = vsel %vm87, %v2529, 0
  %2533 = vmatprep.subr.bf16.mxu0 0
  %2534 = vmatpush1.bf16.msra.mxu0 %v359
  %2535 = vmatprep.subr.bf16.mxu0 0
  %2536 = vmatpush1.bf16.msra.mxu0 %v360
  %2537 = vmatprep.subr.bf16.mxu0 0
  %2538 = vmatpush1.bf16.msra.mxu0 0
  %2539 = vmatprep.subr.bf16.mxu0 0
  %2540 = vmatpush1.bf16.msra.mxu0 0
  %2541 = vmatprep.subr.bf16.mxu0 0
  %2542 = vmatpush1.bf16.msra.mxu0 0
  %2543 = vmatprep.subr.bf16.mxu0 0
  %2544 = vmatpush1.bf16.msra.mxu0 0
  %2545 = vmatprep.subr.bf16.mxu0 0
  %2546 = vmatpush1.bf16.msra.mxu0 0
  %2547 = vmatprep.subr.bf16.mxu0 0
  %2548 = vmatpush1.bf16.msra.mxu0 0
  %2549 = vmatprep.subr.bf16.mxu0 0
  %2550 = vmatpush1.bf16.msra.mxu0 0
  %2551 = vmatprep.subr.bf16.mxu0 0
  %2552 = vmatpush1.bf16.msra.mxu0 0
  %2553 = vmatprep.subr.bf16.mxu0 0
  %2554 = vmatpush1.bf16.msra.mxu0 0
  %2555 = vmatprep.subr.bf16.mxu0 0
  %2556 = vmatpush1.bf16.msra.mxu0 0
  %2557 = vmatprep.subr.bf16.mxu0 0
  %2558 = vmatpush1.bf16.msra.mxu0 0
  %2559 = vmatprep.subr.bf16.mxu0 0
  %2560 = vmatpush1.bf16.msra.mxu0 0
  %2561 = vmatprep.subr.bf16.mxu0 0
  %2562 = vmatpush1.bf16.msra.mxu0 0
  %2563 = vmatprep.subr.bf16.mxu0 0
  %2564 = vmatpush1.bf16.msra.mxu0 0
  %2565 = vmatprep.mubr.bf16.mxu0 0
  %2566 = vmatmul.mubr.bf16.gmra.mrb[0].mxu0 %v2531
  %v2567 = vpop.f32.mrb[0].mxu0
  %v2568 = vadd.f32 %v72, %v2567
  %v2569 = vpop.f32.mrb[0].mxu0
  %v2570 = vpop.f32.mrb[0].mxu0
  %v2571 = vpop.f32.mrb[0].mxu0
  %2572 = vdwg.mxu0
  %s2573 = scalar_lea.vmem %s9, 64
  %2574 = vst [vmem:[%s2573] sm:$0xff] %v2568
  // Predicated region
  $region38: #{our_decoder_forward.1} parent=0 // pred_check
    _
  $region39: #{our_decoder_forward.1} parent=0 // pred_check_branch
    %2576 = sbr.rel (0) target = $region41
  $region40: #{our_decoder_forward.1} parent=0 // pred_region
    _
  $region41: #{our_decoder_forward.1} parent=0 // pred_fallthru
    _
  // Predicated region
  $region42: #{our_decoder_forward.1} parent=0 // pred_check
    _
  $region43: #{our_decoder_forward.1} parent=0 // pred_check_branch
    %2578 = sbr.rel (0) target = $region45
  $region44: #{our_decoder_forward.1} parent=0 // pred_region
    _
  $region45: #{our_decoder_forward.1} parent=0 // pred_fallthru
    _

</llo_original>
